<compile_context>
chip_gen: v7x
topology: tpu7x:2x2x1
jax: 0.10.0
libtpu: 0.0.40
codegen_flags: <defaults>
</compile_context>

<pallas_src>
import functools

import jax
import jax.numpy as jnp
from jax.experimental import pallas as pl
from jax.experimental.pallas import tpu as pltpu

# ---------------- small config (stand-in for CLIP-ViT-L/14) ----------------
BATCH = 2
CHANNELS = 3
IMAGE = 16
PATCH = 4
GRID_HW = IMAGE // PATCH                 # 4
NUM_PATCHES = GRID_HW * GRID_HW          # 16
NUM_TOKENS = NUM_PATCHES + 1             # 17  (class token + patches)
T_PAD = 24                               # tokens padded to a multiple of 8 sublanes
HIDDEN = 64                              # vision hidden_size
NUM_HEADS = 4
HEAD_DIM = HIDDEN // NUM_HEADS           # 16
MLP = 128                                # intermediate_size
NUM_LAYERS = 2
OUTPUT_DIM = 32                          # proj output_dim
LN_EPS = 1e-5
SCALE = HEAD_DIM ** -0.5
CPP = CHANNELS * PATCH * PATCH           # 48 (flattened patch)
NEG_INF = -1e30


# ============================ fused encoder kernel ============================

def _layernorm_f32(x, g, b):
    # x: [M, D] f32, g/b: [1, D] f32
    mean = jnp.mean(x, axis=-1, keepdims=True)
    xc = x - mean
    var = jnp.mean(xc * xc, axis=-1, keepdims=True)
    return xc * jax.lax.rsqrt(var + LN_EPS) * g + b


def _encoder_kernel(
    patches_ref,          # [1, T_PAD, CPP]  f32   (per batch; cls/pad rows are zero)
    patch_w_ref,          # [CPP, D]         bf16
    emb_ref,              # [T_PAD, D]       f32   (class emb folded into pos emb; pad rows zero)
    pre_g_ref, pre_b_ref,  # [1, D]           f32
    ln1_g_ref, ln1_b_ref,  # [1, 1, D]        f32   (per layer)
    wqkv_ref, bqkv_ref,    # [1, D, 3D] bf16, [1, 1, 3D] f32
    wo_ref, bo_ref,        # [1, D, D]  bf16, [1, 1, D]  f32
    ln2_g_ref, ln2_b_ref,  # [1, 1, D]        f32
    w1_ref, b1_ref,        # [1, D, MLP] bf16, [1, 1, MLP] f32
    w2_ref, b2_ref,        # [1, MLP, D] bf16, [1, 1, D]  f32
    te_ref,                # [1, 1, D]        f32   (per batch, type embedding)
    proj_w_ref, proj_b_ref,  # [D, OUT] bf16, [1, OUT] f32
    out_ref,               # [1, T_PAD, OUT]  f32
    h_ref,                 # scratch VMEM [T_PAD, D] f32 -- residual stream
):
    layer = pl.program_id(1)

    # ---- embeddings + pre_layrnorm (first layer step only) ----
    @pl.when(layer == 0)
    def _embed():
        pe = jnp.dot(patches_ref[0].astype(jnp.bfloat16), patch_w_ref[...],
                     preferred_element_type=jnp.float32)              # [T_PAD, D]
        h_ref[...] = _layernorm_f32(pe + emb_ref[...], pre_g_ref[...], pre_b_ref[...])

    # ---- one CLIP encoder layer (pre-LN, quick_gelu MLP) ----
    x = h_ref[...]                                                    # [T_PAD, D] f32

    xn = _layernorm_f32(x, ln1_g_ref[0], ln1_b_ref[0])
    qkv = (jnp.dot(xn.astype(jnp.bfloat16), wqkv_ref[0],
                   preferred_element_type=jnp.float32) + bqkv_ref[0])  # [T_PAD, 3D]

    wo = wo_ref[0]                                                    # [D, D] bf16
    col = jax.lax.broadcasted_iota(jnp.int32, (T_PAD, T_PAD), 1)
    key_mask = col < NUM_TOKENS                                       # mask pad keys

    attn = jnp.zeros((T_PAD, HIDDEN), jnp.float32)
    for hh in range(NUM_HEADS):                                       # static unroll
        c0 = hh * HEAD_DIM
        qh = qkv[:, c0:c0 + HEAD_DIM] * SCALE                         # [T, Dh]
        kh = qkv[:, HIDDEN + c0:HIDDEN + c0 + HEAD_DIM]
        vh = qkv[:, 2 * HIDDEN + c0:2 * HIDDEN + c0 + HEAD_DIM]
        s = jax.lax.dot_general(qh, kh, (((1,), (1,)), ((), ())),
                                preferred_element_type=jnp.float32)   # [T, T]
        s = jnp.where(key_mask, s, NEG_INF)
        s = s - jnp.max(s, axis=-1, keepdims=True)
        p = jnp.exp(s)
        p = p * pl.reciprocal(jnp.sum(p, axis=-1, keepdims=True), approx=True)
        o = jnp.dot(p, vh, preferred_element_type=jnp.float32)        # [T, Dh]
        # fold the output projection per head: ctx @ Wo == sum_h ctx_h @ Wo[h-rows]
        attn = attn + jnp.dot(o.astype(jnp.bfloat16), wo[c0:c0 + HEAD_DIM, :],
                              preferred_element_type=jnp.float32)
    x = x + attn + bo_ref[0]                                          # residual 1

    xn = _layernorm_f32(x, ln2_g_ref[0], ln2_b_ref[0])
    hmid = (jnp.dot(xn.astype(jnp.bfloat16), w1_ref[0],
                    preferred_element_type=jnp.float32) + b1_ref[0])  # [T, MLP]
    hmid = hmid * jax.nn.sigmoid(1.702 * hmid)                        # quick_gelu (f32)
    x = x + (jnp.dot(hmid.astype(jnp.bfloat16), w2_ref[0],
                     preferred_element_type=jnp.float32) + b2_ref[0])  # residual 2
    h_ref[...] = x

    # ---- (last_hidden + type_embedding) @ Wproj + bproj (last layer step only) ----
    @pl.when(layer == pl.num_programs(1) - 1)
    def _project():
        xf = h_ref[...] + te_ref[0]                                   # [T_PAD, D]
        y = (jnp.dot(xf.astype(jnp.bfloat16), proj_w_ref[...],
                     preferred_element_type=jnp.float32) + proj_b_ref[...])
        out_ref[...] = y[None].astype(out_ref.dtype)


# ============================ parameters ============================

def init_params(key):
    D, L = HIDDEN, NUM_LAYERS
    ks = jax.random.split(key, 9)

    def w(k, shape):
        return jax.random.normal(k, shape, jnp.float32) * 0.02

    return dict(
        patch_w=w(ks[0], (CPP, D)).astype(jnp.bfloat16),        # Conv2d(C,D,P,P,bias=False) as matmul
        class_emb=w(ks[1], (D,)),
        pos_emb=w(ks[2], (NUM_TOKENS, D)),
        pre_ln_g=jnp.ones((1, D), jnp.float32),
        pre_ln_b=jnp.zeros((1, D), jnp.float32),
        ln1_g=jnp.ones((L, 1, D), jnp.float32),
        ln1_b=jnp.zeros((L, 1, D), jnp.float32),
        wqkv=w(ks[3], (L, D, 3 * D)).astype(jnp.bfloat16),      # fused Q/K/V projection
        bqkv=jnp.zeros((L, 1, 3 * D), jnp.float32),
        wo=w(ks[4], (L, D, D)).astype(jnp.bfloat16),
        bo=jnp.zeros((L, 1, D), jnp.float32),
        ln2_g=jnp.ones((L, 1, D), jnp.float32),
        ln2_b=jnp.zeros((L, 1, D), jnp.float32),
        w1=w(ks[5], (L, D, MLP)).astype(jnp.bfloat16),
        b1=jnp.zeros((L, 1, MLP), jnp.float32),
        w2=w(ks[6], (L, MLP, D)).astype(jnp.bfloat16),
        b2=jnp.zeros((L, 1, D), jnp.float32),
        type_emb=w(ks[7], (2, D)),                              # nn.Embedding(2, hidden)
        proj_w=w(ks[8], (D, OUTPUT_DIM)).astype(jnp.bfloat16),  # nn.Linear(hidden, output_dim)
        proj_b=jnp.zeros((1, OUTPUT_DIM), jnp.float32),
    )


# ============================ forward ============================

def encoder_vit_forward(params, images, type_ids):
    B, C, H, W = images.shape
    gh, gw = H // PATCH, W // PATCH

    # tiny XLA glue: patchify NCHW and place patches at padded token slots 1..16
    patches = images.reshape(B, C, gh, PATCH, gw, PATCH)
    patches = patches.transpose(0, 2, 4, 1, 3, 5).reshape(B, gh * gw, CPP)
    patches_pad = jnp.pad(patches, ((0, 0), (1, T_PAD - 1 - NUM_PATCHES), (0, 0)))

    # class embedding folded into position embedding row 0; pad rows zero
    pos_cls = params['pos_emb'].at[0, :].add(params['class_emb'])          # [T, D]
    emb = jnp.pad(pos_cls, ((0, T_PAD - NUM_TOKENS), (0, 0)))              # [T_PAD, D]

    te = jnp.take(params['type_emb'], type_ids, axis=0)[:, None, :]        # [B, 1, D]

    const2 = lambda shape: pl.BlockSpec(shape, lambda b, l: (0, 0))
    per_batch = lambda shape: pl.BlockSpec(shape, lambda b, l: (b, 0, 0))
    per_layer = lambda shape: pl.BlockSpec(shape, lambda b, l: (l, 0, 0))

    out = pl.pallas_call(
        _encoder_kernel,
        grid=(B, NUM_LAYERS),
        out_shape=jax.ShapeDtypeStruct((B, T_PAD, OUTPUT_DIM), jnp.float32),
        in_specs=[
            per_batch((1, T_PAD, CPP)),            # patches
            const2((CPP, HIDDEN)),                 # patch_w
            const2((T_PAD, HIDDEN)),               # cls+pos embedding
            const2((1, HIDDEN)),                   # pre_ln_g
            const2((1, HIDDEN)),                   # pre_ln_b
            per_layer((1, 1, HIDDEN)),             # ln1_g
            per_layer((1, 1, HIDDEN)),             # ln1_b
            per_layer((1, HIDDEN, 3 * HIDDEN)),    # wqkv
            per_layer((1, 1, 3 * HIDDEN)),         # bqkv
            per_layer((1, HIDDEN, HIDDEN)),        # wo
            per_layer((1, 1, HIDDEN)),             # bo
            per_layer((1, 1, HIDDEN)),             # ln2_g
            per_layer((1, 1, HIDDEN)),             # ln2_b
            per_layer((1, HIDDEN, MLP)),           # w1
            per_layer((1, 1, MLP)),                # b1
            per_layer((1, MLP, HIDDEN)),           # w2
            per_layer((1, 1, HIDDEN)),             # b2
            per_batch((1, 1, HIDDEN)),             # type embedding (gathered)
            const2((HIDDEN, OUTPUT_DIM)),          # proj_w
            const2((1, OUTPUT_DIM)),               # proj_b
        ],
        out_specs=pl.BlockSpec((1, T_PAD, OUTPUT_DIM), lambda b, l: (b, 0, 0)),
        scratch_shapes=[pltpu.VMEM((T_PAD, HIDDEN), jnp.float32)],
        compiler_params=pltpu.CompilerParams(
            dimension_semantics=("parallel", "arbitrary")),
    )(patches_pad, params['patch_w'], emb, params['pre_ln_g'], params['pre_ln_b'],
      params['ln1_g'], params['ln1_b'], params['wqkv'], params['bqkv'],
      params['wo'], params['bo'], params['ln2_g'], params['ln2_b'],
      params['w1'], params['b1'], params['w2'], params['b2'],
      te, params['proj_w'], params['proj_b'])

    return out[:, :NUM_TOKENS, :]                                          # drop pad tokens


# ============================ main ============================

if __name__ == "__main__":
    key = jax.random.PRNGKey(0)
    pkey, ikey = jax.random.split(key)
    params = init_params(pkey)
    images = jax.random.normal(ikey, (BATCH, CHANNELS, IMAGE, IMAGE), jnp.float32)
    type_ids = jnp.array([0, 1], dtype=jnp.int32)

    out = jax.jit(encoder_vit_forward)(params, images, type_ids)
    out = jax.block_until_ready(out)
    assert out.shape == (BATCH, NUM_TOKENS, OUTPUT_DIM), out.shape
    assert jnp.all(jnp.isfinite(out))
    print("KERNEL_OK")
</pallas_src>

<mosaic_0001>
module attributes {stable_mosaic.version = 11 : i64} {
  func.func @_encoder_kernel(%arg0: i32, %arg1: i32, %arg2: memref<1x24x48xf32, #tpu.memory_space<vmem>>, %arg3: memref<48x64xbf16, #tpu.memory_space<vmem>>, %arg4: memref<24x64xf32, #tpu.memory_space<vmem>>, %arg5: memref<1x64xf32, #tpu.memory_space<vmem>>, %arg6: memref<1x64xf32, #tpu.memory_space<vmem>>, %arg7: memref<1x1x64xf32, #tpu.memory_space<vmem>>, %arg8: memref<1x1x64xf32, #tpu.memory_space<vmem>>, %arg9: memref<1x64x192xbf16, #tpu.memory_space<vmem>>, %arg10: memref<1x1x192xf32, #tpu.memory_space<vmem>>, %arg11: memref<1x64x64xbf16, #tpu.memory_space<vmem>>, %arg12: memref<1x1x64xf32, #tpu.memory_space<vmem>>, %arg13: memref<1x1x64xf32, #tpu.memory_space<vmem>>, %arg14: memref<1x1x64xf32, #tpu.memory_space<vmem>>, %arg15: memref<1x64x128xbf16, #tpu.memory_space<vmem>>, %arg16: memref<1x1x128xf32, #tpu.memory_space<vmem>>, %arg17: memref<1x128x64xbf16, #tpu.memory_space<vmem>>, %arg18: memref<1x1x64xf32, #tpu.memory_space<vmem>>, %arg19: memref<1x1x64xf32, #tpu.memory_space<vmem>>, %arg20: memref<64x32xbf16, #tpu.memory_space<vmem>>, %arg21: memref<1x32xf32, #tpu.memory_space<vmem>>, %arg22: memref<1x24x32xf32, #tpu.memory_space<vmem>>, %arg23: memref<24x64xf32, #tpu.memory_space<vmem>>) attributes {dimension_semantics = [#tpu.dimension_semantics<parallel>, #tpu.dimension_semantics<arbitrary>], iteration_bounds = array<i64: 2, 2>, scalar_prefetch = 0 : i64, scratch_operands = 1 : i64, tpu.core_type = #tpu.core_type<tc>, window_params = [{transform_indices = @transform_0, window_bounds = array<i64: 1, 24, 48>}, {pipeline_mode = #tpu.pipeline_mode<synchronous>, transform_indices = @transform_1, window_bounds = array<i64: 48, 64>}, {pipeline_mode = #tpu.pipeline_mode<synchronous>, transform_indices = @transform_2, window_bounds = array<i64: 24, 64>}, {pipeline_mode = #tpu.pipeline_mode<synchronous>, transform_indices = @transform_3, window_bounds = array<i64: 1, 64>}, {pipeline_mode = #tpu.pipeline_mode<synchronous>, transform_indices = @transform_4, window_bounds = array<i64: 1, 64>}, {transform_indices = @transform_5, window_bounds = array<i64: 1, 1, 64>}, {transform_indices = @transform_6, window_bounds = array<i64: 1, 1, 64>}, {transform_indices = @transform_7, window_bounds = array<i64: 1, 64, 192>}, {transform_indices = @transform_8, window_bounds = array<i64: 1, 1, 192>}, {transform_indices = @transform_9, window_bounds = array<i64: 1, 64, 64>}, {transform_indices = @transform_10, window_bounds = array<i64: 1, 1, 64>}, {transform_indices = @transform_11, window_bounds = array<i64: 1, 1, 64>}, {transform_indices = @transform_12, window_bounds = array<i64: 1, 1, 64>}, {transform_indices = @transform_13, window_bounds = array<i64: 1, 64, 128>}, {transform_indices = @transform_14, window_bounds = array<i64: 1, 1, 128>}, {transform_indices = @transform_15, window_bounds = array<i64: 1, 128, 64>}, {transform_indices = @transform_16, window_bounds = array<i64: 1, 1, 64>}, {transform_indices = @transform_17, window_bounds = array<i64: 1, 1, 64>}, {pipeline_mode = #tpu.pipeline_mode<synchronous>, transform_indices = @transform_18, window_bounds = array<i64: 64, 32>}, {pipeline_mode = #tpu.pipeline_mode<synchronous>, transform_indices = @transform_19, window_bounds = array<i64: 1, 32>}, {transform_indices = @transform_20, window_bounds = array<i64: 1, 24, 32>}]} {
    %c0_i32 = arith.constant 0 : i32
    %0 = arith.cmpi eq, %arg1, %c0_i32 : i32
    %1 = arith.extui %0 : i1 to i32
    %c0_i32_0 = arith.constant 0 : i32
    %2 = arith.cmpi ne, %1, %c0_i32_0 : i32
    scf.if %2 {
      %c0_84 = arith.constant 0 : index
      %c0_85 = arith.constant 0 : index
      %c0_86 = arith.constant 0 : index
      %192 = vector.load %arg2[%c0_84, %c0_85, %c0_86] : memref<1x24x48xf32, #tpu.memory_space<vmem>>, vector<1x24x48xf32>
      %193 = vector.shape_cast %192 : vector<1x24x48xf32> to vector<24x48xf32>
      %194 = arith.truncf %193 : vector<24x48xf32> to vector<24x48xbf16>
      %c0_87 = arith.constant 0 : index
      %c0_88 = arith.constant 0 : index
      %195 = vector.load %arg3[%c0_87, %c0_88] : memref<48x64xbf16, #tpu.memory_space<vmem>>, vector<48x64xbf16>
      %cst_89 = arith.constant dense<0.000000e+00> : vector<24x64xf32>
      %196 = tpu.matmul %194, %195, %cst_89 {dimension_numbers = #tpu.dot_dimension_numbers<[1], [0], [0], [1], [0, 0, 1, 1], [], []>} : vector<24x48xbf16>, vector<48x64xbf16>, vector<24x64xf32> -> vector<24x64xf32>
      %c0_90 = arith.constant 0 : index
      %c0_91 = arith.constant 0 : index
      %197 = vector.load %arg4[%c0_90, %c0_91] : memref<24x64xf32, #tpu.memory_space<vmem>>, vector<24x64xf32>
      %198 = arith.addf %196, %197 : vector<24x64xf32>
      %c0_92 = arith.constant 0 : index
      %c0_93 = arith.constant 0 : index
      %199 = vector.load %arg5[%c0_92, %c0_93] : memref<1x64xf32, #tpu.memory_space<vmem>>, vector<1x64xf32>
      %c0_94 = arith.constant 0 : index
      %c0_95 = arith.constant 0 : index
      %200 = vector.load %arg6[%c0_94, %c0_95] : memref<1x64xf32, #tpu.memory_space<vmem>>, vector<1x64xf32>
      %cst_96 = arith.constant dense<0.000000e+00> : vector<24xf32>
      %201 = vector.multi_reduction <add>, %198, %cst_96 [1] : vector<24x64xf32> to vector<24xf32>
      %202 = vector.shape_cast %201 : vector<24xf32> to vector<24x1xf32>
      %cst_97 = arith.constant 6.400000e+01 : f32
      %203 = vector.broadcast %cst_97 : f32 to vector<24x1xf32>
      %204 = arith.divf %202, %203 : vector<24x1xf32>
      %205 = vector.broadcast %204 : vector<24x1xf32> to vector<24x64xf32>
      %206 = arith.subf %198, %205 : vector<24x64xf32>
      %207 = arith.mulf %206, %206 : vector<24x64xf32>
      %cst_98 = arith.constant dense<0.000000e+00> : vector<24xf32>
      %208 = vector.multi_reduction <add>, %207, %cst_98 [1] : vector<24x64xf32> to vector<24xf32>
      %209 = vector.shape_cast %208 : vector<24xf32> to vector<24x1xf32>
      %cst_99 = arith.constant 6.400000e+01 : f32
      %210 = vector.broadcast %cst_99 : f32 to vector<24x1xf32>
      %211 = arith.divf %209, %210 : vector<24x1xf32>
      %cst_100 = arith.constant 9.99999974E-6 : f32
      %212 = vector.broadcast %cst_100 : f32 to vector<24x1xf32>
      %213 = arith.addf %211, %212 : vector<24x1xf32>
      %214 = math.rsqrt %213 : vector<24x1xf32>
      %215 = vector.broadcast %214 : vector<24x1xf32> to vector<24x64xf32>
      %216 = arith.mulf %206, %215 : vector<24x64xf32>
      %217 = vector.broadcast %199 : vector<1x64xf32> to vector<24x64xf32>
      %218 = arith.mulf %216, %217 : vector<24x64xf32>
      %219 = vector.broadcast %200 : vector<1x64xf32> to vector<24x64xf32>
      %220 = arith.addf %218, %219 : vector<24x64xf32>
      %c0_101 = arith.constant 0 : index
      %c0_102 = arith.constant 0 : index
      %221 = vector.load %arg23[%c0_101, %c0_102] : memref<24x64xf32, #tpu.memory_space<vmem>>, vector<24x64xf32>
      tpu.vector_store %arg23[%c0_101, %c0_102], %220 {strides = array<i32>} : memref<24x64xf32, #tpu.memory_space<vmem>>, vector<24x64xf32>,
    } else {
    }
    %c0 = arith.constant 0 : index
    %c0_1 = arith.constant 0 : index
    %3 = vector.load %arg23[%c0, %c0_1] : memref<24x64xf32, #tpu.memory_space<vmem>>, vector<24x64xf32>
    %c0_2 = arith.constant 0 : index
    %c0_3 = arith.constant 0 : index
    %c0_4 = arith.constant 0 : index
    %4 = vector.load %arg7[%c0_2, %c0_3, %c0_4] : memref<1x1x64xf32, #tpu.memory_space<vmem>>, vector<1x1x64xf32>
    %5 = vector.shape_cast %4 : vector<1x1x64xf32> to vector<1x64xf32>
    %c0_5 = arith.constant 0 : index
    %c0_6 = arith.constant 0 : index
    %c0_7 = arith.constant 0 : index
    %6 = vector.load %arg8[%c0_5, %c0_6, %c0_7] : memref<1x1x64xf32, #tpu.memory_space<vmem>>, vector<1x1x64xf32>
    %7 = vector.shape_cast %6 : vector<1x1x64xf32> to vector<1x64xf32>
    %cst = arith.constant dense<0.000000e+00> : vector<24xf32>
    %8 = vector.multi_reduction <add>, %3, %cst [1] : vector<24x64xf32> to vector<24xf32>
    %9 = vector.shape_cast %8 : vector<24xf32> to vector<24x1xf32>
    %cst_8 = arith.constant 6.400000e+01 : f32
    %10 = vector.broadcast %cst_8 : f32 to vector<24x1xf32>
    %11 = arith.divf %9, %10 : vector<24x1xf32>
    %12 = vector.broadcast %11 : vector<24x1xf32> to vector<24x64xf32>
    %13 = arith.subf %3, %12 : vector<24x64xf32>
    %14 = arith.mulf %13, %13 : vector<24x64xf32>
    %cst_9 = arith.constant dense<0.000000e+00> : vector<24xf32>
    %15 = vector.multi_reduction <add>, %14, %cst_9 [1] : vector<24x64xf32> to vector<24xf32>
    %16 = vector.shape_cast %15 : vector<24xf32> to vector<24x1xf32>
    %cst_10 = arith.constant 6.400000e+01 : f32
    %17 = vector.broadcast %cst_10 : f32 to vector<24x1xf32>
    %18 = arith.divf %16, %17 : vector<24x1xf32>
    %cst_11 = arith.constant 9.99999974E-6 : f32
    %19 = vector.broadcast %cst_11 : f32 to vector<24x1xf32>
    %20 = arith.addf %18, %19 : vector<24x1xf32>
    %21 = math.rsqrt %20 : vector<24x1xf32>
    %22 = vector.broadcast %21 : vector<24x1xf32> to vector<24x64xf32>
    %23 = arith.mulf %13, %22 : vector<24x64xf32>
    %24 = vector.broadcast %5 : vector<1x64xf32> to vector<24x64xf32>
    %25 = arith.mulf %23, %24 : vector<24x64xf32>
    %26 = vector.broadcast %7 : vector<1x64xf32> to vector<24x64xf32>
    %27 = arith.addf %25, %26 : vector<24x64xf32>
    %28 = arith.truncf %27 : vector<24x64xf32> to vector<24x64xbf16>
    %c0_12 = arith.constant 0 : index
    %c0_13 = arith.constant 0 : index
    %c0_14 = arith.constant 0 : index
    %29 = vector.load %arg9[%c0_12, %c0_13, %c0_14] : memref<1x64x192xbf16, #tpu.memory_space<vmem>>, vector<1x64x192xbf16>
    %30 = vector.shape_cast %29 : vector<1x64x192xbf16> to vector<64x192xbf16>
    %cst_15 = arith.constant dense<0.000000e+00> : vector<24x192xf32>
    %31 = tpu.matmul %28, %30, %cst_15 {dimension_numbers = #tpu.dot_dimension_numbers<[1], [0], [0], [1], [0, 0, 1, 1], [], []>} : vector<24x64xbf16>, vector<64x192xbf16>, vector<24x192xf32> -> vector<24x192xf32>
    %c0_16 = arith.constant 0 : index
    %c0_17 = arith.constant 0 : index
    %c0_18 = arith.constant 0 : index
    %32 = vector.load %arg10[%c0_16, %c0_17, %c0_18] : memref<1x1x192xf32, #tpu.memory_space<vmem>>, vector<1x1x192xf32>
    %33 = vector.shape_cast %32 : vector<1x1x192xf32> to vector<1x192xf32>
    %34 = vector.broadcast %33 : vector<1x192xf32> to vector<24x192xf32>
    %35 = arith.addf %31, %34 : vector<24x192xf32>
    %c0_19 = arith.constant 0 : index
    %c0_20 = arith.constant 0 : index
    %c0_21 = arith.constant 0 : index
    %36 = vector.load %arg11[%c0_19, %c0_20, %c0_21] : memref<1x64x64xbf16, #tpu.memory_space<vmem>>, vector<1x64x64xbf16>
    %37 = vector.shape_cast %36 : vector<1x64x64xbf16> to vector<64x64xbf16>
    %38 = tpu.iota {dimensions = array<i32: 1>} : vector<24x24xi32>
    %c17_i32 = arith.constant 17 : i32
    %39 = vector.broadcast %c17_i32 : i32 to vector<24x24xi32>
    %40 = arith.cmpi slt, %38, %39 : vector<24x24xi32>
    %cst_22 = arith.constant 0.000000e+00 : f32
    %41 = vector.broadcast %cst_22 : f32 to vector<24x64xf32>
    %42 = vector.extract_strided_slice %35 {offsets = [0, 0], sizes = [24, 16], strides = [1, 1]} : vector<24x192xf32> to vector<24x16xf32>
    %cst_23 = arith.constant 2.500000e-01 : f32
    %43 = vector.broadcast %cst_23 : f32 to vector<24x16xf32>
    %44 = arith.mulf %42, %43 : vector<24x16xf32>
    %45 = vector.extract_strided_slice %35 {offsets = [0, 64], sizes = [24, 16], strides = [1, 1]} : vector<24x192xf32> to vector<24x16xf32>
    %46 = vector.extract_strided_slice %35 {offsets = [0, 128], sizes = [24, 16], strides = [1, 1]} : vector<24x192xf32> to vector<24x16xf32>
    %cst_24 = arith.constant dense<0.000000e+00> : vector<24x24xf32>
    %47 = tpu.matmul %44, %45, %cst_24 {dimension_numbers = #tpu.dot_dimension_numbers<[1], [1], [0], [0], [0, 0, 1, 0], [], []>} : vector<24x16xf32>, vector<24x16xf32>, vector<24x24xf32> -> vector<24x24xf32>
    %cst_25 = arith.constant -1.000000e+30 : f32
    %48 = vector.broadcast %cst_25 : f32 to vector<24x24xf32>
    %49 = arith.select %40, %47, %48 : vector<24x24xi1>, vector<24x24xf32>
    %cst_26 = arith.constant dense<0xFF800000> : vector<24xf32>
    %50 = vector.multi_reduction <maximumf>, %49, %cst_26 [1] : vector<24x24xf32> to vector<24xf32>
    %51 = vector.shape_cast %50 : vector<24xf32> to vector<24x1xf32>
    %52 = vector.broadcast %51 : vector<24x1xf32> to vector<24x24xf32>
    %53 = arith.subf %49, %52 : vector<24x24xf32>
    %54 = math.exp %53 : vector<24x24xf32>
    %cst_27 = arith.constant dense<0.000000e+00> : vector<24xf32>
    %55 = vector.multi_reduction <add>, %54, %cst_27 [1] : vector<24x24xf32> to vector<24xf32>
    %56 = vector.shape_cast %55 : vector<24xf32> to vector<24x1xf32>
    %57 = tpu.reciprocal %56 {approx = true} : vector<24x1xf32> -> vector<24x1xf32>
    %58 = vector.broadcast %57 : vector<24x1xf32> to vector<24x24xf32>
    %59 = arith.mulf %54, %58 : vector<24x24xf32>
    %cst_28 = arith.constant dense<0.000000e+00> : vector<24x16xf32>
    %60 = tpu.matmul %59, %46, %cst_28 {dimension_numbers = #tpu.dot_dimension_numbers<[1], [0], [0], [1], [0, 0, 1, 1], [], []>} : vector<24x24xf32>, vector<24x16xf32>, vector<24x16xf32> -> vector<24x16xf32>
    %61 = arith.truncf %60 : vector<24x16xf32> to vector<24x16xbf16>
    %62 = vector.extract_strided_slice %37 {offsets = [0, 0], sizes = [16, 64], strides = [1, 1]} : vector<64x64xbf16> to vector<16x64xbf16>
    %cst_29 = arith.constant dense<0.000000e+00> : vector<24x64xf32>
    %63 = tpu.matmul %61, %62, %cst_29 {dimension_numbers = #tpu.dot_dimension_numbers<[1], [0], [0], [1], [0, 0, 1, 1], [], []>} : vector<24x16xbf16>, vector<16x64xbf16>, vector<24x64xf32> -> vector<24x64xf32>
    %64 = arith.addf %41, %63 : vector<24x64xf32>
    %65 = vector.extract_strided_slice %35 {offsets = [0, 16], sizes = [24, 16], strides = [1, 1]} : vector<24x192xf32> to vector<24x16xf32>
    %cst_30 = arith.constant 2.500000e-01 : f32
    %66 = vector.broadcast %cst_30 : f32 to vector<24x16xf32>
    %67 = arith.mulf %65, %66 : vector<24x16xf32>
    %68 = vector.extract_strided_slice %35 {offsets = [0, 80], sizes = [24, 16], strides = [1, 1]} : vector<24x192xf32> to vector<24x16xf32>
    %69 = vector.extract_strided_slice %35 {offsets = [0, 144], sizes = [24, 16], strides = [1, 1]} : vector<24x192xf32> to vector<24x16xf32>
    %cst_31 = arith.constant dense<0.000000e+00> : vector<24x24xf32>
    %70 = tpu.matmul %67, %68, %cst_31 {dimension_numbers = #tpu.dot_dimension_numbers<[1], [1], [0], [0], [0, 0, 1, 0], [], []>} : vector<24x16xf32>, vector<24x16xf32>, vector<24x24xf32> -> vector<24x24xf32>
    %cst_32 = arith.constant -1.000000e+30 : f32
    %71 = vector.broadcast %cst_32 : f32 to vector<24x24xf32>
    %72 = arith.select %40, %70, %71 : vector<24x24xi1>, vector<24x24xf32>
    %cst_33 = arith.constant dense<0xFF800000> : vector<24xf32>
    %73 = vector.multi_reduction <maximumf>, %72, %cst_33 [1] : vector<24x24xf32> to vector<24xf32>
    %74 = vector.shape_cast %73 : vector<24xf32> to vector<24x1xf32>
    %75 = vector.broadcast %74 : vector<24x1xf32> to vector<24x24xf32>
    %76 = arith.subf %72, %75 : vector<24x24xf32>
    %77 = math.exp %76 : vector<24x24xf32>
    %cst_34 = arith.constant dense<0.000000e+00> : vector<24xf32>
    %78 = vector.multi_reduction <add>, %77, %cst_34 [1] : vector<24x24xf32> to vector<24xf32>
    %79 = vector.shape_cast %78 : vector<24xf32> to vector<24x1xf32>
    %80 = tpu.reciprocal %79 {approx = true} : vector<24x1xf32> -> vector<24x1xf32>
    %81 = vector.broadcast %80 : vector<24x1xf32> to vector<24x24xf32>
    %82 = arith.mulf %77, %81 : vector<24x24xf32>
    %cst_35 = arith.constant dense<0.000000e+00> : vector<24x16xf32>
    %83 = tpu.matmul %82, %69, %cst_35 {dimension_numbers = #tpu.dot_dimension_numbers<[1], [0], [0], [1], [0, 0, 1, 1], [], []>} : vector<24x24xf32>, vector<24x16xf32>, vector<24x16xf32> -> vector<24x16xf32>
    %84 = arith.truncf %83 : vector<24x16xf32> to vector<24x16xbf16>
    %85 = vector.extract_strided_slice %37 {offsets = [16, 0], sizes = [16, 64], strides = [1, 1]} : vector<64x64xbf16> to vector<16x64xbf16>
    %cst_36 = arith.constant dense<0.000000e+00> : vector<24x64xf32>
    %86 = tpu.matmul %84, %85, %cst_36 {dimension_numbers = #tpu.dot_dimension_numbers<[1], [0], [0], [1], [0, 0, 1, 1], [], []>} : vector<24x16xbf16>, vector<16x64xbf16>, vector<24x64xf32> -> vector<24x64xf32>
    %87 = arith.addf %64, %86 : vector<24x64xf32>
    %88 = vector.extract_strided_slice %35 {offsets = [0, 32], sizes = [24, 16], strides = [1, 1]} : vector<24x192xf32> to vector<24x16xf32>
    %cst_37 = arith.constant 2.500000e-01 : f32
    %89 = vector.broadcast %cst_37 : f32 to vector<24x16xf32>
    %90 = arith.mulf %88, %89 : vector<24x16xf32>
    %91 = vector.extract_strided_slice %35 {offsets = [0, 96], sizes = [24, 16], strides = [1, 1]} : vector<24x192xf32> to vector<24x16xf32>
    %92 = vector.extract_strided_slice %35 {offsets = [0, 160], sizes = [24, 16], strides = [1, 1]} : vector<24x192xf32> to vector<24x16xf32>
    %cst_38 = arith.constant dense<0.000000e+00> : vector<24x24xf32>
    %93 = tpu.matmul %90, %91, %cst_38 {dimension_numbers = #tpu.dot_dimension_numbers<[1], [1], [0], [0], [0, 0, 1, 0], [], []>} : vector<24x16xf32>, vector<24x16xf32>, vector<24x24xf32> -> vector<24x24xf32>
    %cst_39 = arith.constant -1.000000e+30 : f32
    %94 = vector.broadcast %cst_39 : f32 to vector<24x24xf32>
    %95 = arith.select %40, %93, %94 : vector<24x24xi1>, vector<24x24xf32>
    %cst_40 = arith.constant dense<0xFF800000> : vector<24xf32>
    %96 = vector.multi_reduction <maximumf>, %95, %cst_40 [1] : vector<24x24xf32> to vector<24xf32>
    %97 = vector.shape_cast %96 : vector<24xf32> to vector<24x1xf32>
    %98 = vector.broadcast %97 : vector<24x1xf32> to vector<24x24xf32>
    %99 = arith.subf %95, %98 : vector<24x24xf32>
    %100 = math.exp %99 : vector<24x24xf32>
    %cst_41 = arith.constant dense<0.000000e+00> : vector<24xf32>
    %101 = vector.multi_reduction <add>, %100, %cst_41 [1] : vector<24x24xf32> to vector<24xf32>
    %102 = vector.shape_cast %101 : vector<24xf32> to vector<24x1xf32>
    %103 = tpu.reciprocal %102 {approx = true} : vector<24x1xf32> -> vector<24x1xf32>
    %104 = vector.broadcast %103 : vector<24x1xf32> to vector<24x24xf32>
    %105 = arith.mulf %100, %104 : vector<24x24xf32>
    %cst_42 = arith.constant dense<0.000000e+00> : vector<24x16xf32>
    %106 = tpu.matmul %105, %92, %cst_42 {dimension_numbers = #tpu.dot_dimension_numbers<[1], [0], [0], [1], [0, 0, 1, 1], [], []>} : vector<24x24xf32>, vector<24x16xf32>, vector<24x16xf32> -> vector<24x16xf32>
    %107 = arith.truncf %106 : vector<24x16xf32> to vector<24x16xbf16>
    %108 = vector.extract_strided_slice %37 {offsets = [32, 0], sizes = [16, 64], strides = [1, 1]} : vector<64x64xbf16> to vector<16x64xbf16>
    %cst_43 = arith.constant dense<0.000000e+00> : vector<24x64xf32>
    %109 = tpu.matmul %107, %108, %cst_43 {dimension_numbers = #tpu.dot_dimension_numbers<[1], [0], [0], [1], [0, 0, 1, 1], [], []>} : vector<24x16xbf16>, vector<16x64xbf16>, vector<24x64xf32> -> vector<24x64xf32>
    %110 = arith.addf %87, %109 : vector<24x64xf32>
    %111 = vector.extract_strided_slice %35 {offsets = [0, 48], sizes = [24, 16], strides = [1, 1]} : vector<24x192xf32> to vector<24x16xf32>
    %cst_44 = arith.constant 2.500000e-01 : f32
    %112 = vector.broadcast %cst_44 : f32 to vector<24x16xf32>
    %113 = arith.mulf %111, %112 : vector<24x16xf32>
    %114 = vector.extract_strided_slice %35 {offsets = [0, 112], sizes = [24, 16], strides = [1, 1]} : vector<24x192xf32> to vector<24x16xf32>
    %115 = vector.extract_strided_slice %35 {offsets = [0, 176], sizes = [24, 16], strides = [1, 1]} : vector<24x192xf32> to vector<24x16xf32>
    %cst_45 = arith.constant dense<0.000000e+00> : vector<24x24xf32>
    %116 = tpu.matmul %113, %114, %cst_45 {dimension_numbers = #tpu.dot_dimension_numbers<[1], [1], [0], [0], [0, 0, 1, 0], [], []>} : vector<24x16xf32>, vector<24x16xf32>, vector<24x24xf32> -> vector<24x24xf32>
    %cst_46 = arith.constant -1.000000e+30 : f32
    %117 = vector.broadcast %cst_46 : f32 to vector<24x24xf32>
    %118 = arith.select %40, %116, %117 : vector<24x24xi1>, vector<24x24xf32>
    %cst_47 = arith.constant dense<0xFF800000> : vector<24xf32>
    %119 = vector.multi_reduction <maximumf>, %118, %cst_47 [1] : vector<24x24xf32> to vector<24xf32>
    %120 = vector.shape_cast %119 : vector<24xf32> to vector<24x1xf32>
    %121 = vector.broadcast %120 : vector<24x1xf32> to vector<24x24xf32>
    %122 = arith.subf %118, %121 : vector<24x24xf32>
    %123 = math.exp %122 : vector<24x24xf32>
    %cst_48 = arith.constant dense<0.000000e+00> : vector<24xf32>
    %124 = vector.multi_reduction <add>, %123, %cst_48 [1] : vector<24x24xf32> to vector<24xf32>
    %125 = vector.shape_cast %124 : vector<24xf32> to vector<24x1xf32>
    %126 = tpu.reciprocal %125 {approx = true} : vector<24x1xf32> -> vector<24x1xf32>
    %127 = vector.broadcast %126 : vector<24x1xf32> to vector<24x24xf32>
    %128 = arith.mulf %123, %127 : vector<24x24xf32>
    %cst_49 = arith.constant dense<0.000000e+00> : vector<24x16xf32>
    %129 = tpu.matmul %128, %115, %cst_49 {dimension_numbers = #tpu.dot_dimension_numbers<[1], [0], [0], [1], [0, 0, 1, 1], [], []>} : vector<24x24xf32>, vector<24x16xf32>, vector<24x16xf32> -> vector<24x16xf32>
    %130 = arith.truncf %129 : vector<24x16xf32> to vector<24x16xbf16>
    %131 = vector.extract_strided_slice %37 {offsets = [48, 0], sizes = [16, 64], strides = [1, 1]} : vector<64x64xbf16> to vector<16x64xbf16>
    %cst_50 = arith.constant dense<0.000000e+00> : vector<24x64xf32>
    %132 = tpu.matmul %130, %131, %cst_50 {dimension_numbers = #tpu.dot_dimension_numbers<[1], [0], [0], [1], [0, 0, 1, 1], [], []>} : vector<24x16xbf16>, vector<16x64xbf16>, vector<24x64xf32> -> vector<24x64xf32>
    %133 = arith.addf %110, %132 : vector<24x64xf32>
    %134 = arith.addf %3, %133 : vector<24x64xf32>
    %c0_51 = arith.constant 0 : index
    %c0_52 = arith.constant 0 : index
    %c0_53 = arith.constant 0 : index
    %135 = vector.load %arg12[%c0_51, %c0_52, %c0_53] : memref<1x1x64xf32, #tpu.memory_space<vmem>>, vector<1x1x64xf32>
    %136 = vector.shape_cast %135 : vector<1x1x64xf32> to vector<1x64xf32>
    %137 = vector.broadcast %136 : vector<1x64xf32> to vector<24x64xf32>
    %138 = arith.addf %134, %137 : vector<24x64xf32>
    %c0_54 = arith.constant 0 : index
    %c0_55 = arith.constant 0 : index
    %c0_56 = arith.constant 0 : index
    %139 = vector.load %arg13[%c0_54, %c0_55, %c0_56] : memref<1x1x64xf32, #tpu.memory_space<vmem>>, vector<1x1x64xf32>
    %140 = vector.shape_cast %139 : vector<1x1x64xf32> to vector<1x64xf32>
    %c0_57 = arith.constant 0 : index
    %c0_58 = arith.constant 0 : index
    %c0_59 = arith.constant 0 : index
    %141 = vector.load %arg14[%c0_57, %c0_58, %c0_59] : memref<1x1x64xf32, #tpu.memory_space<vmem>>, vector<1x1x64xf32>
    %142 = vector.shape_cast %141 : vector<1x1x64xf32> to vector<1x64xf32>
    %cst_60 = arith.constant dense<0.000000e+00> : vector<24xf32>
    %143 = vector.multi_reduction <add>, %138, %cst_60 [1] : vector<24x64xf32> to vector<24xf32>
    %144 = vector.shape_cast %143 : vector<24xf32> to vector<24x1xf32>
    %cst_61 = arith.constant 6.400000e+01 : f32
    %145 = vector.broadcast %cst_61 : f32 to vector<24x1xf32>
    %146 = arith.divf %144, %145 : vector<24x1xf32>
    %147 = vector.broadcast %146 : vector<24x1xf32> to vector<24x64xf32>
    %148 = arith.subf %138, %147 : vector<24x64xf32>
    %149 = arith.mulf %148, %148 : vector<24x64xf32>
    %cst_62 = arith.constant dense<0.000000e+00> : vector<24xf32>
    %150 = vector.multi_reduction <add>, %149, %cst_62 [1] : vector<24x64xf32> to vector<24xf32>
    %151 = vector.shape_cast %150 : vector<24xf32> to vector<24x1xf32>
    %cst_63 = arith.constant 6.400000e+01 : f32
    %152 = vector.broadcast %cst_63 : f32 to vector<24x1xf32>
    %153 = arith.divf %151, %152 : vector<24x1xf32>
    %cst_64 = arith.constant 9.99999974E-6 : f32
    %154 = vector.broadcast %cst_64 : f32 to vector<24x1xf32>
    %155 = arith.addf %153, %154 : vector<24x1xf32>
    %156 = math.rsqrt %155 : vector<24x1xf32>
    %157 = vector.broadcast %156 : vector<24x1xf32> to vector<24x64xf32>
    %158 = arith.mulf %148, %157 : vector<24x64xf32>
    %159 = vector.broadcast %140 : vector<1x64xf32> to vector<24x64xf32>
    %160 = arith.mulf %158, %159 : vector<24x64xf32>
    %161 = vector.broadcast %142 : vector<1x64xf32> to vector<24x64xf32>
    %162 = arith.addf %160, %161 : vector<24x64xf32>
    %163 = arith.truncf %162 : vector<24x64xf32> to vector<24x64xbf16>
    %c0_65 = arith.constant 0 : index
    %c0_66 = arith.constant 0 : index
    %c0_67 = arith.constant 0 : index
    %164 = vector.load %arg15[%c0_65, %c0_66, %c0_67] : memref<1x64x128xbf16, #tpu.memory_space<vmem>>, vector<1x64x128xbf16>
    %165 = vector.shape_cast %164 : vector<1x64x128xbf16> to vector<64x128xbf16>
    %cst_68 = arith.constant dense<0.000000e+00> : vector<24x128xf32>
    %166 = tpu.matmul %163, %165, %cst_68 {dimension_numbers = #tpu.dot_dimension_numbers<[1], [0], [0], [1], [0, 0, 1, 1], [], []>} : vector<24x64xbf16>, vector<64x128xbf16>, vector<24x128xf32> -> vector<24x128xf32>
    %c0_69 = arith.constant 0 : index
    %c0_70 = arith.constant 0 : index
    %c0_71 = arith.constant 0 : index
    %167 = vector.load %arg16[%c0_69, %c0_70, %c0_71] : memref<1x1x128xf32, #tpu.memory_space<vmem>>, vector<1x1x128xf32>
    %168 = vector.shape_cast %167 : vector<1x1x128xf32> to vector<1x128xf32>
    %169 = vector.broadcast %168 : vector<1x128xf32> to vector<24x128xf32>
    %170 = arith.addf %166, %169 : vector<24x128xf32>
    %cst_72 = arith.constant 1.702000e+00 : f32
    %171 = vector.broadcast %cst_72 : f32 to vector<24x128xf32>
    %172 = arith.mulf %171, %170 : vector<24x128xf32>
    %173 = arith.negf %172 : vector<24x128xf32>
    %174 = math.exp %173 : vector<24x128xf32>
    %cst_73 = arith.constant 1.000000e+00 : f32
    %175 = vector.broadcast %cst_73 : f32 to vector<24x128xf32>
    %176 = arith.addf %175, %174 : vector<24x128xf32>
    %177 = arith.divf %175, %176 : vector<24x128xf32>
    %178 = arith.mulf %170, %177 : vector<24x128xf32>
    %179 = arith.truncf %178 : vector<24x128xf32> to vector<24x128xbf16>
    %c0_74 = arith.constant 0 : index
    %c0_75 = arith.constant 0 : index
    %c0_76 = arith.constant 0 : index
    %180 = vector.load %arg17[%c0_74, %c0_75, %c0_76] : memref<1x128x64xbf16, #tpu.memory_space<vmem>>, vector<1x128x64xbf16>
    %181 = vector.shape_cast %180 : vector<1x128x64xbf16> to vector<128x64xbf16>
    %cst_77 = arith.constant dense<0.000000e+00> : vector<24x64xf32>
    %182 = tpu.matmul %179, %181, %cst_77 {dimension_numbers = #tpu.dot_dimension_numbers<[1], [0], [0], [1], [0, 0, 1, 1], [], []>} : vector<24x128xbf16>, vector<128x64xbf16>, vector<24x64xf32> -> vector<24x64xf32>
    %c0_78 = arith.constant 0 : index
    %c0_79 = arith.constant 0 : index
    %c0_80 = arith.constant 0 : index
    %183 = vector.load %arg18[%c0_78, %c0_79, %c0_80] : memref<1x1x64xf32, #tpu.memory_space<vmem>>, vector<1x1x64xf32>
    %184 = vector.shape_cast %183 : vector<1x1x64xf32> to vector<1x64xf32>
    %185 = vector.broadcast %184 : vector<1x64xf32> to vector<24x64xf32>
    %186 = arith.addf %182, %185 : vector<24x64xf32>
    %187 = arith.addf %138, %186 : vector<24x64xf32>
    %c0_81 = arith.constant 0 : index
    %c0_82 = arith.constant 0 : index
    %188 = vector.load %arg23[%c0_81, %c0_82] : memref<24x64xf32, #tpu.memory_space<vmem>>, vector<24x64xf32>
    tpu.vector_store %arg23[%c0_81, %c0_82], %187 {strides = array<i32>} : memref<24x64xf32, #tpu.memory_space<vmem>>, vector<24x64xf32>,
    %c1_i32 = arith.constant 1 : i32
    %189 = arith.cmpi eq, %arg1, %c1_i32 : i32
    %190 = arith.extui %189 : i1 to i32
    %c0_i32_83 = arith.constant 0 : i32
    %191 = arith.cmpi ne, %190, %c0_i32_83 : i32
    scf.if %191 {
      %c0_84 = arith.constant 0 : index
      %c0_85 = arith.constant 0 : index
      %192 = vector.load %arg23[%c0_84, %c0_85] : memref<24x64xf32, #tpu.memory_space<vmem>>, vector<24x64xf32>
      %c0_86 = arith.constant 0 : index
      %c0_87 = arith.constant 0 : index
      %c0_88 = arith.constant 0 : index
      %193 = vector.load %arg19[%c0_86, %c0_87, %c0_88] : memref<1x1x64xf32, #tpu.memory_space<vmem>>, vector<1x1x64xf32>
      %194 = vector.shape_cast %193 : vector<1x1x64xf32> to vector<1x64xf32>
      %195 = vector.broadcast %194 : vector<1x64xf32> to vector<24x64xf32>
      %196 = arith.addf %192, %195 : vector<24x64xf32>
      %197 = arith.truncf %196 : vector<24x64xf32> to vector<24x64xbf16>
      %c0_89 = arith.constant 0 : index
      %c0_90 = arith.constant 0 : index
      %198 = vector.load %arg20[%c0_89, %c0_90] : memref<64x32xbf16, #tpu.memory_space<vmem>>, vector<64x32xbf16>
      %cst_91 = arith.constant dense<0.000000e+00> : vector<24x32xf32>
      %199 = tpu.matmul %197, %198, %cst_91 {dimension_numbers = #tpu.dot_dimension_numbers<[1], [0], [0], [1], [0, 0, 1, 1], [], []>} : vector<24x64xbf16>, vector<64x32xbf16>, vector<24x32xf32> -> vector<24x32xf32>
      %c0_92 = arith.constant 0 : index
      %c0_93 = arith.constant 0 : index
      %200 = vector.load %arg21[%c0_92, %c0_93] : memref<1x32xf32, #tpu.memory_space<vmem>>, vector<1x32xf32>
      %201 = vector.broadcast %200 : vector<1x32xf32> to vector<24x32xf32>
      %202 = arith.addf %199, %201 : vector<24x32xf32>
      %203 = vector.shape_cast %202 : vector<24x32xf32> to vector<1x24x32xf32>
      %c0_94 = arith.constant 0 : index
      %c0_95 = arith.constant 0 : index
      %c0_96 = arith.constant 0 : index
      %204 = vector.load %arg22[%c0_94, %c0_95, %c0_96] : memref<1x24x32xf32, #tpu.memory_space<vmem>>, vector<1x24x32xf32>
      tpu.vector_store %arg22[%c0_94, %c0_95, %c0_96], %203 {strides = array<i32>} : memref<1x24x32xf32, #tpu.memory_space<vmem>>, vector<1x24x32xf32>,
    } else {
    }
    return
  }
  func.func @transform_0(%arg0: i32, %arg1: i32) -> (i32, i32, i32) {
    %c0_i32 = arith.constant 0 : i32
    %c0_i32_0 = arith.constant 0 : i32
    %c0_i32_1 = arith.constant 0 : i32
    return %arg0, %c0_i32, %c0_i32_0 : i32, i32, i32
  }
  func.func @transform_1(%arg0: i32, %arg1: i32) -> (i32, i32) {
    %c0_i32 = arith.constant 0 : i32
    %c0_i32_0 = arith.constant 0 : i32
    %c0_i32_1 = arith.constant 0 : i32
    return %c0_i32, %c0_i32_0 : i32, i32
  }
  func.func @transform_2(%arg0: i32, %arg1: i32) -> (i32, i32) {
    %c0_i32 = arith.constant 0 : i32
    %c0_i32_0 = arith.constant 0 : i32
    %c0_i32_1 = arith.constant 0 : i32
    return %c0_i32, %c0_i32_0 : i32, i32
  }
  func.func @transform_3(%arg0: i32, %arg1: i32) -> (i32, i32) {
    %c0_i32 = arith.constant 0 : i32
    %c0_i32_0 = arith.constant 0 : i32
    %c0_i32_1 = arith.constant 0 : i32
    return %c0_i32, %c0_i32_0 : i32, i32
  }
  func.func @transform_4(%arg0: i32, %arg1: i32) -> (i32, i32) {
    %c0_i32 = arith.constant 0 : i32
    %c0_i32_0 = arith.constant 0 : i32
    %c0_i32_1 = arith.constant 0 : i32
    return %c0_i32, %c0_i32_0 : i32, i32
  }
  func.func @transform_5(%arg0: i32, %arg1: i32) -> (i32, i32, i32) {
    %c0_i32 = arith.constant 0 : i32
    %c0_i32_0 = arith.constant 0 : i32
    %c0_i32_1 = arith.constant 0 : i32
    return %arg1, %c0_i32, %c0_i32_0 : i32, i32, i32
  }
  func.func @transform_6(%arg0: i32, %arg1: i32) -> (i32, i32, i32) {
    %c0_i32 = arith.constant 0 : i32
    %c0_i32_0 = arith.constant 0 : i32
    %c0_i32_1 = arith.constant 0 : i32
    return %arg1, %c0_i32, %c0_i32_0 : i32, i32, i32
  }
  func.func @transform_7(%arg0: i32, %arg1: i32) -> (i32, i32, i32) {
    %c0_i32 = arith.constant 0 : i32
    %c0_i32_0 = arith.constant 0 : i32
    %c0_i32_1 = arith.constant 0 : i32
    return %arg1, %c0_i32, %c0_i32_0 : i32, i32, i32
  }
  func.func @transform_8(%arg0: i32, %arg1: i32) -> (i32, i32, i32) {
    %c0_i32 = arith.constant 0 : i32
    %c0_i32_0 = arith.constant 0 : i32
    %c0_i32_1 = arith.constant 0 : i32
    return %arg1, %c0_i32, %c0_i32_0 : i32, i32, i32
  }
  func.func @transform_9(%arg0: i32, %arg1: i32) -> (i32, i32, i32) {
    %c0_i32 = arith.constant 0 : i32
    %c0_i32_0 = arith.constant 0 : i32
    %c0_i32_1 = arith.constant 0 : i32
    return %arg1, %c0_i32, %c0_i32_0 : i32, i32, i32
  }
  func.func @transform_10(%arg0: i32, %arg1: i32) -> (i32, i32, i32) {
    %c0_i32 = arith.constant 0 : i32
    %c0_i32_0 = arith.constant 0 : i32
    %c0_i32_1 = arith.constant 0 : i32
    return %arg1, %c0_i32, %c0_i32_0 : i32, i32, i32
  }
  func.func @transform_11(%arg0: i32, %arg1: i32) -> (i32, i32, i32) {
    %c0_i32 = arith.constant 0 : i32
    %c0_i32_0 = arith.constant 0 : i32
    %c0_i32_1 = arith.constant 0 : i32
    return %arg1, %c0_i32, %c0_i32_0 : i32, i32, i32
  }
  func.func @transform_12(%arg0: i32, %arg1: i32) -> (i32, i32, i32) {
    %c0_i32 = arith.constant 0 : i32
    %c0_i32_0 = arith.constant 0 : i32
    %c0_i32_1 = arith.constant 0 : i32
    return %arg1, %c0_i32, %c0_i32_0 : i32, i32, i32
  }
  func.func @transform_13(%arg0: i32, %arg1: i32) -> (i32, i32, i32) {
    %c0_i32 = arith.constant 0 : i32
    %c0_i32_0 = arith.constant 0 : i32
    %c0_i32_1 = arith.constant 0 : i32
    return %arg1, %c0_i32, %c0_i32_0 : i32, i32, i32
  }
  func.func @transform_14(%arg0: i32, %arg1: i32) -> (i32, i32, i32) {
    %c0_i32 = arith.constant 0 : i32
    %c0_i32_0 = arith.constant 0 : i32
    %c0_i32_1 = arith.constant 0 : i32
    return %arg1, %c0_i32, %c0_i32_0 : i32, i32, i32
  }
  func.func @transform_15(%arg0: i32, %arg1: i32) -> (i32, i32, i32) {
    %c0_i32 = arith.constant 0 : i32
    %c0_i32_0 = arith.constant 0 : i32
    %c0_i32_1 = arith.constant 0 : i32
    return %arg1, %c0_i32, %c0_i32_0 : i32, i32, i32
  }
  func.func @transform_16(%arg0: i32, %arg1: i32) -> (i32, i32, i32) {
    %c0_i32 = arith.constant 0 : i32
    %c0_i32_0 = arith.constant 0 : i32
    %c0_i32_1 = arith.constant 0 : i32
    return %arg1, %c0_i32, %c0_i32_0 : i32, i32, i32
  }
  func.func @transform_17(%arg0: i32, %arg1: i32) -> (i32, i32, i32) {
    %c0_i32 = arith.constant 0 : i32
    %c0_i32_0 = arith.constant 0 : i32
    %c0_i32_1 = arith.constant 0 : i32
    return %arg0, %c0_i32, %c0_i32_0 : i32, i32, i32
  }
  func.func @transform_18(%arg0: i32, %arg1: i32) -> (i32, i32) {
    %c0_i32 = arith.constant 0 : i32
    %c0_i32_0 = arith.constant 0 : i32
    %c0_i32_1 = arith.constant 0 : i32
    return %c0_i32, %c0_i32_0 : i32, i32
  }
  func.func @transform_19(%arg0: i32, %arg1: i32) -> (i32, i32) {
    %c0_i32 = arith.constant 0 : i32
    %c0_i32_0 = arith.constant 0 : i32
    %c0_i32_1 = arith.constant 0 : i32
    return %c0_i32, %c0_i32_0 : i32, i32
  }
  func.func @transform_20(%arg0: i32, %arg1: i32) -> (i32, i32, i32) {
    %c0_i32 = arith.constant 0 : i32
    %c0_i32_0 = arith.constant 0 : i32
    %c0_i32_1 = arith.constant 0 : i32
    return %arg0, %c0_i32, %c0_i32_0 : i32, i32, i32
  }
}

</mosaic_0001>

<llo_original>
// kernel: encoder_vit_forward.1
$region0: #{encoder_vit_forward.1}
  #allocation0 [shape = 'u32[]', space=smem, size = 0x4, offset = 0x4, fixed_abs, tag = 'smem constant byte address 0x4 - core index']
  #allocation1 [shape = 'u32[144,128]{1,0:T(1,128)}', space=vmem, size = 0x12000, scoped, tag = 'internal scratch']
  #allocation2 [shape = 'f32[24,64]{1,0:T(8,128)}', space=vmem, size = 0x3000, scoped, tag = 'scratch operand']
  %s0 = inlined_call_operand.vmem [shape: f32[2,24,48], index: 0, kind: input, shape index: {}]
  %s1 = inlined_call_operand.vmem [shape: bf16[48,64], index: 1, kind: input, shape index: {}]
  %s2 = inlined_call_operand.vmem [shape: f32[24,64], index: 2, kind: input, shape index: {}]
  %s3 = inlined_call_operand.vmem [shape: f32[1,64], index: 3, kind: input, shape index: {}]
  %s4 = inlined_call_operand.vmem [shape: f32[1,64], index: 4, kind: input, shape index: {}]
  %s5 = inlined_call_operand.vmem [shape: f32[2,1,64], index: 5, kind: input, shape index: {}]
  %s6 = inlined_call_operand.vmem [shape: f32[2,1,64], index: 6, kind: input, shape index: {}]
  %s7 = inlined_call_operand.vmem [shape: bf16[2,64,192], index: 7, kind: input, shape index: {}]
  %s8 = inlined_call_operand.vmem [shape: f32[2,1,192], index: 8, kind: input, shape index: {}]
  %s9 = inlined_call_operand.vmem [shape: bf16[2,64,64], index: 9, kind: input, shape index: {}]
  %s10 = inlined_call_operand.vmem [shape: f32[2,1,64], index: 10, kind: input, shape index: {}]
  %s11 = inlined_call_operand.vmem [shape: f32[2,1,64], index: 11, kind: input, shape index: {}]
  %s12 = inlined_call_operand.vmem [shape: f32[2,1,64], index: 12, kind: input, shape index: {}]
  %s13 = inlined_call_operand.vmem [shape: bf16[2,64,128], index: 13, kind: input, shape index: {}]
  %s14 = inlined_call_operand.vmem [shape: f32[2,1,128], index: 14, kind: input, shape index: {}]
  %s15 = inlined_call_operand.vmem [shape: bf16[2,128,64], index: 15, kind: input, shape index: {}]
  %s16 = inlined_call_operand.vmem [shape: f32[2,1,64], index: 16, kind: input, shape index: {}]
  %s17 = inlined_call_operand.vmem [shape: f32[2,1,64], index: 17, kind: input, shape index: {}]
  %s18 = inlined_call_operand.vmem [shape: bf16[64,32], index: 18, kind: input, shape index: {}]
  %s19 = inlined_call_operand.vmem [shape: f32[1,32], index: 19, kind: input, shape index: {}]
  %s20 = inlined_call_operand.vmem [shape: f32[2,24,32], index: 20, kind: output, shape index: {}]
  %s21 = sld [smem:[#allocation0]]
  $region121: #{encoder_vit_forward.1} parent=0
    _
  %s23 = ssub.s32 1, %s21
  %s24 = scalar_select 0, %s23, %s21
  loop: start=0, step=1, limit=6
  $region2: #{encoder_vit_forward.1} parent=0 // loop_pre_header
    _
  $region3: #{encoder_vit_forward.1} parent=0 // loop_header
    %s26 = sphi 0, %s30
    %p27 = scmp.ge.s32.totalorder %s26, 6
    %s33 = sphi 0, %s45
    %s34 = sphi 0, %s41
    %s35 = sphi 0, %s33
    %s36 = sphi 0, %s34
    %s37 = sphi 0, %s35
    %s38 = sphi 0, %s36
    %s48 = sphi 0, %s50
    %s51 = sphi 0, %s48
    %s52 = sphi 0, %s51
    %s68 = sphi 0, %s52
    %s72 = sphi 0, %s72
    %s74 = sphi 0, %s72
    %s75 = sphi 0, %s74
    %s89 = sphi 0, %s75
    %s93 = sphi 0, %s93
    %s95 = sphi 0, %s93
    %s96 = sphi 0, %s95
    %s110 = sphi 0, %s96
    %s114 = sphi 0, %s114
    %s116 = sphi 0, %s114
    %s117 = sphi 0, %s116
    %s131 = sphi 0, %s117
    %s135 = sphi 0, %s135
    %s137 = sphi 0, %s135
    %s138 = sphi 0, %s137
    %s152 = sphi 0, %s138
    %s158 = sphi 0, %s160
    %s161 = sphi 0, %s158
    %s162 = sphi 0, %s161
    %s178 = sphi 0, %s162
    %s184 = sphi 0, %s186
    %s187 = sphi 0, %s184
    %s188 = sphi 0, %s187
    %s204 = sphi 0, %s188
    %s210 = sphi 0, %s212
    %s213 = sphi 0, %s210
    %s214 = sphi 0, %s213
    %s230 = sphi 0, %s214
    %s236 = sphi 0, %s238
    %s239 = sphi 0, %s236
    %s240 = sphi 0, %s239
    %s256 = sphi 0, %s240
    %s262 = sphi 0, %s264
    %s265 = sphi 0, %s262
    %s266 = sphi 0, %s265
    %s282 = sphi 0, %s266
    %s288 = sphi 0, %s290
    %s291 = sphi 0, %s288
    %s292 = sphi 0, %s291
    %s308 = sphi 0, %s292
    %s314 = sphi 0, %s316
    %s317 = sphi 0, %s314
    %s318 = sphi 0, %s317
    %s334 = sphi 0, %s318
    %s340 = sphi 0, %s342
    %s343 = sphi 0, %s340
    %s344 = sphi 0, %s343
    %s360 = sphi 0, %s344
    %s366 = sphi 0, %s368
    %s369 = sphi 0, %s366
    %s370 = sphi 0, %s369
    %s386 = sphi 0, %s370
    %s392 = sphi 0, %s394
    %s395 = sphi 0, %s392
    %s396 = sphi 0, %s395
    %s412 = sphi 0, %s396
    %s418 = sphi 0, %s420
    %s421 = sphi 0, %s418
    %s422 = sphi 0, %s421
    %s438 = sphi 0, %s422
    %s444 = sphi 0, %s446
    %s447 = sphi 0, %s444
    %s448 = sphi 0, %s447
    %s464 = sphi 0, %s448
    %s470 = sphi 0, %s472
    %s473 = sphi 0, %s470
    %s474 = sphi 0, %s473
    %s490 = sphi 0, %s474
    %s494 = sphi 0, %s494
    %s496 = sphi 0, %s494
    %s497 = sphi 0, %s496
    %s511 = sphi 0, %s497
    %s515 = sphi 0, %s515
    %s517 = sphi 0, %s515
    %s518 = sphi 0, %s517
    %s532 = sphi 0, %s518
    %s538 = sphi 0, %s540
    %s541 = sphi 0, %s538
    %s542 = sphi 0, %s541
    %s558 = sphi 0, %s542
  $region4: #{encoder_vit_forward.1} parent=0 // loop_header_branch
    %29 = sbr.rel (%p27) target = $region8
  $region5: #{encoder_vit_forward.1} parent=0 // loop_body
    %s31 = ssub.s32 %s26, 1
    %s32 = ssub.s32 %s26, 2
    %s39 = sadd.s32 1, %s34
    %p40 = scmp.ge.s32.totalorder %s39, 2
    %s41 = scalar_select %p40, 0, %s39
    %s42 = sadd.s32 1, %s33
    %s43 = scalar_select %p40, %s42, %s33
    %p44 = scmp.ge.s32.totalorder %s43, 2
    %s45 = scalar_select %p44, 0, %s43
    %s46 = ssub.s32 %s33, %s45
    %p47 = scmp.eq.s32.totalorder %s46, 0
    %s49 = sadd.s32 %s48, 1
    %s50 = scalar_select %p47, %s48, %s49
    %p53 = pneg %p47
    %p54 = scmp.eq.s32.totalorder %s26, 3
    %p55 = por %p53, %p54
    %p56 = scmp.ne.s32.totalorder %s48, %s51
    %p57 = scmp.eq.s32.totalorder %s26, 0
    %p58 = por %p56, %p57
    %p59 = scmp.ne.s32.totalorder %s48, %s51
    %p60 = scmp.eq.s32.totalorder %s31, 3
    %p61 = por %p59, %p60
    %p62 = scmp.ne.s32.totalorder %s51, %s52
    %p63 = scmp.eq.s32.totalorder %s31, 0
    %p64 = por %p62, %p63
    %p65 = scmp.ne.s32.totalorder %s51, %s52
    %p66 = scmp.eq.s32.totalorder %s32, 3
    %p67 = por %p65, %p66
    %p69 = scmp.ne.s32.totalorder %s52, %s68
    %p70 = scmp.eq.s32.totalorder %s32, 0
    %p71 = por %p69, %p70
    %s73 = sadd.s32 %s72, 1
    %p76 = scmp.eq.s32.totalorder %s26, 3
    %p77 = scmp.ne.s32.totalorder %s72, %s74
    %p78 = scmp.eq.s32.totalorder %s26, 0
    %p79 = por %p77, %p78
    %p80 = scmp.ne.s32.totalorder %s72, %s74
    %p81 = scmp.eq.s32.totalorder %s31, 3
    %p82 = por %p80, %p81
    %p83 = scmp.ne.s32.totalorder %s74, %s75
    %p84 = scmp.eq.s32.totalorder %s31, 0
    %p85 = por %p83, %p84
    %p86 = scmp.ne.s32.totalorder %s74, %s75
    %p87 = scmp.eq.s32.totalorder %s32, 3
    %p88 = por %p86, %p87
    %p90 = scmp.ne.s32.totalorder %s75, %s89
    %p91 = scmp.eq.s32.totalorder %s32, 0
    %p92 = por %p90, %p91
    %s94 = sadd.s32 %s93, 1
    %p97 = scmp.eq.s32.totalorder %s26, 3
    %p98 = scmp.ne.s32.totalorder %s93, %s95
    %p99 = scmp.eq.s32.totalorder %s26, 0
    %p100 = por %p98, %p99
    %p101 = scmp.ne.s32.totalorder %s93, %s95
    %p102 = scmp.eq.s32.totalorder %s31, 3
    %p103 = por %p101, %p102
    %p104 = scmp.ne.s32.totalorder %s95, %s96
    %p105 = scmp.eq.s32.totalorder %s31, 0
    %p106 = por %p104, %p105
    %p107 = scmp.ne.s32.totalorder %s95, %s96
    %p108 = scmp.eq.s32.totalorder %s32, 3
    %p109 = por %p107, %p108
    %p111 = scmp.ne.s32.totalorder %s96, %s110
    %p112 = scmp.eq.s32.totalorder %s32, 0
    %p113 = por %p111, %p112
    %s115 = sadd.s32 %s114, 1
    %p118 = scmp.eq.s32.totalorder %s26, 3
    %p119 = scmp.ne.s32.totalorder %s114, %s116
    %p120 = scmp.eq.s32.totalorder %s26, 0
    %p121 = por %p119, %p120
    %p122 = scmp.ne.s32.totalorder %s114, %s116
    %p123 = scmp.eq.s32.totalorder %s31, 3
    %p124 = por %p122, %p123
    %p125 = scmp.ne.s32.totalorder %s116, %s117
    %p126 = scmp.eq.s32.totalorder %s31, 0
    %p127 = por %p125, %p126
    %p128 = scmp.ne.s32.totalorder %s116, %s117
    %p129 = scmp.eq.s32.totalorder %s32, 3
    %p130 = por %p128, %p129
    %p132 = scmp.ne.s32.totalorder %s117, %s131
    %p133 = scmp.eq.s32.totalorder %s32, 0
    %p134 = por %p132, %p133
    %s136 = sadd.s32 %s135, 1
    %p139 = scmp.eq.s32.totalorder %s26, 3
    %p140 = scmp.ne.s32.totalorder %s135, %s137
    %p141 = scmp.eq.s32.totalorder %s26, 0
    %p142 = por %p140, %p141
    %p143 = scmp.ne.s32.totalorder %s135, %s137
    %p144 = scmp.eq.s32.totalorder %s31, 3
    %p145 = por %p143, %p144
    %p146 = scmp.ne.s32.totalorder %s137, %s138
    %p147 = scmp.eq.s32.totalorder %s31, 0
    %p148 = por %p146, %p147
    %p149 = scmp.ne.s32.totalorder %s137, %s138
    %p150 = scmp.eq.s32.totalorder %s32, 3
    %p151 = por %p149, %p150
    %p153 = scmp.ne.s32.totalorder %s138, %s152
    %p154 = scmp.eq.s32.totalorder %s32, 0
    %p155 = por %p153, %p154
    %s156 = ssub.s32 %s34, %s41
    %p157 = scmp.eq.s32.totalorder %s156, 0
    %s159 = sadd.s32 %s158, 1
    %s160 = scalar_select %p157, %s158, %s159
    %p163 = pneg %p157
    %p164 = scmp.eq.s32.totalorder %s26, 3
    %p165 = por %p163, %p164
    %p166 = scmp.ne.s32.totalorder %s158, %s161
    %p167 = scmp.eq.s32.totalorder %s26, 0
    %p168 = por %p166, %p167
    %p169 = scmp.ne.s32.totalorder %s158, %s161
    %p170 = scmp.eq.s32.totalorder %s31, 3
    %p171 = por %p169, %p170
    %p172 = scmp.ne.s32.totalorder %s161, %s162
    %p173 = scmp.eq.s32.totalorder %s31, 0
    %p174 = por %p172, %p173
    %p175 = scmp.ne.s32.totalorder %s161, %s162
    %p176 = scmp.eq.s32.totalorder %s32, 3
    %p177 = por %p175, %p176
    %p179 = scmp.ne.s32.totalorder %s162, %s178
    %p180 = scmp.eq.s32.totalorder %s32, 0
    %p181 = por %p179, %p180
    %s182 = ssub.s32 %s34, %s41
    %p183 = scmp.eq.s32.totalorder %s182, 0
    %s185 = sadd.s32 %s184, 1
    %s186 = scalar_select %p183, %s184, %s185
    %p189 = pneg %p183
    %p190 = scmp.eq.s32.totalorder %s26, 3
    %p191 = por %p189, %p190
    %p192 = scmp.ne.s32.totalorder %s184, %s187
    %p193 = scmp.eq.s32.totalorder %s26, 0
    %p194 = por %p192, %p193
    %p195 = scmp.ne.s32.totalorder %s184, %s187
    %p196 = scmp.eq.s32.totalorder %s31, 3
    %p197 = por %p195, %p196
    %p198 = scmp.ne.s32.totalorder %s187, %s188
    %p199 = scmp.eq.s32.totalorder %s31, 0
    %p200 = por %p198, %p199
    %p201 = scmp.ne.s32.totalorder %s187, %s188
    %p202 = scmp.eq.s32.totalorder %s32, 3
    %p203 = por %p201, %p202
    %p205 = scmp.ne.s32.totalorder %s188, %s204
    %p206 = scmp.eq.s32.totalorder %s32, 0
    %p207 = por %p205, %p206
    %s208 = ssub.s32 %s34, %s41
    %p209 = scmp.eq.s32.totalorder %s208, 0
    %s211 = sadd.s32 %s210, 1
    %s212 = scalar_select %p209, %s210, %s211
    %p215 = pneg %p209
    %p216 = scmp.eq.s32.totalorder %s26, 3
    %p217 = por %p215, %p216
    %p218 = scmp.ne.s32.totalorder %s210, %s213
    %p219 = scmp.eq.s32.totalorder %s26, 0
    %p220 = por %p218, %p219
    %p221 = scmp.ne.s32.totalorder %s210, %s213
    %p222 = scmp.eq.s32.totalorder %s31, 3
    %p223 = por %p221, %p222
    %p224 = scmp.ne.s32.totalorder %s213, %s214
    %p225 = scmp.eq.s32.totalorder %s31, 0
    %p226 = por %p224, %p225
    %p227 = scmp.ne.s32.totalorder %s213, %s214
    %p228 = scmp.eq.s32.totalorder %s32, 3
    %p229 = por %p227, %p228
    %p231 = scmp.ne.s32.totalorder %s214, %s230
    %p232 = scmp.eq.s32.totalorder %s32, 0
    %p233 = por %p231, %p232
    %s234 = ssub.s32 %s34, %s41
    %p235 = scmp.eq.s32.totalorder %s234, 0
    %s237 = sadd.s32 %s236, 1
    %s238 = scalar_select %p235, %s236, %s237
    %p241 = pneg %p235
    %p242 = scmp.eq.s32.totalorder %s26, 3
    %p243 = por %p241, %p242
    %p244 = scmp.ne.s32.totalorder %s236, %s239
    %p245 = scmp.eq.s32.totalorder %s26, 0
    %p246 = por %p244, %p245
    %p247 = scmp.ne.s32.totalorder %s236, %s239
    %p248 = scmp.eq.s32.totalorder %s31, 3
    %p249 = por %p247, %p248
    %p250 = scmp.ne.s32.totalorder %s239, %s240
    %p251 = scmp.eq.s32.totalorder %s31, 0
    %p252 = por %p250, %p251
    %p253 = scmp.ne.s32.totalorder %s239, %s240
    %p254 = scmp.eq.s32.totalorder %s32, 3
    %p255 = por %p253, %p254
    %p257 = scmp.ne.s32.totalorder %s240, %s256
    %p258 = scmp.eq.s32.totalorder %s32, 0
    %p259 = por %p257, %p258
    %s260 = ssub.s32 %s34, %s41
    %p261 = scmp.eq.s32.totalorder %s260, 0
    %s263 = sadd.s32 %s262, 1
    %s264 = scalar_select %p261, %s262, %s263
    %p267 = pneg %p261
    %p268 = scmp.eq.s32.totalorder %s26, 3
    %p269 = por %p267, %p268
    %p270 = scmp.ne.s32.totalorder %s262, %s265
    %p271 = scmp.eq.s32.totalorder %s26, 0
    %p272 = por %p270, %p271
    %p273 = scmp.ne.s32.totalorder %s262, %s265
    %p274 = scmp.eq.s32.totalorder %s31, 3
    %p275 = por %p273, %p274
    %p276 = scmp.ne.s32.totalorder %s265, %s266
    %p277 = scmp.eq.s32.totalorder %s31, 0
    %p278 = por %p276, %p277
    %p279 = scmp.ne.s32.totalorder %s265, %s266
    %p280 = scmp.eq.s32.totalorder %s32, 3
    %p281 = por %p279, %p280
    %p283 = scmp.ne.s32.totalorder %s266, %s282
    %p284 = scmp.eq.s32.totalorder %s32, 0
    %p285 = por %p283, %p284
    %s286 = ssub.s32 %s34, %s41
    %p287 = scmp.eq.s32.totalorder %s286, 0
    %s289 = sadd.s32 %s288, 1
    %s290 = scalar_select %p287, %s288, %s289
    %p293 = pneg %p287
    %p294 = scmp.eq.s32.totalorder %s26, 3
    %p295 = por %p293, %p294
    %p296 = scmp.ne.s32.totalorder %s288, %s291
    %p297 = scmp.eq.s32.totalorder %s26, 0
    %p298 = por %p296, %p297
    %p299 = scmp.ne.s32.totalorder %s288, %s291
    %p300 = scmp.eq.s32.totalorder %s31, 3
    %p301 = por %p299, %p300
    %p302 = scmp.ne.s32.totalorder %s291, %s292
    %p303 = scmp.eq.s32.totalorder %s31, 0
    %p304 = por %p302, %p303
    %p305 = scmp.ne.s32.totalorder %s291, %s292
    %p306 = scmp.eq.s32.totalorder %s32, 3
    %p307 = por %p305, %p306
    %p309 = scmp.ne.s32.totalorder %s292, %s308
    %p310 = scmp.eq.s32.totalorder %s32, 0
    %p311 = por %p309, %p310
    %s312 = ssub.s32 %s34, %s41
    %p313 = scmp.eq.s32.totalorder %s312, 0
    %s315 = sadd.s32 %s314, 1
    %s316 = scalar_select %p313, %s314, %s315
    %p319 = pneg %p313
    %p320 = scmp.eq.s32.totalorder %s26, 3
    %p321 = por %p319, %p320
    %p322 = scmp.ne.s32.totalorder %s314, %s317
    %p323 = scmp.eq.s32.totalorder %s26, 0
    %p324 = por %p322, %p323
    %p325 = scmp.ne.s32.totalorder %s314, %s317
    %p326 = scmp.eq.s32.totalorder %s31, 3
    %p327 = por %p325, %p326
    %p328 = scmp.ne.s32.totalorder %s317, %s318
    %p329 = scmp.eq.s32.totalorder %s31, 0
    %p330 = por %p328, %p329
    %p331 = scmp.ne.s32.totalorder %s317, %s318
    %p332 = scmp.eq.s32.totalorder %s32, 3
    %p333 = por %p331, %p332
    %p335 = scmp.ne.s32.totalorder %s318, %s334
    %p336 = scmp.eq.s32.totalorder %s32, 0
    %p337 = por %p335, %p336
    %s338 = ssub.s32 %s34, %s41
    %p339 = scmp.eq.s32.totalorder %s338, 0
    %s341 = sadd.s32 %s340, 1
    %s342 = scalar_select %p339, %s340, %s341
    %p345 = pneg %p339
    %p346 = scmp.eq.s32.totalorder %s26, 3
    %p347 = por %p345, %p346
    %p348 = scmp.ne.s32.totalorder %s340, %s343
    %p349 = scmp.eq.s32.totalorder %s26, 0
    %p350 = por %p348, %p349
    %p351 = scmp.ne.s32.totalorder %s340, %s343
    %p352 = scmp.eq.s32.totalorder %s31, 3
    %p353 = por %p351, %p352
    %p354 = scmp.ne.s32.totalorder %s343, %s344
    %p355 = scmp.eq.s32.totalorder %s31, 0
    %p356 = por %p354, %p355
    %p357 = scmp.ne.s32.totalorder %s343, %s344
    %p358 = scmp.eq.s32.totalorder %s32, 3
    %p359 = por %p357, %p358
    %p361 = scmp.ne.s32.totalorder %s344, %s360
    %p362 = scmp.eq.s32.totalorder %s32, 0
    %p363 = por %p361, %p362
    %s364 = ssub.s32 %s34, %s41
    %p365 = scmp.eq.s32.totalorder %s364, 0
    %s367 = sadd.s32 %s366, 1
    %s368 = scalar_select %p365, %s366, %s367
    %p371 = pneg %p365
    %p372 = scmp.eq.s32.totalorder %s26, 3
    %p373 = por %p371, %p372
    %p374 = scmp.ne.s32.totalorder %s366, %s369
    %p375 = scmp.eq.s32.totalorder %s26, 0
    %p376 = por %p374, %p375
    %p377 = scmp.ne.s32.totalorder %s366, %s369
    %p378 = scmp.eq.s32.totalorder %s31, 3
    %p379 = por %p377, %p378
    %p380 = scmp.ne.s32.totalorder %s369, %s370
    %p381 = scmp.eq.s32.totalorder %s31, 0
    %p382 = por %p380, %p381
    %p383 = scmp.ne.s32.totalorder %s369, %s370
    %p384 = scmp.eq.s32.totalorder %s32, 3
    %p385 = por %p383, %p384
    %p387 = scmp.ne.s32.totalorder %s370, %s386
    %p388 = scmp.eq.s32.totalorder %s32, 0
    %p389 = por %p387, %p388
    %s390 = ssub.s32 %s34, %s41
    %p391 = scmp.eq.s32.totalorder %s390, 0
    %s393 = sadd.s32 %s392, 1
    %s394 = scalar_select %p391, %s392, %s393
    %p397 = pneg %p391
    %p398 = scmp.eq.s32.totalorder %s26, 3
    %p399 = por %p397, %p398
    %p400 = scmp.ne.s32.totalorder %s392, %s395
    %p401 = scmp.eq.s32.totalorder %s26, 0
    %p402 = por %p400, %p401
    %p403 = scmp.ne.s32.totalorder %s392, %s395
    %p404 = scmp.eq.s32.totalorder %s31, 3
    %p405 = por %p403, %p404
    %p406 = scmp.ne.s32.totalorder %s395, %s396
    %p407 = scmp.eq.s32.totalorder %s31, 0
    %p408 = por %p406, %p407
    %p409 = scmp.ne.s32.totalorder %s395, %s396
    %p410 = scmp.eq.s32.totalorder %s32, 3
    %p411 = por %p409, %p410
    %p413 = scmp.ne.s32.totalorder %s396, %s412
    %p414 = scmp.eq.s32.totalorder %s32, 0
    %p415 = por %p413, %p414
    %s416 = ssub.s32 %s34, %s41
    %p417 = scmp.eq.s32.totalorder %s416, 0
    %s419 = sadd.s32 %s418, 1
    %s420 = scalar_select %p417, %s418, %s419
    %p423 = pneg %p417
    %p424 = scmp.eq.s32.totalorder %s26, 3
    %p425 = por %p423, %p424
    %p426 = scmp.ne.s32.totalorder %s418, %s421
    %p427 = scmp.eq.s32.totalorder %s26, 0
    %p428 = por %p426, %p427
    %p429 = scmp.ne.s32.totalorder %s418, %s421
    %p430 = scmp.eq.s32.totalorder %s31, 3
    %p431 = por %p429, %p430
    %p432 = scmp.ne.s32.totalorder %s421, %s422
    %p433 = scmp.eq.s32.totalorder %s31, 0
    %p434 = por %p432, %p433
    %p435 = scmp.ne.s32.totalorder %s421, %s422
    %p436 = scmp.eq.s32.totalorder %s32, 3
    %p437 = por %p435, %p436
    %p439 = scmp.ne.s32.totalorder %s422, %s438
    %p440 = scmp.eq.s32.totalorder %s32, 0
    %p441 = por %p439, %p440
    %s442 = ssub.s32 %s34, %s41
    %p443 = scmp.eq.s32.totalorder %s442, 0
    %s445 = sadd.s32 %s444, 1
    %s446 = scalar_select %p443, %s444, %s445
    %p449 = pneg %p443
    %p450 = scmp.eq.s32.totalorder %s26, 3
    %p451 = por %p449, %p450
    %p452 = scmp.ne.s32.totalorder %s444, %s447
    %p453 = scmp.eq.s32.totalorder %s26, 0
    %p454 = por %p452, %p453
    %p455 = scmp.ne.s32.totalorder %s444, %s447
    %p456 = scmp.eq.s32.totalorder %s31, 3
    %p457 = por %p455, %p456
    %p458 = scmp.ne.s32.totalorder %s447, %s448
    %p459 = scmp.eq.s32.totalorder %s31, 0
    %p460 = por %p458, %p459
    %p461 = scmp.ne.s32.totalorder %s447, %s448
    %p462 = scmp.eq.s32.totalorder %s32, 3
    %p463 = por %p461, %p462
    %p465 = scmp.ne.s32.totalorder %s448, %s464
    %p466 = scmp.eq.s32.totalorder %s32, 0
    %p467 = por %p465, %p466
    %s468 = ssub.s32 %s33, %s45
    %p469 = scmp.eq.s32.totalorder %s468, 0
    %s471 = sadd.s32 %s470, 1
    %s472 = scalar_select %p469, %s470, %s471
    %p475 = pneg %p469
    %p476 = scmp.eq.s32.totalorder %s26, 3
    %p477 = por %p475, %p476
    %p478 = scmp.ne.s32.totalorder %s470, %s473
    %p479 = scmp.eq.s32.totalorder %s26, 0
    %p480 = por %p478, %p479
    %p481 = scmp.ne.s32.totalorder %s470, %s473
    %p482 = scmp.eq.s32.totalorder %s31, 3
    %p483 = por %p481, %p482
    %p484 = scmp.ne.s32.totalorder %s473, %s474
    %p485 = scmp.eq.s32.totalorder %s31, 0
    %p486 = por %p484, %p485
    %p487 = scmp.ne.s32.totalorder %s473, %s474
    %p488 = scmp.eq.s32.totalorder %s32, 3
    %p489 = por %p487, %p488
    %p491 = scmp.ne.s32.totalorder %s474, %s490
    %p492 = scmp.eq.s32.totalorder %s32, 0
    %p493 = por %p491, %p492
    %s495 = sadd.s32 %s494, 1
    %p498 = scmp.eq.s32.totalorder %s26, 3
    %p499 = scmp.ne.s32.totalorder %s494, %s496
    %p500 = scmp.eq.s32.totalorder %s26, 0
    %p501 = por %p499, %p500
    %p502 = scmp.ne.s32.totalorder %s494, %s496
    %p503 = scmp.eq.s32.totalorder %s31, 3
    %p504 = por %p502, %p503
    %p505 = scmp.ne.s32.totalorder %s496, %s497
    %p506 = scmp.eq.s32.totalorder %s31, 0
    %p507 = por %p505, %p506
    %p508 = scmp.ne.s32.totalorder %s496, %s497
    %p509 = scmp.eq.s32.totalorder %s32, 3
    %p510 = por %p508, %p509
    %p512 = scmp.ne.s32.totalorder %s497, %s511
    %p513 = scmp.eq.s32.totalorder %s32, 0
    %p514 = por %p512, %p513
    %s516 = sadd.s32 %s515, 1
    %p519 = scmp.eq.s32.totalorder %s26, 3
    %p520 = scmp.ne.s32.totalorder %s515, %s517
    %p521 = scmp.eq.s32.totalorder %s26, 0
    %p522 = por %p520, %p521
    %p523 = scmp.ne.s32.totalorder %s515, %s517
    %p524 = scmp.eq.s32.totalorder %s31, 3
    %p525 = por %p523, %p524
    %p526 = scmp.ne.s32.totalorder %s517, %s518
    %p527 = scmp.eq.s32.totalorder %s31, 0
    %p528 = por %p526, %p527
    %p529 = scmp.ne.s32.totalorder %s517, %s518
    %p530 = scmp.eq.s32.totalorder %s32, 3
    %p531 = por %p529, %p530
    %p533 = scmp.ne.s32.totalorder %s518, %s532
    %p534 = scmp.eq.s32.totalorder %s32, 0
    %p535 = por %p533, %p534
    %s536 = ssub.s32 %s33, %s45
    %p537 = scmp.eq.s32.totalorder %s536, 0
    %s539 = sadd.s32 %s538, 1
    %s540 = scalar_select %p537, %s538, %s539
    %p543 = pneg %p537
    %p544 = scmp.eq.s32.totalorder %s26, 3
    %p545 = por %p543, %p544
    %p546 = scmp.ne.s32.totalorder %s538, %s541
    %p547 = scmp.eq.s32.totalorder %s26, 0
    %p548 = por %p546, %p547
    %p549 = scmp.ne.s32.totalorder %s538, %s541
    %p550 = scmp.eq.s32.totalorder %s31, 3
    %p551 = por %p549, %p550
    %p552 = scmp.ne.s32.totalorder %s541, %s542
    %p553 = scmp.eq.s32.totalorder %s31, 0
    %p554 = por %p552, %p553
    %p555 = scmp.ne.s32.totalorder %s541, %s542
    %p556 = scmp.eq.s32.totalorder %s32, 3
    %p557 = por %p555, %p556
    %p559 = scmp.ne.s32.totalorder %s542, %s558
    %p560 = scmp.eq.s32.totalorder %s32, 0
    %p561 = por %p559, %p560
    %p562 = scmp.le.s32.totalorder 1, %s26
    %p563 = scmp.lt.s32.totalorder %s26, 5
    %p564 = pnand %p562, %p563
    %p565 = pneg %p564
    // Predicated region
    $region9: #{encoder_vit_forward.1} parent=5 // pred_check
      _
    $region10: #{encoder_vit_forward.1} parent=5 // pred_check_branch
      %567 = sbr.rel (%p564) target = $region12
    $region11: #{encoder_vit_forward.1} parent=5 // pred_region
      %s568 = ssub.s32 %s26, 1
      // Predicated region
      $region13: #{encoder_vit_forward.1} parent=11 // pred_check
        %p569 = pneg %p85
      $region14: #{encoder_vit_forward.1} parent=11 // pred_check_branch
        %571 = sbr.rel (%p569) target = $region16
      $region15: #{encoder_vit_forward.1} parent=11 // pred_region
        _
      $region16: #{encoder_vit_forward.1} parent=11 // pred_fallthru
        _
      // Predicated region
      $region17: #{encoder_vit_forward.1} parent=11 // pred_check
        %p572 = pneg %p106
      $region18: #{encoder_vit_forward.1} parent=11 // pred_check_branch
        %574 = sbr.rel (%p572) target = $region20
      $region19: #{encoder_vit_forward.1} parent=11 // pred_region
        _
      $region20: #{encoder_vit_forward.1} parent=11 // pred_fallthru
        _
      // Predicated region
      $region21: #{encoder_vit_forward.1} parent=11 // pred_check
        %p575 = pneg %p127
      $region22: #{encoder_vit_forward.1} parent=11 // pred_check_branch
        %577 = sbr.rel (%p575) target = $region24
      $region23: #{encoder_vit_forward.1} parent=11 // pred_region
        _
      $region24: #{encoder_vit_forward.1} parent=11 // pred_fallthru
        _
      // Predicated region
      $region25: #{encoder_vit_forward.1} parent=11 // pred_check
        %p578 = pneg %p148
      $region26: #{encoder_vit_forward.1} parent=11 // pred_check_branch
        %580 = sbr.rel (%p578) target = $region28
      $region27: #{encoder_vit_forward.1} parent=11 // pred_region
        _
      $region28: #{encoder_vit_forward.1} parent=11 // pred_fallthru
        _
      // Predicated region
      $region29: #{encoder_vit_forward.1} parent=11 // pred_check
        %p581 = pneg %p507
      $region30: #{encoder_vit_forward.1} parent=11 // pred_check_branch
        %583 = sbr.rel (%p581) target = $region32
      $region31: #{encoder_vit_forward.1} parent=11 // pred_region
        _
      $region32: #{encoder_vit_forward.1} parent=11 // pred_fallthru
        _
      // Predicated region
      $region33: #{encoder_vit_forward.1} parent=11 // pred_check
        %p584 = pneg %p528
      $region34: #{encoder_vit_forward.1} parent=11 // pred_check_branch
        %586 = sbr.rel (%p584) target = $region36
      $region35: #{encoder_vit_forward.1} parent=11 // pred_region
        _
      $region36: #{encoder_vit_forward.1} parent=11 // pred_fallthru
        _
    $region12: #{encoder_vit_forward.1} parent=5 // pred_fallthru
      _
    %p587 = scmp.lt.s32.totalorder %s26, 4
    // Predicated region
    $region37: #{encoder_vit_forward.1} parent=5 // pred_check
      %p588 = pneg %p587
    $region38: #{encoder_vit_forward.1} parent=5 // pred_check_branch
      %590 = sbr.rel (%p588) target = $region40
    $region39: #{encoder_vit_forward.1} parent=5 // pred_region
      // Predicated region
      $region41: #{encoder_vit_forward.1} parent=39 // pred_check
        %p591 = pneg %p58
      $region42: #{encoder_vit_forward.1} parent=39 // pred_check_branch
        %593 = sbr.rel (%p591) target = $region44
      $region43: #{encoder_vit_forward.1} parent=39 // pred_region
        %p594 = scmp.lt.s32.totalorder %s33, 1
        %s595 = scalar_select %p594, %s33, 1
        %s596 = smul.addr %s595, 3
        %s597 = smul.addr %s596, 8
        %s598 = scalar_lea.vmem %s0, %s597
      $region44: #{encoder_vit_forward.1} parent=39 // pred_fallthru
        _
      // Predicated region
      $region45: #{encoder_vit_forward.1} parent=39 // pred_check
        %p599 = pneg %p168
      $region46: #{encoder_vit_forward.1} parent=39 // pred_check_branch
        %601 = sbr.rel (%p599) target = $region48
      $region47: #{encoder_vit_forward.1} parent=39 // pred_region
        %p602 = scmp.lt.s32.totalorder %s34, 1
        %s603 = scalar_select %p602, %s34, 1
        %s604 = scalar_lea.vmem %s5, %s603
      $region48: #{encoder_vit_forward.1} parent=39 // pred_fallthru
        _
      // Predicated region
      $region49: #{encoder_vit_forward.1} parent=39 // pred_check
        %p605 = pneg %p194
      $region50: #{encoder_vit_forward.1} parent=39 // pred_check_branch
        %607 = sbr.rel (%p605) target = $region52
      $region51: #{encoder_vit_forward.1} parent=39 // pred_region
        %p608 = scmp.lt.s32.totalorder %s34, 1
        %s609 = scalar_select %p608, %s34, 1
        %s610 = scalar_lea.vmem %s6, %s609
      $region52: #{encoder_vit_forward.1} parent=39 // pred_fallthru
        _
      // Predicated region
      $region53: #{encoder_vit_forward.1} parent=39 // pred_check
        %p611 = pneg %p220
      $region54: #{encoder_vit_forward.1} parent=39 // pred_check_branch
        %613 = sbr.rel (%p611) target = $region56
      $region55: #{encoder_vit_forward.1} parent=39 // pred_region
        %p614 = scmp.lt.s32.totalorder %s34, 1
        %s615 = scalar_select %p614, %s34, 1
        %s616 = smul.addr %s615, 16
        %s617 = smul.addr %s616, 4
        %s618 = scalar_lea.vmem %s7, %s617
      $region56: #{encoder_vit_forward.1} parent=39 // pred_fallthru
        _
      // Predicated region
      $region57: #{encoder_vit_forward.1} parent=39 // pred_check
        %p619 = pneg %p246
      $region58: #{encoder_vit_forward.1} parent=39 // pred_check_branch
        %621 = sbr.rel (%p619) target = $region60
      $region59: #{encoder_vit_forward.1} parent=39 // pred_region
        %p622 = scmp.lt.s32.totalorder %s34, 1
        %s623 = scalar_select %p622, %s34, 1
        %s624 = smul.addr %s623, 2
        %s625 = scalar_lea.vmem %s8, %s624
      $region60: #{encoder_vit_forward.1} parent=39 // pred_fallthru
        _
      // Predicated region
      $region61: #{encoder_vit_forward.1} parent=39 // pred_check
        %p626 = pneg %p272
      $region62: #{encoder_vit_forward.1} parent=39 // pred_check_branch
        %628 = sbr.rel (%p626) target = $region64
      $region63: #{encoder_vit_forward.1} parent=39 // pred_region
        %p629 = scmp.lt.s32.totalorder %s34, 1
        %s630 = scalar_select %p629, %s34, 1
        %s631 = smul.addr %s630, 8
        %s632 = smul.addr %s631, 4
        %s633 = scalar_lea.vmem %s9, %s632
      $region64: #{encoder_vit_forward.1} parent=39 // pred_fallthru
        _
      // Predicated region
      $region65: #{encoder_vit_forward.1} parent=39 // pred_check
        %p634 = pneg %p298
      $region66: #{encoder_vit_forward.1} parent=39 // pred_check_branch
        %636 = sbr.rel (%p634) target = $region68
      $region67: #{encoder_vit_forward.1} parent=39 // pred_region
        %p637 = scmp.lt.s32.totalorder %s34, 1
        %s638 = scalar_select %p637, %s34, 1
        %s639 = scalar_lea.vmem %s10, %s638
      $region68: #{encoder_vit_forward.1} parent=39 // pred_fallthru
        _
      // Predicated region
      $region69: #{encoder_vit_forward.1} parent=39 // pred_check
        %p640 = pneg %p324
      $region70: #{encoder_vit_forward.1} parent=39 // pred_check_branch
        %642 = sbr.rel (%p640) target = $region72
      $region71: #{encoder_vit_forward.1} parent=39 // pred_region
        %p643 = scmp.lt.s32.totalorder %s34, 1
        %s644 = scalar_select %p643, %s34, 1
        %s645 = scalar_lea.vmem %s11, %s644
      $region72: #{encoder_vit_forward.1} parent=39 // pred_fallthru
        _
      // Predicated region
      $region73: #{encoder_vit_forward.1} parent=39 // pred_check
        %p646 = pneg %p350
      $region74: #{encoder_vit_forward.1} parent=39 // pred_check_branch
        %648 = sbr.rel (%p646) target = $region76
      $region75: #{encoder_vit_forward.1} parent=39 // pred_region
        %p649 = scmp.lt.s32.totalorder %s34, 1
        %s650 = scalar_select %p649, %s34, 1
        %s651 = scalar_lea.vmem %s12, %s650
      $region76: #{encoder_vit_forward.1} parent=39 // pred_fallthru
        _
      // Predicated region
      $region77: #{encoder_vit_forward.1} parent=39 // pred_check
        %p652 = pneg %p376
      $region78: #{encoder_vit_forward.1} parent=39 // pred_check_branch
        %654 = sbr.rel (%p652) target = $region80
      $region79: #{encoder_vit_forward.1} parent=39 // pred_region
        %p655 = scmp.lt.s32.totalorder %s34, 1
        %s656 = scalar_select %p655, %s34, 1
        %s657 = smul.addr %s656, 8
        %s658 = smul.addr %s657, 4
        %s659 = scalar_lea.vmem %s13, %s658
      $region80: #{encoder_vit_forward.1} parent=39 // pred_fallthru
        _
      // Predicated region
      $region81: #{encoder_vit_forward.1} parent=39 // pred_check
        %p660 = pneg %p402
      $region82: #{encoder_vit_forward.1} parent=39 // pred_check_branch
        %662 = sbr.rel (%p660) target = $region84
      $region83: #{encoder_vit_forward.1} parent=39 // pred_region
        %p663 = scmp.lt.s32.totalorder %s34, 1
        %s664 = scalar_select %p663, %s34, 1
        %s665 = scalar_lea.vmem %s14, %s664
      $region84: #{encoder_vit_forward.1} parent=39 // pred_fallthru
        _
      // Predicated region
      $region85: #{encoder_vit_forward.1} parent=39 // pred_check
        %p666 = pneg %p428
      $region86: #{encoder_vit_forward.1} parent=39 // pred_check_branch
        %668 = sbr.rel (%p666) target = $region88
      $region87: #{encoder_vit_forward.1} parent=39 // pred_region
        %p669 = scmp.lt.s32.totalorder %s34, 1
        %s670 = scalar_select %p669, %s34, 1
        %s671 = smul.addr %s670, 16
        %s672 = smul.addr %s671, 4
        %s673 = scalar_lea.vmem %s15, %s672
      $region88: #{encoder_vit_forward.1} parent=39 // pred_fallthru
        _
      // Predicated region
      $region89: #{encoder_vit_forward.1} parent=39 // pred_check
        %p674 = pneg %p454
      $region90: #{encoder_vit_forward.1} parent=39 // pred_check_branch
        %676 = sbr.rel (%p674) target = $region92
      $region91: #{encoder_vit_forward.1} parent=39 // pred_region
        %p677 = scmp.lt.s32.totalorder %s34, 1
        %s678 = scalar_select %p677, %s34, 1
        %s679 = scalar_lea.vmem %s16, %s678
      $region92: #{encoder_vit_forward.1} parent=39 // pred_fallthru
        _
      // Predicated region
      $region93: #{encoder_vit_forward.1} parent=39 // pred_check
        %p680 = pneg %p480
      $region94: #{encoder_vit_forward.1} parent=39 // pred_check_branch
        %682 = sbr.rel (%p680) target = $region96
      $region95: #{encoder_vit_forward.1} parent=39 // pred_region
        %p683 = scmp.lt.s32.totalorder %s33, 1
        %s684 = scalar_select %p683, %s33, 1
        %s685 = scalar_lea.vmem %s17, %s684
      $region96: #{encoder_vit_forward.1} parent=39 // pred_fallthru
        _
    $region40: #{encoder_vit_forward.1} parent=5 // pred_fallthru
      _
    %p686 = scmp.le.s32.totalorder 1, %s26
    %p687 = scmp.lt.s32.totalorder %s26, 5
    %p688 = pnand %p686, %p687
    %p689 = pneg %p688
    // Predicated region
    $region97: #{encoder_vit_forward.1} parent=5 // pred_check
      _
    $region98: #{encoder_vit_forward.1} parent=5 // pred_check_branch
      %691 = sbr.rel (%p688) target = $region100
    $region99: #{encoder_vit_forward.1} parent=5 // pred_region
      %s692 = ssub.s32 %s26, 1
      %p693 = scmp.lt.s32.totalorder %s35, 1
      %s694 = scalar_select %p693, %s35, 1
      %s695 = smul.addr %s694, 3
      %s696 = smul.addr %s695, 8
      %s697 = scalar_lea.vmem %s0, %s696
      %p698 = pneg %p64
      %p699 = pneg %p61
      %p700 = pneg %p85
      %p701 = pneg %p82
      %p702 = pneg %p106
      %p703 = pneg %p103
      %p704 = pneg %p127
      %p705 = pneg %p124
      %p706 = pneg %p148
      %p707 = pneg %p145
      %p708 = scmp.lt.s32.totalorder %s36, 1
      %s709 = scalar_select %p708, %s36, 1
      %s710 = scalar_lea.vmem %s5, %s709
      %p711 = pneg %p174
      %p712 = pneg %p171
      %p713 = scmp.lt.s32.totalorder %s36, 1
      %s714 = scalar_select %p713, %s36, 1
      %s715 = scalar_lea.vmem %s6, %s714
      %p716 = pneg %p200
      %p717 = pneg %p197
      %p718 = scmp.lt.s32.totalorder %s36, 1
      %s719 = scalar_select %p718, %s36, 1
      %s720 = smul.addr %s719, 16
      %s721 = smul.addr %s720, 4
      %s722 = scalar_lea.vmem %s7, %s721
      %p723 = pneg %p226
      %p724 = pneg %p223
      %p725 = scmp.lt.s32.totalorder %s36, 1
      %s726 = scalar_select %p725, %s36, 1
      %s727 = smul.addr %s726, 2
      %s728 = scalar_lea.vmem %s8, %s727
      %p729 = pneg %p252
      %p730 = pneg %p249
      %p731 = scmp.lt.s32.totalorder %s36, 1
      %s732 = scalar_select %p731, %s36, 1
      %s733 = smul.addr %s732, 8
      %s734 = smul.addr %s733, 4
      %s735 = scalar_lea.vmem %s9, %s734
      %p736 = pneg %p278
      %p737 = pneg %p275
      %p738 = scmp.lt.s32.totalorder %s36, 1
      %s739 = scalar_select %p738, %s36, 1
      %s740 = scalar_lea.vmem %s10, %s739
      %p741 = pneg %p304
      %p742 = pneg %p301
      %p743 = scmp.lt.s32.totalorder %s36, 1
      %s744 = scalar_select %p743, %s36, 1
      %s745 = scalar_lea.vmem %s11, %s744
      %p746 = pneg %p330
      %p747 = pneg %p327
      %p748 = scmp.lt.s32.totalorder %s36, 1
      %s749 = scalar_select %p748, %s36, 1
      %s750 = scalar_lea.vmem %s12, %s749
      %p751 = pneg %p356
      %p752 = pneg %p353
      %p753 = scmp.lt.s32.totalorder %s36, 1
      %s754 = scalar_select %p753, %s36, 1
      %s755 = smul.addr %s754, 8
      %s756 = smul.addr %s755, 4
      %s757 = scalar_lea.vmem %s13, %s756
      %p758 = pneg %p382
      %p759 = pneg %p379
      %p760 = scmp.lt.s32.totalorder %s36, 1
      %s761 = scalar_select %p760, %s36, 1
      %s762 = scalar_lea.vmem %s14, %s761
      %p763 = pneg %p408
      %p764 = pneg %p405
      %p765 = scmp.lt.s32.totalorder %s36, 1
      %s766 = scalar_select %p765, %s36, 1
      %s767 = smul.addr %s766, 16
      %s768 = smul.addr %s767, 4
      %s769 = scalar_lea.vmem %s15, %s768
      %p770 = pneg %p434
      %p771 = pneg %p431
      %p772 = scmp.lt.s32.totalorder %s36, 1
      %s773 = scalar_select %p772, %s36, 1
      %s774 = scalar_lea.vmem %s16, %s773
      %p775 = pneg %p460
      %p776 = pneg %p457
      %p777 = scmp.lt.s32.totalorder %s35, 1
      %s778 = scalar_select %p777, %s35, 1
      %s779 = scalar_lea.vmem %s17, %s778
      %p780 = pneg %p486
      %p781 = pneg %p483
      %p782 = pneg %p507
      %p783 = pneg %p504
      %p784 = pneg %p528
      %p785 = pneg %p525
      %p786 = pneg %p554
      %p787 = pneg %p551
      %p788 = scmp.lt.s32.totalorder %s35, 1
      %s789 = scalar_select %p788, %s35, 1
      %s790 = smul.addr %s789, 3
      %s791 = smul.addr %s790, 8
      %s792 = scalar_lea.vmem %s20, %s791
      %p793 = scmp.lt.s32.totalorder %s35, 1
      %s794 = scalar_select %p793, %s35, 1
      %s795 = smul.addr %s794, 3
      %s796 = smul.addr %s795, 8
      %s797 = scalar_lea.vmem %s0, %s796
      %p798 = scmp.lt.s32.totalorder %s36, 1
      %s799 = scalar_select %p798, %s36, 1
      %s800 = scalar_lea.vmem %s5, %s799
      %p801 = scmp.lt.s32.totalorder %s36, 1
      %s802 = scalar_select %p801, %s36, 1
      %s803 = scalar_lea.vmem %s6, %s802
      %p804 = scmp.lt.s32.totalorder %s36, 1
      %s805 = scalar_select %p804, %s36, 1
      %s806 = smul.addr %s805, 16
      %s807 = smul.addr %s806, 4
      %s808 = scalar_lea.vmem %s7, %s807
      %p809 = scmp.lt.s32.totalorder %s36, 1
      %s810 = scalar_select %p809, %s36, 1
      %s811 = smul.addr %s810, 2
      %s812 = scalar_lea.vmem %s8, %s811
      %p813 = scmp.lt.s32.totalorder %s36, 1
      %s814 = scalar_select %p813, %s36, 1
      %s815 = smul.addr %s814, 8
      %s816 = smul.addr %s815, 4
      %s817 = scalar_lea.vmem %s9, %s816
      %p818 = scmp.lt.s32.totalorder %s36, 1
      %s819 = scalar_select %p818, %s36, 1
      %s820 = scalar_lea.vmem %s10, %s819
      %p821 = scmp.lt.s32.totalorder %s36, 1
      %s822 = scalar_select %p821, %s36, 1
      %s823 = scalar_lea.vmem %s11, %s822
      %p824 = scmp.lt.s32.totalorder %s36, 1
      %s825 = scalar_select %p824, %s36, 1
      %s826 = scalar_lea.vmem %s12, %s825
      %p827 = scmp.lt.s32.totalorder %s36, 1
      %s828 = scalar_select %p827, %s36, 1
      %s829 = smul.addr %s828, 8
      %s830 = smul.addr %s829, 4
      %s831 = scalar_lea.vmem %s13, %s830
      %p832 = scmp.lt.s32.totalorder %s36, 1
      %s833 = scalar_select %p832, %s36, 1
      %s834 = scalar_lea.vmem %s14, %s833
      %p835 = scmp.lt.s32.totalorder %s36, 1
      %s836 = scalar_select %p835, %s36, 1
      %s837 = smul.addr %s836, 16
      %s838 = smul.addr %s837, 4
      %s839 = scalar_lea.vmem %s15, %s838
      %p840 = scmp.lt.s32.totalorder %s36, 1
      %s841 = scalar_select %p840, %s36, 1
      %s842 = scalar_lea.vmem %s16, %s841
      %p843 = scmp.lt.s32.totalorder %s35, 1
      %s844 = scalar_select %p843, %s35, 1
      %s845 = scalar_lea.vmem %s17, %s844
      %p846 = scmp.lt.s32.totalorder %s35, 1
      %s847 = scalar_select %p846, %s35, 1
      %s848 = smul.addr %s847, 3
      %s849 = smul.addr %s848, 8
      %s850 = scalar_lea.vmem %s20, %s849
      %p852 = scmp.eq.s32.totalorder %s36, 0
      // Predicated region
      $region101: #{encoder_vit_forward.1} parent=99 // pred_check
        %p853 = pneg %p852
      $region102: #{encoder_vit_forward.1} parent=99 // pred_check_branch
        %855 = sbr.rel (%p853) target = $region104
      $region103: #{encoder_vit_forward.1} parent=99 // pred_region
        %v856 = vld [vmem:[%s797] sm:$0xff]
        %v857 = vld [vmem:[%s797 + $0x8] sm:$0xff]
        %v858 = vld [vmem:[%s797 + $0x10] sm:$0xff]
        %v859 = vpack.c.bf16 %v857, %v856
        %v860 = vpack.c.bf16 %v858, %v858
        %v861 = vld [vmem:[%s1] sm:$0xf]
        %v862 = vld [vmem:[%s1 + $0x4] sm:$0xf]
        %v863 = vld [vmem:[%s1 + $0x8] sm:$0xf]
        %v864 = vld [vmem:[%s1 + $0xc] sm:$0xf]
        %v865 = vld [vmem:[%s1 + $0x10] sm:$0xf]
        %v866 = vld [vmem:[%s1 + $0x14] sm:$0xf]
        %v867 = vld [vmem:[%s2] sm:$0xff]
        %v868 = vld [vmem:[%s2 + $0x8] sm:$0xff]
        %v869 = vld [vmem:[%s2 + $0x10] sm:$0xff]
        %v876 = vunpack.c.l.b16 %v861
        %v877 = vunpack.c.l.b16 %v862
        %v878 = vunpack.c.l.b16 %v863
        %v879 = vunpack.c.l.b16 %v864
        %v880 = vunpack.c.l.b16 %v865
        %v881 = vunpack.c.l.b16 %v866
        %v882 = vpack.c.b16 %v877, %v876
        %v883 = vpack.c.b16 %v879, %v878
        %v884 = vpack.c.b16 %v881, %v880
        %vm888 = vcmask 392192
        %v890 = vsel %vm888, %v859, 0
        %v893 = vsel %vm888, %v860, 0
        %895 = vmatprep.subr.bf16.mxu0 0
        %896 = vmatpush1.bf16.msra.mxu0 %v882
        %897 = vmatprep.subr.bf16.mxu0 0
        %898 = vmatpush1.bf16.msra.mxu0 %v883
        %899 = vmatprep.subr.bf16.mxu0 0
        %900 = vmatpush1.bf16.msra.mxu0 %v884
        %901 = vmatprep.subr.bf16.mxu0 0
        %902 = vmatpush1.bf16.msra.mxu0 0
        %903 = vmatprep.subr.bf16.mxu0 0
        %904 = vmatpush1.bf16.msra.mxu0 0
        %905 = vmatprep.subr.bf16.mxu0 0
        %906 = vmatpush1.bf16.msra.mxu0 0
        %907 = vmatprep.subr.bf16.mxu0 0
        %908 = vmatpush1.bf16.msra.mxu0 0
        %909 = vmatprep.subr.bf16.mxu0 0
        %910 = vmatpush1.bf16.msra.mxu0 0
        %911 = vmatprep.subr.bf16.mxu0 0
        %912 = vmatpush1.bf16.msra.mxu0 0
        %913 = vmatprep.subr.bf16.mxu0 0
        %914 = vmatpush1.bf16.msra.mxu0 0
        %915 = vmatprep.subr.bf16.mxu0 0
        %916 = vmatpush1.bf16.msra.mxu0 0
        %917 = vmatprep.subr.bf16.mxu0 0
        %918 = vmatpush1.bf16.msra.mxu0 0
        %919 = vmatprep.subr.bf16.mxu0 0
        %920 = vmatpush1.bf16.msra.mxu0 0
        %921 = vmatprep.subr.bf16.mxu0 0
        %922 = vmatpush1.bf16.msra.mxu0 0
        %923 = vmatprep.subr.bf16.mxu0 0
        %924 = vmatpush1.bf16.msra.mxu0 0
        %925 = vmatprep.subr.bf16.mxu0 0
        %926 = vmatpush1.bf16.msra.mxu0 0
        %927 = vmatprep.mubr.bf16.mxu0 0
        %928 = vmatmul.mubr.bf16.gmra.mrb[0].mxu0 %v890
        %v929 = vpop.f32.mrb[0].mxu0
        %v930 = vadd.f32 %v867, %v929
        %v931 = vpop.f32.mrb[0].mxu0
        %v932 = vpop.f32.mrb[0].mxu0
        %v933 = vadd.f32 %v868, %v932
        %v934 = vpop.f32.mrb[0].mxu0
        %935 = vmatprep.mubr.bf16.mxu0 0
        %936 = vmatmul.mubr.bf16.gmra.mrb[0].mxu0 %v893
        %v937 = vpop.f32.mrb[0].mxu0
        %v938 = vadd.f32 %v869, %v937
        %v939 = vpop.f32.mrb[0].mxu0
        %v940 = vpop.f32.mrb[0].mxu0
        %v941 = vpop.f32.mrb[0].mxu0
        %942 = vdwg.mxu0
        %v943 = vld [vmem:[%s3] sm:$0x1]
        %v944 = vld [vmem:[%s4] sm:$0x1]
        %vm945 = vcmask 523264
        %v946 = vsel %vm945, %v930, 0.0
        %947 = vadd.xlane.f32.xlu0 %v946
        %v948 = vpop.xlane.xlu0 %947
        %v949 = vsel %vm945, %v933, 0.0
        %950 = vadd.xlane.f32.xlu0 %v949
        %v951 = vpop.xlane.xlu0 %950
        %v952 = vsel %vm945, %v938, 0.0
        %953 = vadd.xlane.f32.xlu0 %v952
        %v954 = vpop.xlane.xlu0 %953
        %v955 = vrcp.pop 64.0
        %v956 = vmul.f32 %v948, %v955
        %v957 = vmul.f32 %v951, %v955
        %v958 = vmul.f32 %v954, %v955
        %v959 = vsub.f32 %v930, %v956
        %v960 = vsub.f32 %v933, %v957
        %v961 = vsub.f32 %v938, %v958
        %v962 = vmul.f32 %v959, %v959
        %v963 = vmul.f32 %v960, %v960
        %v964 = vmul.f32 %v961, %v961
        %v965 = vsel %vm945, %v962, 0.0
        %966 = vadd.xlane.f32.xlu0 %v965
        %v967 = vpop.xlane.xlu0 %966
        %v968 = vsel %vm945, %v963, 0.0
        %969 = vadd.xlane.f32.xlu0 %v968
        %v970 = vpop.xlane.xlu0 %969
        %v971 = vsel %vm945, %v964, 0.0
        %972 = vadd.xlane.f32.xlu0 %v971
        %v973 = vpop.xlane.xlu0 %972
        %v974 = vmul.f32 %v967, %v955
        %v975 = vmul.f32 %v970, %v955
        %v976 = vmul.f32 %v973, %v955
        %v977 = vadd.f32 %v974, 1e-05
        %v978 = vadd.f32 %v975, 1e-05
        %v979 = vadd.f32 %v976, 1e-05
        %v980 = vrsqrt.pop %v977
        %v981 = vrsqrt.pop %v978
        %v982 = vrsqrt.pop %v979
        %v983 = vmul.f32 %v959, %v980
        %v984 = vmul.f32 %v960, %v981
        %v985 = vmul.f32 %v961, %v982
        %v987 = vlaneseq
        %v988 = vshrl.u32 %v987, 7
        %v989 = vsub.s32 0, %v988
        %v990 = vrot.slane %v943, %v989
        %v992 = vmul.f32 %v983, %v990
        %v993 = vmul.f32 %v984, %v990
        %v994 = vmul.f32 %v985, %v990
        %v996 = vlaneseq
        %v997 = vshrl.u32 %v996, 7
        %v998 = vsub.s32 0, %v997
        %v999 = vrot.slane %v944, %v998
        %v1001 = vadd.f32 %v992, %v999
        %v1002 = vadd.f32 %v993, %v999
        %v1003 = vadd.f32 %v994, %v999
        %1004 = vst.msk [vmem:[#allocation2] sm:$0xff] %vm945, %v1001
        %1005 = vst.msk [vmem:[#allocation2 + $0x8] sm:$0xff] %vm945, %v1002
        %1006 = vst.msk [vmem:[#allocation2 + $0x10] sm:$0xff] %vm945, %v1003
      $region104: #{encoder_vit_forward.1} parent=99 // pred_fallthru
        _
      %v1007 = vld [vmem:[#allocation2] sm:$0xff]
      %v1008 = vld [vmem:[#allocation2 + $0x8] sm:$0xff]
      %v1009 = vld [vmem:[#allocation2 + $0x10] sm:$0xff]
      %v1010 = vld [vmem:[%s800] sm:$0x1]
      %v1011 = vld [vmem:[%s803] sm:$0x1]
      %vm1012 = vcmask 523264
      %v1013 = vsel %vm1012, %v1007, 0.0
      %1014 = vadd.xlane.f32.xlu0 %v1013
      %v1015 = vpop.xlane.xlu0 %1014
      %v1016 = vsel %vm1012, %v1008, 0.0
      %1017 = vadd.xlane.f32.xlu0 %v1016
      %v1018 = vpop.xlane.xlu0 %1017
      %v1019 = vsel %vm1012, %v1009, 0.0
      %1020 = vadd.xlane.f32.xlu0 %v1019
      %v1021 = vpop.xlane.xlu0 %1020
      %v1022 = vrcp.pop 64.0
      %v1023 = vmul.f32 %v1015, %v1022
      %v1024 = vmul.f32 %v1018, %v1022
      %v1025 = vmul.f32 %v1021, %v1022
      %v1026 = vsub.f32 %v1007, %v1023
      %v1027 = vsub.f32 %v1008, %v1024
      %v1028 = vsub.f32 %v1009, %v1025
      %v1029 = vmul.f32 %v1026, %v1026
      %v1030 = vmul.f32 %v1027, %v1027
      %v1031 = vmul.f32 %v1028, %v1028
      %v1032 = vsel %vm1012, %v1029, 0.0
      %1033 = vadd.xlane.f32.xlu0 %v1032
      %v1034 = vpop.xlane.xlu0 %1033
      %v1035 = vsel %vm1012, %v1030, 0.0
      %1036 = vadd.xlane.f32.xlu0 %v1035
      %v1037 = vpop.xlane.xlu0 %1036
      %v1038 = vsel %vm1012, %v1031, 0.0
      %1039 = vadd.xlane.f32.xlu0 %v1038
      %v1040 = vpop.xlane.xlu0 %1039
      %v1041 = vmul.f32 %v1034, %v1022
      %v1042 = vmul.f32 %v1037, %v1022
      %v1043 = vmul.f32 %v1040, %v1022
      %v1044 = vadd.f32 %v1041, 1e-05
      %v1045 = vadd.f32 %v1042, 1e-05
      %v1046 = vadd.f32 %v1043, 1e-05
      %v1047 = vrsqrt.pop %v1044
      %v1048 = vrsqrt.pop %v1045
      %v1049 = vrsqrt.pop %v1046
      %v1050 = vmul.f32 %v1026, %v1047
      %v1051 = vmul.f32 %v1027, %v1048
      %v1052 = vmul.f32 %v1028, %v1049
      %v1054 = vlaneseq
      %v1055 = vshrl.u32 %v1054, 7
      %v1056 = vsub.s32 0, %v1055
      %v1057 = vrot.slane %v1010, %v1056
      %v1059 = vmul.f32 %v1050, %v1057
      %v1060 = vmul.f32 %v1051, %v1057
      %v1061 = vmul.f32 %v1052, %v1057
      %v1063 = vlaneseq
      %v1064 = vshrl.u32 %v1063, 7
      %v1065 = vsub.s32 0, %v1064
      %v1066 = vrot.slane %v1011, %v1065
      %v1068 = vadd.f32 %v1059, %v1066
      %v1069 = vadd.f32 %v1060, %v1066
      %v1070 = vadd.f32 %v1061, %v1066
      %v1071 = vpack.c.bf16 %v1069, %v1068
      %v1072 = vpack.c.bf16 %v1070, %v1070
      %v1073 = vld [vmem:[%s808] sm:$0xff]
      %v1074 = vld [vmem:[%s808 + $0x8] sm:$0xff]
      %v1075 = vld [vmem:[%s808 + $0x10] sm:$0xff]
      %v1076 = vld [vmem:[%s808 + $0x18] sm:$0xff]
      %v1077 = vld [vmem:[%s808 + $0x20] sm:$0xff]
      %v1078 = vld [vmem:[%s808 + $0x28] sm:$0xff]
      %v1079 = vld [vmem:[%s808 + $0x30] sm:$0xff]
      %v1080 = vld [vmem:[%s808 + $0x38] sm:$0xff]
      %v1081 = vld [vmem:[%s812] sm:$0x3]
      %v1083 = vlaneseq
      %v1084 = vshrl.u32 %v1083, 7
      %v1085 = vsub.s32 0, %v1084
      %v1086 = vrot.slane %v1081, %v1085
      %v1087 = vlaneseq
      %v1088 = vshrl.u32 %v1087, 7
      %v1089 = vsub.s32 1, %v1088
      %v1090 = vrot.slane %v1081, %v1089
      %v1101 = vunpack.c.l.b16 %v1073
      %v1102 = vunpack.c.h.b16 %v1073
      %v1103 = vunpack.c.l.b16 %v1074
      %v1104 = vunpack.c.h.b16 %v1074
      %v1105 = vunpack.c.l.b16 %v1075
      %v1106 = vunpack.c.h.b16 %v1075
      %v1107 = vunpack.c.l.b16 %v1076
      %v1108 = vunpack.c.h.b16 %v1076
      %v1109 = vunpack.c.l.b16 %v1077
      %v1110 = vunpack.c.h.b16 %v1077
      %v1111 = vunpack.c.l.b16 %v1078
      %v1112 = vunpack.c.h.b16 %v1078
      %v1113 = vunpack.c.l.b16 %v1079
      %v1114 = vunpack.c.h.b16 %v1079
      %v1115 = vunpack.c.l.b16 %v1080
      %v1116 = vunpack.c.h.b16 %v1080
      %v1117 = vpack.c.b16 %v1103, %v1101
      %v1118 = vpack.c.b16 %v1104, %v1102
      %v1119 = vpack.c.b16 %v1107, %v1105
      %v1120 = vpack.c.b16 %v1108, %v1106
      %v1121 = vpack.c.b16 %v1111, %v1109
      %v1122 = vpack.c.b16 %v1112, %v1110
      %v1123 = vpack.c.b16 %v1115, %v1113
      %v1124 = vpack.c.b16 %v1116, %v1114
      %v1134 = vsel %vm1012, %v1071, 0
      %v1137 = vsel %vm1012, %v1072, 0
      %1139 = vmatprep.subr.bf16.mxu0 %v1118
      %1140 = vmatpush1.bf16.msra.mxu0 %v1117
      %1141 = vmatprep.subr.bf16.mxu0 %v1120
      %1142 = vmatpush1.bf16.msra.mxu0 %v1119
      %1143 = vmatprep.subr.bf16.mxu0 %v1122
      %1144 = vmatpush1.bf16.msra.mxu0 %v1121
      %1145 = vmatprep.subr.bf16.mxu0 %v1124
      %1146 = vmatpush1.bf16.msra.mxu0 %v1123
      %1147 = vmatprep.subr.bf16.mxu0 0
      %1148 = vmatpush1.bf16.msra.mxu0 0
      %1149 = vmatprep.subr.bf16.mxu0 0
      %1150 = vmatpush1.bf16.msra.mxu0 0
      %1151 = vmatprep.subr.bf16.mxu0 0
      %1152 = vmatpush1.bf16.msra.mxu0 0
      %1153 = vmatprep.subr.bf16.mxu0 0
      %1154 = vmatpush1.bf16.msra.mxu0 0
      %1155 = vmatprep.subr.bf16.mxu0 0
      %1156 = vmatpush1.bf16.msra.mxu0 0
      %1157 = vmatprep.subr.bf16.mxu0 0
      %1158 = vmatpush1.bf16.msra.mxu0 0
      %1159 = vmatprep.subr.bf16.mxu0 0
      %1160 = vmatpush1.bf16.msra.mxu0 0
      %1161 = vmatprep.subr.bf16.mxu0 0
      %1162 = vmatpush1.bf16.msra.mxu0 0
      %1163 = vmatprep.subr.bf16.mxu0 0
      %1164 = vmatpush1.bf16.msra.mxu0 0
      %1165 = vmatprep.subr.bf16.mxu0 0
      %1166 = vmatpush1.bf16.msra.mxu0 0
      %1167 = vmatprep.subr.bf16.mxu0 0
      %1168 = vmatpush1.bf16.msra.mxu0 0
      %1169 = vmatprep.subr.bf16.mxu0 0
      %1170 = vmatpush1.bf16.msra.mxu0 0
      %1171 = vmatprep.mubr.bf16.mxu0 0
      %1172 = vmatmul.mubr.bf16.gmra.mrb[0].mxu0 %v1134
      %v1173 = vpop.f32.mrb[0].mxu0
      %v1174 = vadd.f32 %v1086, %v1173
      %v1175 = vpop.f32.mrb[0].mxu0
      %v1176 = vadd.f32 %v1090, %v1175
      %v1177 = vpop.f32.mrb[0].mxu0
      %v1178 = vadd.f32 %v1086, %v1177
      %v1179 = vpop.f32.mrb[0].mxu0
      %v1180 = vadd.f32 %v1090, %v1179
      %1181 = vmatprep.mubr.bf16.mxu0 0
      %1182 = vmatmul.mubr.bf16.gmra.mrb[0].mxu0 %v1137
      %v1183 = vpop.f32.mrb[0].mxu0
      %v1184 = vadd.f32 %v1086, %v1183
      %v1185 = vpop.f32.mrb[0].mxu0
      %v1186 = vadd.f32 %v1090, %v1185
      %v1187 = vpop.f32.mrb[0].mxu0
      %v1188 = vpop.f32.mrb[0].mxu0
      %1189 = vdwg.mxu0
      %v1190 = vld [vmem:[%s817] sm:$0xf]
      %v1191 = vld [vmem:[%s817 + $0x4] sm:$0xf]
      %v1192 = vld [vmem:[%s817 + $0x8] sm:$0xf]
      %v1193 = vld [vmem:[%s817 + $0xc] sm:$0xf]
      %v1194 = vld [vmem:[%s817 + $0x10] sm:$0xf]
      %v1195 = vld [vmem:[%s817 + $0x14] sm:$0xf]
      %v1196 = vld [vmem:[%s817 + $0x18] sm:$0xf]
      %v1197 = vld [vmem:[%s817 + $0x1c] sm:$0xf]
      %v1198 = vlaneseq
      %v1199 = vand.u32 %v1198, 127
      %vm1200 = vcmp.lt.s32.totalorder %v1199, 17
      %v1201 = vmul.f32 %v1174, 0.25
      %v1202 = vmul.f32 %v1178, 0.25
      %v1203 = vmul.f32 %v1184, 0.25
      %1207 = vrot.lane.b32.xlu0 %v1174, 64
      %v1208 = vpop.permute.xlu0 %1207
      %1209 = vrot.lane.b32.xlu0 %v1178, 64
      %v1210 = vpop.permute.xlu0 %1209
      %1211 = vrot.lane.b32.xlu0 %v1184, 64
      %v1212 = vpop.permute.xlu0 %1211
      %vm1213 = vcmask 130048
      %v1215 = vsel %vm1213, %v1201, 0
      %v1218 = vsel %vm1213, %v1202, 0
      %v1221 = vsel %vm1213, %v1203, 0
      %v1223 = vsel %vm1213, %v1208, 0
      %v1225 = vsel %vm1213, %v1210, 0
      %v1227 = vsel %vm1213, %v1212, 0
      %1229 = vmatprep.subr.mxu0 0.0
      %1230 = vmatpush1.xpose.msra.mxu0 %v1223
      %1231 = vmatprep.subr.mxu0 0.0
      %1232 = vmatpush1.xpose.msra.mxu0 %v1225
      %1233 = vmatprep.subr.mxu0 0.0
      %1234 = vmatpush1.xpose.msra.mxu0 %v1227
      %1235 = vmatprep.subr.mxu0 0.0
      %1236 = vmatpush1.xpose.msra.mxu0 0.0
      %1237 = vmatprep.subr.mxu0 0.0
      %1238 = vmatpush1.xpose.msra.mxu0 0.0
      %1239 = vmatprep.subr.mxu0 0.0
      %1240 = vmatpush1.xpose.msra.mxu0 0.0
      %1241 = vmatprep.subr.mxu0 0.0
      %1242 = vmatpush1.xpose.msra.mxu0 0.0
      %1243 = vmatprep.subr.mxu0 0.0
      %1244 = vmatpush1.xpose.msra.mxu0 0.0
      %1245 = vmatprep.subr.mxu0 0.0
      %1246 = vmatpush1.xpose.msra.mxu0 0.0
      %1247 = vmatprep.subr.mxu0 0.0
      %1248 = vmatpush1.xpose.msra.mxu0 0.0
      %1249 = vmatprep.subr.mxu0 0.0
      %1250 = vmatpush1.xpose.msra.mxu0 0.0
      %1251 = vmatprep.subr.mxu0 0.0
      %1252 = vmatpush1.xpose.msra.mxu0 0.0
      %1253 = vmatprep.subr.mxu0 0.0
      %1254 = vmatpush1.xpose.msra.mxu0 0.0
      %1255 = vmatprep.subr.mxu0 0.0
      %1256 = vmatpush1.xpose.msra.mxu0 0.0
      %1257 = vmatprep.subr.mxu0 0.0
      %1258 = vmatpush1.xpose.msra.mxu0 0.0
      %1259 = vmatprep.subr.mxu0 0.0
      %1260 = vmatpush1.xpose.msra.mxu0 0.0
      %1261 = vmatprep.subr.mxu0 0.0
      %1262 = vmatpush1.xpose.msra.mxu0 0.0
      %1263 = vmatprep.subr.mxu0 0.0
      %1264 = vmatpush1.xpose.msra.mxu0 0.0
      %1265 = vmatprep.subr.mxu0 0.0
      %1266 = vmatpush1.xpose.msra.mxu0 0.0
      %1267 = vmatprep.subr.mxu0 0.0
      %1268 = vmatpush1.xpose.msra.mxu0 0.0
      %1269 = vmatprep.subr.mxu0 0.0
      %1270 = vmatpush1.xpose.msra.mxu0 0.0
      %1271 = vmatprep.subr.mxu0 0.0
      %1272 = vmatpush1.xpose.msra.mxu0 0.0
      %1273 = vmatprep.subr.mxu0 0.0
      %1274 = vmatpush1.xpose.msra.mxu0 0.0
      %1275 = vmatprep.subr.mxu0 0.0
      %1276 = vmatpush1.xpose.msra.mxu0 0.0
      %1277 = vmatprep.subr.mxu0 0.0
      %1278 = vmatpush1.xpose.msra.mxu0 0.0
      %1279 = vmatprep.subr.mxu0 0.0
      %1280 = vmatpush1.xpose.msra.mxu0 0.0
      %1281 = vmatprep.subr.mxu0 0.0
      %1282 = vmatpush1.xpose.msra.mxu0 0.0
      %1283 = vmatprep.subr.mxu0 0.0
      %1284 = vmatpush1.xpose.msra.mxu0 0.0
      %1285 = vmatprep.subr.mxu0 0.0
      %1286 = vmatpush1.xpose.msra.mxu0 0.0
      %1287 = vmatprep.subr.mxu0 0.0
      %1288 = vmatpush1.xpose.msra.mxu0 0.0
      %1289 = vmatprep.subr.mxu0 0.0
      %1290 = vmatpush1.xpose.msra.mxu0 0.0
      %1291 = vmatprep.subr.mxu0 0.0
      %1292 = vmatpush1.xpose.msra.mxu0 0.0
      %1293 = vmatprep.mubr.f32.mxu0 0.0
      %1294 = vmatmul.mubr.f32.gmra.mrb[0].mxu0 %v1215
      %v1295 = vpop.f32.mrb[0].mxu0
      %v1296 = vadd.f32 0.0, %v1295
      %v1297 = vpop.f32.mrb[0].mxu0
      %1298 = vmatprep.mubr.f32.mxu0 0.0
      %1299 = vmatmul.mubr.f32.gmra.mrb[0].mxu0 %v1218
      %v1300 = vpop.f32.mrb[0].mxu0
      %v1301 = vadd.f32 0.0, %v1300
      %v1302 = vpop.f32.mrb[0].mxu0
      %1303 = vmatprep.mubr.f32.mxu0 0.0
      %1304 = vmatmul.mubr.f32.gmra.mrb[0].mxu0 %v1221
      %v1305 = vpop.f32.mrb[0].mxu0
      %v1306 = vadd.f32 0.0, %v1305
      %v1307 = vpop.f32.mrb[0].mxu0
      %1308 = vdwg.mxu0
      %v1309 = vsel %vm1200, %v1296, -1e+30
      %v1310 = vsel %vm1200, %v1301, -1e+30
      %v1311 = vsel %vm1200, %v1306, -1e+30
      %vm1312 = vcmask 195584
      %v1313 = vsel %vm1312, %v1309, -inf
      %1314 = vmax.xlane.f32.xlu0 %v1313
      %v1315 = vpop.xlane.xlu0 %1314
      %v1316 = vsel %vm1312, %v1310, -inf
      %1317 = vmax.xlane.f32.xlu0 %v1316
      %v1318 = vpop.xlane.xlu0 %1317
      %v1319 = vsel %vm1312, %v1311, -inf
      %1320 = vmax.xlane.f32.xlu0 %v1319
      %v1321 = vpop.xlane.xlu0 %1320
      %v1322 = vsub.f32 %v1309, %v1315
      %v1323 = vsub.f32 %v1310, %v1318
      %v1324 = vsub.f32 %v1311, %v1321
      %v1325 = vmul.f32 %v1322, 1.442695
      %v1326 = vpow.pop %v1325
      %v1327 = vmul.f32 %v1323, 1.442695
      %v1328 = vpow.pop %v1327
      %v1329 = vmul.f32 %v1324, 1.442695
      %v1330 = vpow.pop %v1329
      %v1331 = vsel %vm1312, %v1326, 0.0
      %1332 = vadd.xlane.f32.xlu0 %v1331
      %v1333 = vpop.xlane.xlu0 %1332
      %v1334 = vsel %vm1312, %v1328, 0.0
      %1335 = vadd.xlane.f32.xlu0 %v1334
      %v1336 = vpop.xlane.xlu0 %1335
      %v1337 = vsel %vm1312, %v1330, 0.0
      %1338 = vadd.xlane.f32.xlu0 %v1337
      %v1339 = vpop.xlane.xlu0 %1338
      %v1340 = vrcp.pop %v1333
      %v1341 = vrcp.pop %v1336
      %v1342 = vrcp.pop %v1339
      %v1343 = vmul.f32 %v1326, %v1340
      %v1344 = vmul.f32 %v1328, %v1341
      %v1345 = vmul.f32 %v1330, %v1342
      %v1347 = vsel %vm1312, %v1343, 0
      %v1350 = vsel %vm1312, %v1344, 0
      %v1353 = vsel %vm1312, %v1345, 0
      %1355 = vmatprep.subr.mxu0 0.0
      %1356 = vmatpush1.msra.mxu0 %v1176
      %1357 = vmatprep.subr.mxu0 0.0
      %1358 = vmatpush1.msra.mxu0 %v1180
      %1359 = vmatprep.subr.mxu0 0.0
      %1360 = vmatpush1.msra.mxu0 %v1186
      %1361 = vmatprep.subr.mxu0 0.0
      %1362 = vmatpush1.msra.mxu0 0.0
      %1363 = vmatprep.subr.mxu0 0.0
      %1364 = vmatpush1.msra.mxu0 0.0
      %1365 = vmatprep.subr.mxu0 0.0
      %1366 = vmatpush1.msra.mxu0 0.0
      %1367 = vmatprep.subr.mxu0 0.0
      %1368 = vmatpush1.msra.mxu0 0.0
      %1369 = vmatprep.subr.mxu0 0.0
      %1370 = vmatpush1.msra.mxu0 0.0
      %1371 = vmatprep.subr.mxu0 0.0
      %1372 = vmatpush1.msra.mxu0 0.0
      %1373 = vmatprep.subr.mxu0 0.0
      %1374 = vmatpush1.msra.mxu0 0.0
      %1375 = vmatprep.subr.mxu0 0.0
      %1376 = vmatpush1.msra.mxu0 0.0
      %1377 = vmatprep.subr.mxu0 0.0
      %1378 = vmatpush1.msra.mxu0 0.0
      %1379 = vmatprep.subr.mxu0 0.0
      %1380 = vmatpush1.msra.mxu0 0.0
      %1381 = vmatprep.subr.mxu0 0.0
      %1382 = vmatpush1.msra.mxu0 0.0
      %1383 = vmatprep.subr.mxu0 0.0
      %1384 = vmatpush1.msra.mxu0 0.0
      %1385 = vmatprep.subr.mxu0 0.0
      %1386 = vmatpush1.msra.mxu0 0.0
      %1387 = vmatprep.subr.mxu0 0.0
      %1388 = vmatpush1.msra.mxu0 0.0
      %1389 = vmatprep.subr.mxu0 0.0
      %1390 = vmatpush1.msra.mxu0 0.0
      %1391 = vmatprep.subr.mxu0 0.0
      %1392 = vmatpush1.msra.mxu0 0.0
      %1393 = vmatprep.subr.mxu0 0.0
      %1394 = vmatpush1.msra.mxu0 0.0
      %1395 = vmatprep.subr.mxu0 0.0
      %1396 = vmatpush1.msra.mxu0 0.0
      %1397 = vmatprep.subr.mxu0 0.0
      %1398 = vmatpush1.msra.mxu0 0.0
      %1399 = vmatprep.subr.mxu0 0.0
      %1400 = vmatpush1.msra.mxu0 0.0
      %1401 = vmatprep.subr.mxu0 0.0
      %1402 = vmatpush1.msra.mxu0 0.0
      %1403 = vmatprep.subr.mxu0 0.0
      %1404 = vmatpush1.msra.mxu0 0.0
      %1405 = vmatprep.subr.mxu0 0.0
      %1406 = vmatpush1.msra.mxu0 0.0
      %1407 = vmatprep.subr.mxu0 0.0
      %1408 = vmatpush1.msra.mxu0 0.0
      %1409 = vmatprep.subr.mxu0 0.0
      %1410 = vmatpush1.msra.mxu0 0.0
      %1411 = vmatprep.subr.mxu0 0.0
      %1412 = vmatpush1.msra.mxu0 0.0
      %1413 = vmatprep.subr.mxu0 0.0
      %1414 = vmatpush1.msra.mxu0 0.0
      %1415 = vmatprep.subr.mxu0 0.0
      %1416 = vmatpush1.msra.mxu0 0.0
      %1417 = vmatprep.subr.mxu0 0.0
      %1418 = vmatpush1.msra.mxu0 0.0
      %1419 = vmatprep.mubr.f32.mxu0 0.0
      %1420 = vmatmul.mubr.f32.gmra.mrb[0].mxu0 %v1347
      %v1421 = vpop.f32.mrb[0].mxu0
      %v1422 = vadd.f32 0.0, %v1421
      %v1423 = vpop.f32.mrb[0].mxu0
      %1424 = vmatprep.mubr.f32.mxu0 0.0
      %1425 = vmatmul.mubr.f32.gmra.mrb[0].mxu0 %v1350
      %v1426 = vpop.f32.mrb[0].mxu0
      %v1427 = vadd.f32 0.0, %v1426
      %v1428 = vpop.f32.mrb[0].mxu0
      %1429 = vmatprep.mubr.f32.mxu0 0.0
      %1430 = vmatmul.mubr.f32.gmra.mrb[0].mxu0 %v1353
      %v1431 = vpop.f32.mrb[0].mxu0
      %v1432 = vadd.f32 0.0, %v1431
      %v1433 = vpop.f32.mrb[0].mxu0
      %1434 = vdwg.mxu0
      %v1435 = vpack.c.bf16 %v1427, %v1422
      %v1436 = vpack.c.bf16 %v1432, %v1432
      %1437 = vrot.lane.b32.xlu0 %v1201, 112
      %v1438 = vpop.permute.xlu0 %1437
      %1439 = vrot.lane.b32.xlu0 %v1202, 112
      %v1440 = vpop.permute.xlu0 %1439
      %1441 = vrot.lane.b32.xlu0 %v1203, 112
      %v1442 = vpop.permute.xlu0 %1441
      %1443 = vrot.lane.b32.xlu0 %v1174, 48
      %v1444 = vpop.permute.xlu0 %1443
      %1445 = vrot.lane.b32.xlu0 %v1178, 48
      %v1446 = vpop.permute.xlu0 %1445
      %1447 = vrot.lane.b32.xlu0 %v1184, 48
      %v1448 = vpop.permute.xlu0 %1447
      %v1449 = vsel %vm1213, %v1438, 0
      %v1451 = vsel %vm1213, %v1440, 0
      %v1453 = vsel %vm1213, %v1442, 0
      %v1455 = vsel %vm1213, %v1444, 0
      %v1457 = vsel %vm1213, %v1446, 0
      %v1459 = vsel %vm1213, %v1448, 0
      %1461 = vmatprep.subr.mxu0 0.0
      %1462 = vmatpush1.xpose.msra.mxu0 %v1455
      %1463 = vmatprep.subr.mxu0 0.0
      %1464 = vmatpush1.xpose.msra.mxu0 %v1457
      %1465 = vmatprep.subr.mxu0 0.0
      %1466 = vmatpush1.xpose.msra.mxu0 %v1459
      %1467 = vmatprep.subr.mxu0 0.0
      %1468 = vmatpush1.xpose.msra.mxu0 0.0
      %1469 = vmatprep.subr.mxu0 0.0
      %1470 = vmatpush1.xpose.msra.mxu0 0.0
      %1471 = vmatprep.subr.mxu0 0.0
      %1472 = vmatpush1.xpose.msra.mxu0 0.0
      %1473 = vmatprep.subr.mxu0 0.0
      %1474 = vmatpush1.xpose.msra.mxu0 0.0
      %1475 = vmatprep.subr.mxu0 0.0
      %1476 = vmatpush1.xpose.msra.mxu0 0.0
      %1477 = vmatprep.subr.mxu0 0.0
      %1478 = vmatpush1.xpose.msra.mxu0 0.0
      %1479 = vmatprep.subr.mxu0 0.0
      %1480 = vmatpush1.xpose.msra.mxu0 0.0
      %1481 = vmatprep.subr.mxu0 0.0
      %1482 = vmatpush1.xpose.msra.mxu0 0.0
      %1483 = vmatprep.subr.mxu0 0.0
      %1484 = vmatpush1.xpose.msra.mxu0 0.0
      %1485 = vmatprep.subr.mxu0 0.0
      %1486 = vmatpush1.xpose.msra.mxu0 0.0
      %1487 = vmatprep.subr.mxu0 0.0
      %1488 = vmatpush1.xpose.msra.mxu0 0.0
      %1489 = vmatprep.subr.mxu0 0.0
      %1490 = vmatpush1.xpose.msra.mxu0 0.0
      %1491 = vmatprep.subr.mxu0 0.0
      %1492 = vmatpush1.xpose.msra.mxu0 0.0
      %1493 = vmatprep.subr.mxu0 0.0
      %1494 = vmatpush1.xpose.msra.mxu0 0.0
      %1495 = vmatprep.subr.mxu0 0.0
      %1496 = vmatpush1.xpose.msra.mxu0 0.0
      %1497 = vmatprep.subr.mxu0 0.0
      %1498 = vmatpush1.xpose.msra.mxu0 0.0
      %1499 = vmatprep.subr.mxu0 0.0
      %1500 = vmatpush1.xpose.msra.mxu0 0.0
      %1501 = vmatprep.subr.mxu0 0.0
      %1502 = vmatpush1.xpose.msra.mxu0 0.0
      %1503 = vmatprep.subr.mxu0 0.0
      %1504 = vmatpush1.xpose.msra.mxu0 0.0
      %1505 = vmatprep.subr.mxu0 0.0
      %1506 = vmatpush1.xpose.msra.mxu0 0.0
      %1507 = vmatprep.subr.mxu0 0.0
      %1508 = vmatpush1.xpose.msra.mxu0 0.0
      %1509 = vmatprep.subr.mxu0 0.0
      %1510 = vmatpush1.xpose.msra.mxu0 0.0
      %1511 = vmatprep.subr.mxu0 0.0
      %1512 = vmatpush1.xpose.msra.mxu0 0.0
      %1513 = vmatprep.subr.mxu0 0.0
      %1514 = vmatpush1.xpose.msra.mxu0 0.0
      %1515 = vmatprep.subr.mxu0 0.0
      %1516 = vmatpush1.xpose.msra.mxu0 0.0
      %1517 = vmatprep.subr.mxu0 0.0
      %1518 = vmatpush1.xpose.msra.mxu0 0.0
      %1519 = vmatprep.subr.mxu0 0.0
      %1520 = vmatpush1.xpose.msra.mxu0 0.0
      %1521 = vmatprep.subr.mxu0 0.0
      %1522 = vmatpush1.xpose.msra.mxu0 0.0
      %1523 = vmatprep.subr.mxu0 0.0
      %1524 = vmatpush1.xpose.msra.mxu0 0.0
      %1525 = vmatprep.mubr.f32.mxu0 0.0
      %1526 = vmatmul.mubr.f32.gmra.mrb[0].mxu0 %v1449
      %v1527 = vpop.f32.mrb[0].mxu0
      %v1528 = vadd.f32 0.0, %v1527
      %v1529 = vpop.f32.mrb[0].mxu0
      %1530 = vmatprep.mubr.f32.mxu0 0.0
      %1531 = vmatmul.mubr.f32.gmra.mrb[0].mxu0 %v1451
      %v1532 = vpop.f32.mrb[0].mxu0
      %v1533 = vadd.f32 0.0, %v1532
      %v1534 = vpop.f32.mrb[0].mxu0
      %1535 = vmatprep.mubr.f32.mxu0 0.0
      %1536 = vmatmul.mubr.f32.gmra.mrb[0].mxu0 %v1453
      %v1537 = vpop.f32.mrb[0].mxu0
      %v1538 = vadd.f32 0.0, %v1537
      %v1539 = vpop.f32.mrb[0].mxu0
      %1540 = vdwg.mxu0
      %v1541 = vsel %vm1200, %v1528, -1e+30
      %v1542 = vsel %vm1200, %v1533, -1e+30
      %v1543 = vsel %vm1200, %v1538, -1e+30
      %v1544 = vsel %vm1312, %v1541, -inf
      %1545 = vmax.xlane.f32.xlu0 %v1544
      %v1546 = vpop.xlane.xlu0 %1545
      %v1547 = vsel %vm1312, %v1542, -inf
      %1548 = vmax.xlane.f32.xlu0 %v1547
      %v1549 = vpop.xlane.xlu0 %1548
      %v1550 = vsel %vm1312, %v1543, -inf
      %1551 = vmax.xlane.f32.xlu0 %v1550
      %v1552 = vpop.xlane.xlu0 %1551
      %v1553 = vsub.f32 %v1541, %v1546
      %v1554 = vsub.f32 %v1542, %v1549
      %v1555 = vsub.f32 %v1543, %v1552
      %v1556 = vmul.f32 %v1553, 1.442695
      %v1557 = vpow.pop %v1556
      %v1558 = vmul.f32 %v1554, 1.442695
      %v1559 = vpow.pop %v1558
      %v1560 = vmul.f32 %v1555, 1.442695
      %v1561 = vpow.pop %v1560
      %v1562 = vsel %vm1312, %v1557, 0.0
      %1563 = vadd.xlane.f32.xlu0 %v1562
      %v1564 = vpop.xlane.xlu0 %1563
      %v1565 = vsel %vm1312, %v1559, 0.0
      %1566 = vadd.xlane.f32.xlu0 %v1565
      %v1567 = vpop.xlane.xlu0 %1566
      %v1568 = vsel %vm1312, %v1561, 0.0
      %1569 = vadd.xlane.f32.xlu0 %v1568
      %v1570 = vpop.xlane.xlu0 %1569
      %v1571 = vrcp.pop %v1564
      %v1572 = vrcp.pop %v1567
      %v1573 = vrcp.pop %v1570
      %v1574 = vmul.f32 %v1557, %v1571
      %v1575 = vmul.f32 %v1559, %v1572
      %v1576 = vmul.f32 %v1561, %v1573
      %1580 = vrot.lane.b32.xlu0 %v1176, 112
      %v1581 = vpop.permute.xlu0 %1580
      %1582 = vrot.lane.b32.xlu0 %v1180, 112
      %v1583 = vpop.permute.xlu0 %1582
      %1584 = vrot.lane.b32.xlu0 %v1186, 112
      %v1585 = vpop.permute.xlu0 %1584
      %v1590 = vsel %vm1312, %v1574, 0
      %v1593 = vsel %vm1312, %v1575, 0
      %v1596 = vsel %vm1312, %v1576, 0
      %1598 = vmatprep.subr.mxu0 0.0
      %1599 = vmatpush1.msra.mxu0 %v1581
      %1600 = vmatprep.subr.mxu0 0.0
      %1601 = vmatpush1.msra.mxu0 %v1583
      %1602 = vmatprep.subr.mxu0 0.0
      %1603 = vmatpush1.msra.mxu0 %v1585
      %1604 = vmatprep.subr.mxu0 0.0
      %1605 = vmatpush1.msra.mxu0 0.0
      %1606 = vmatprep.subr.mxu0 0.0
      %1607 = vmatpush1.msra.mxu0 0.0
      %1608 = vmatprep.subr.mxu0 0.0
      %1609 = vmatpush1.msra.mxu0 0.0
      %1610 = vmatprep.subr.mxu0 0.0
      %1611 = vmatpush1.msra.mxu0 0.0
      %1612 = vmatprep.subr.mxu0 0.0
      %1613 = vmatpush1.msra.mxu0 0.0
      %1614 = vmatprep.subr.mxu0 0.0
      %1615 = vmatpush1.msra.mxu0 0.0
      %1616 = vmatprep.subr.mxu0 0.0
      %1617 = vmatpush1.msra.mxu0 0.0
      %1618 = vmatprep.subr.mxu0 0.0
      %1619 = vmatpush1.msra.mxu0 0.0
      %1620 = vmatprep.subr.mxu0 0.0
      %1621 = vmatpush1.msra.mxu0 0.0
      %1622 = vmatprep.subr.mxu0 0.0
      %1623 = vmatpush1.msra.mxu0 0.0
      %1624 = vmatprep.subr.mxu0 0.0
      %1625 = vmatpush1.msra.mxu0 0.0
      %1626 = vmatprep.subr.mxu0 0.0
      %1627 = vmatpush1.msra.mxu0 0.0
      %1628 = vmatprep.subr.mxu0 0.0
      %1629 = vmatpush1.msra.mxu0 0.0
      %1630 = vmatprep.subr.mxu0 0.0
      %1631 = vmatpush1.msra.mxu0 0.0
      %1632 = vmatprep.subr.mxu0 0.0
      %1633 = vmatpush1.msra.mxu0 0.0
      %1634 = vmatprep.subr.mxu0 0.0
      %1635 = vmatpush1.msra.mxu0 0.0
      %1636 = vmatprep.subr.mxu0 0.0
      %1637 = vmatpush1.msra.mxu0 0.0
      %1638 = vmatprep.subr.mxu0 0.0
      %1639 = vmatpush1.msra.mxu0 0.0
      %1640 = vmatprep.subr.mxu0 0.0
      %1641 = vmatpush1.msra.mxu0 0.0
      %1642 = vmatprep.subr.mxu0 0.0
      %1643 = vmatpush1.msra.mxu0 0.0
      %1644 = vmatprep.subr.mxu0 0.0
      %1645 = vmatpush1.msra.mxu0 0.0
      %1646 = vmatprep.subr.mxu0 0.0
      %1647 = vmatpush1.msra.mxu0 0.0
      %1648 = vmatprep.subr.mxu0 0.0
      %1649 = vmatpush1.msra.mxu0 0.0
      %1650 = vmatprep.subr.mxu0 0.0
      %1651 = vmatpush1.msra.mxu0 0.0
      %1652 = vmatprep.subr.mxu0 0.0
      %1653 = vmatpush1.msra.mxu0 0.0
      %1654 = vmatprep.subr.mxu0 0.0
      %1655 = vmatpush1.msra.mxu0 0.0
      %1656 = vmatprep.subr.mxu0 0.0
      %1657 = vmatpush1.msra.mxu0 0.0
      %1658 = vmatprep.subr.mxu0 0.0
      %1659 = vmatpush1.msra.mxu0 0.0
      %1660 = vmatprep.subr.mxu0 0.0
      %1661 = vmatpush1.msra.mxu0 0.0
      %1662 = vmatprep.mubr.f32.mxu0 0.0
      %1663 = vmatmul.mubr.f32.gmra.mrb[0].mxu0 %v1590
      %v1664 = vpop.f32.mrb[0].mxu0
      %v1665 = vadd.f32 0.0, %v1664
      %v1666 = vpop.f32.mrb[0].mxu0
      %1667 = vmatprep.mubr.f32.mxu0 0.0
      %1668 = vmatmul.mubr.f32.gmra.mrb[0].mxu0 %v1593
      %v1669 = vpop.f32.mrb[0].mxu0
      %v1670 = vadd.f32 0.0, %v1669
      %v1671 = vpop.f32.mrb[0].mxu0
      %1672 = vmatprep.mubr.f32.mxu0 0.0
      %1673 = vmatmul.mubr.f32.gmra.mrb[0].mxu0 %v1596
      %v1674 = vpop.f32.mrb[0].mxu0
      %v1675 = vadd.f32 0.0, %v1674
      %v1676 = vpop.f32.mrb[0].mxu0
      %1677 = vdwg.mxu0
      %v1678 = vpack.c.bf16 %v1670, %v1665
      %v1679 = vpack.c.bf16 %v1675, %v1675
      %v1682 = vunpack.c.l.b16 %v1192
      %v1683 = vunpack.c.l.b16 %v1193
      %v1684 = vpack.c.b16 %v1683, %v1682
      %v1687 = vsel %vm1213, %v1678, 0
      %v1690 = vsel %vm1213, %v1679, 0
      %1692 = vmatprep.subr.bf16.mxu0 0
      %1693 = vmatpush1.bf16.msra.mxu0 %v1684
      %1694 = vmatprep.subr.bf16.mxu0 0
      %1695 = vmatpush1.bf16.msra.mxu0 0
      %1696 = vmatprep.subr.bf16.mxu0 0
      %1697 = vmatpush1.bf16.msra.mxu0 0
      %1698 = vmatprep.subr.bf16.mxu0 0
      %1699 = vmatpush1.bf16.msra.mxu0 0
      %1700 = vmatprep.subr.bf16.mxu0 0
      %1701 = vmatpush1.bf16.msra.mxu0 0
      %1702 = vmatprep.subr.bf16.mxu0 0
      %1703 = vmatpush1.bf16.msra.mxu0 0
      %1704 = vmatprep.subr.bf16.mxu0 0
      %1705 = vmatpush1.bf16.msra.mxu0 0
      %1706 = vmatprep.subr.bf16.mxu0 0
      %1707 = vmatpush1.bf16.msra.mxu0 0
      %1708 = vmatprep.subr.bf16.mxu0 0
      %1709 = vmatpush1.bf16.msra.mxu0 0
      %1710 = vmatprep.subr.bf16.mxu0 0
      %1711 = vmatpush1.bf16.msra.mxu0 0
      %1712 = vmatprep.subr.bf16.mxu0 0
      %1713 = vmatpush1.bf16.msra.mxu0 0
      %1714 = vmatprep.subr.bf16.mxu0 0
      %1715 = vmatpush1.bf16.msra.mxu0 0
      %1716 = vmatprep.subr.bf16.mxu0 0
      %1717 = vmatpush1.bf16.msra.mxu0 0
      %1718 = vmatprep.subr.bf16.mxu0 0
      %1719 = vmatpush1.bf16.msra.mxu0 0
      %1720 = vmatprep.subr.bf16.mxu0 0
      %1721 = vmatpush1.bf16.msra.mxu0 0
      %1722 = vmatprep.subr.bf16.mxu0 0
      %1723 = vmatpush1.bf16.msra.mxu0 0
      %1724 = vmatprep.mubr.bf16.mxu0 0
      %1725 = vmatmul.mubr.bf16.gmra.mrb[0].mxu0 %v1687
      %v1726 = vpop.f32.mrb[0].mxu0
      %v1727 = vadd.f32 0.0, %v1726
      %v1728 = vpop.f32.mrb[0].mxu0
      %v1729 = vpop.f32.mrb[0].mxu0
      %v1730 = vadd.f32 0.0, %v1729
      %v1731 = vpop.f32.mrb[0].mxu0
      %1732 = vmatprep.mubr.bf16.mxu0 0
      %1733 = vmatmul.mubr.bf16.gmra.mrb[0].mxu0 %v1690
      %v1734 = vpop.f32.mrb[0].mxu0
      %v1735 = vadd.f32 0.0, %v1734
      %v1736 = vpop.f32.mrb[0].mxu0
      %v1737 = vpop.f32.mrb[0].mxu0
      %v1738 = vpop.f32.mrb[0].mxu0
      %1739 = vdwg.mxu0
      %v1742 = vunpack.c.l.b16 %v1190
      %v1743 = vunpack.c.l.b16 %v1191
      %v1744 = vpack.c.b16 %v1743, %v1742
      %v1747 = vsel %vm1213, %v1435, 0
      %v1750 = vsel %vm1213, %v1436, 0
      %1752 = vmatprep.subr.bf16.mxu0 0
      %1753 = vmatpush1.bf16.msra.mxu0 %v1744
      %1754 = vmatprep.subr.bf16.mxu0 0
      %1755 = vmatpush1.bf16.msra.mxu0 0
      %1756 = vmatprep.subr.bf16.mxu0 0
      %1757 = vmatpush1.bf16.msra.mxu0 0
      %1758 = vmatprep.subr.bf16.mxu0 0
      %1759 = vmatpush1.bf16.msra.mxu0 0
      %1760 = vmatprep.subr.bf16.mxu0 0
      %1761 = vmatpush1.bf16.msra.mxu0 0
      %1762 = vmatprep.subr.bf16.mxu0 0
      %1763 = vmatpush1.bf16.msra.mxu0 0
      %1764 = vmatprep.subr.bf16.mxu0 0
      %1765 = vmatpush1.bf16.msra.mxu0 0
      %1766 = vmatprep.subr.bf16.mxu0 0
      %1767 = vmatpush1.bf16.msra.mxu0 0
      %1768 = vmatprep.subr.bf16.mxu0 0
      %1769 = vmatpush1.bf16.msra.mxu0 0
      %1770 = vmatprep.subr.bf16.mxu0 0
      %1771 = vmatpush1.bf16.msra.mxu0 0
      %1772 = vmatprep.subr.bf16.mxu0 0
      %1773 = vmatpush1.bf16.msra.mxu0 0
      %1774 = vmatprep.subr.bf16.mxu0 0
      %1775 = vmatpush1.bf16.msra.mxu0 0
      %1776 = vmatprep.subr.bf16.mxu0 0
      %1777 = vmatpush1.bf16.msra.mxu0 0
      %1778 = vmatprep.subr.bf16.mxu0 0
      %1779 = vmatpush1.bf16.msra.mxu0 0
      %1780 = vmatprep.subr.bf16.mxu0 0
      %1781 = vmatpush1.bf16.msra.mxu0 0
      %1782 = vmatprep.subr.bf16.mxu0 0
      %1783 = vmatpush1.bf16.msra.mxu0 0
      %1784 = vmatprep.mubr.bf16.mxu0 0
      %1785 = vmatmul.mubr.bf16.gmra.mrb[0].mxu0 %v1747
      %v1786 = vpop.f32.mrb[0].mxu0
      %v1787 = vadd.f32 %v1727, %v1786
      %v1788 = vpop.f32.mrb[0].mxu0
      %v1789 = vpop.f32.mrb[0].mxu0
      %v1790 = vadd.f32 %v1730, %v1789
      %v1791 = vpop.f32.mrb[0].mxu0
      %1792 = vmatprep.mubr.bf16.mxu0 0
      %1793 = vmatmul.mubr.bf16.gmra.mrb[0].mxu0 %v1750
      %v1794 = vpop.f32.mrb[0].mxu0
      %v1795 = vadd.f32 %v1735, %v1794
      %v1796 = vpop.f32.mrb[0].mxu0
      %v1797 = vpop.f32.mrb[0].mxu0
      %v1798 = vpop.f32.mrb[0].mxu0
      %1799 = vdwg.mxu0
      %1800 = vrot.lane.b32.xlu0 %v1201, 96
      %v1801 = vpop.permute.xlu0 %1800
      %1802 = vrot.lane.b32.xlu0 %v1202, 96
      %v1803 = vpop.permute.xlu0 %1802
      %1804 = vrot.lane.b32.xlu0 %v1203, 96
      %v1805 = vpop.permute.xlu0 %1804
      %1806 = vrot.lane.b32.xlu0 %v1174, 32
      %v1807 = vpop.permute.xlu0 %1806
      %1808 = vrot.lane.b32.xlu0 %v1178, 32
      %v1809 = vpop.permute.xlu0 %1808
      %1810 = vrot.lane.b32.xlu0 %v1184, 32
      %v1811 = vpop.permute.xlu0 %1810
      %v1812 = vsel %vm1213, %v1801, 0
      %v1814 = vsel %vm1213, %v1803, 0
      %v1816 = vsel %vm1213, %v1805, 0
      %v1818 = vsel %vm1213, %v1807, 0
      %v1820 = vsel %vm1213, %v1809, 0
      %v1822 = vsel %vm1213, %v1811, 0
      %1824 = vmatprep.subr.mxu0 0.0
      %1825 = vmatpush1.xpose.msra.mxu0 %v1818
      %1826 = vmatprep.subr.mxu0 0.0
      %1827 = vmatpush1.xpose.msra.mxu0 %v1820
      %1828 = vmatprep.subr.mxu0 0.0
      %1829 = vmatpush1.xpose.msra.mxu0 %v1822
      %1830 = vmatprep.subr.mxu0 0.0
      %1831 = vmatpush1.xpose.msra.mxu0 0.0
      %1832 = vmatprep.subr.mxu0 0.0
      %1833 = vmatpush1.xpose.msra.mxu0 0.0
      %1834 = vmatprep.subr.mxu0 0.0
      %1835 = vmatpush1.xpose.msra.mxu0 0.0
      %1836 = vmatprep.subr.mxu0 0.0
      %1837 = vmatpush1.xpose.msra.mxu0 0.0
      %1838 = vmatprep.subr.mxu0 0.0
      %1839 = vmatpush1.xpose.msra.mxu0 0.0
      %1840 = vmatprep.subr.mxu0 0.0
      %1841 = vmatpush1.xpose.msra.mxu0 0.0
      %1842 = vmatprep.subr.mxu0 0.0
      %1843 = vmatpush1.xpose.msra.mxu0 0.0
      %1844 = vmatprep.subr.mxu0 0.0
      %1845 = vmatpush1.xpose.msra.mxu0 0.0
      %1846 = vmatprep.subr.mxu0 0.0
      %1847 = vmatpush1.xpose.msra.mxu0 0.0
      %1848 = vmatprep.subr.mxu0 0.0
      %1849 = vmatpush1.xpose.msra.mxu0 0.0
      %1850 = vmatprep.subr.mxu0 0.0
      %1851 = vmatpush1.xpose.msra.mxu0 0.0
      %1852 = vmatprep.subr.mxu0 0.0
      %1853 = vmatpush1.xpose.msra.mxu0 0.0
      %1854 = vmatprep.subr.mxu0 0.0
      %1855 = vmatpush1.xpose.msra.mxu0 0.0
      %1856 = vmatprep.subr.mxu0 0.0
      %1857 = vmatpush1.xpose.msra.mxu0 0.0
      %1858 = vmatprep.subr.mxu0 0.0
      %1859 = vmatpush1.xpose.msra.mxu0 0.0
      %1860 = vmatprep.subr.mxu0 0.0
      %1861 = vmatpush1.xpose.msra.mxu0 0.0
      %1862 = vmatprep.subr.mxu0 0.0
      %1863 = vmatpush1.xpose.msra.mxu0 0.0
      %1864 = vmatprep.subr.mxu0 0.0
      %1865 = vmatpush1.xpose.msra.mxu0 0.0
      %1866 = vmatprep.subr.mxu0 0.0
      %1867 = vmatpush1.xpose.msra.mxu0 0.0
      %1868 = vmatprep.subr.mxu0 0.0
      %1869 = vmatpush1.xpose.msra.mxu0 0.0
      %1870 = vmatprep.subr.mxu0 0.0
      %1871 = vmatpush1.xpose.msra.mxu0 0.0
      %1872 = vmatprep.subr.mxu0 0.0
      %1873 = vmatpush1.xpose.msra.mxu0 0.0
      %1874 = vmatprep.subr.mxu0 0.0
      %1875 = vmatpush1.xpose.msra.mxu0 0.0
      %1876 = vmatprep.subr.mxu0 0.0
      %1877 = vmatpush1.xpose.msra.mxu0 0.0
      %1878 = vmatprep.subr.mxu0 0.0
      %1879 = vmatpush1.xpose.msra.mxu0 0.0
      %1880 = vmatprep.subr.mxu0 0.0
      %1881 = vmatpush1.xpose.msra.mxu0 0.0
      %1882 = vmatprep.subr.mxu0 0.0
      %1883 = vmatpush1.xpose.msra.mxu0 0.0
      %1884 = vmatprep.subr.mxu0 0.0
      %1885 = vmatpush1.xpose.msra.mxu0 0.0
      %1886 = vmatprep.subr.mxu0 0.0
      %1887 = vmatpush1.xpose.msra.mxu0 0.0
      %1888 = vmatprep.mubr.f32.mxu0 0.0
      %1889 = vmatmul.mubr.f32.gmra.mrb[0].mxu0 %v1812
      %v1890 = vpop.f32.mrb[0].mxu0
      %v1891 = vadd.f32 0.0, %v1890
      %v1892 = vpop.f32.mrb[0].mxu0
      %1893 = vmatprep.mubr.f32.mxu0 0.0
      %1894 = vmatmul.mubr.f32.gmra.mrb[0].mxu0 %v1814
      %v1895 = vpop.f32.mrb[0].mxu0
      %v1896 = vadd.f32 0.0, %v1895
      %v1897 = vpop.f32.mrb[0].mxu0
      %1898 = vmatprep.mubr.f32.mxu0 0.0
      %1899 = vmatmul.mubr.f32.gmra.mrb[0].mxu0 %v1816
      %v1900 = vpop.f32.mrb[0].mxu0
      %v1901 = vadd.f32 0.0, %v1900
      %v1902 = vpop.f32.mrb[0].mxu0
      %1903 = vdwg.mxu0
      %v1904 = vsel %vm1200, %v1891, -1e+30
      %v1905 = vsel %vm1200, %v1896, -1e+30
      %v1906 = vsel %vm1200, %v1901, -1e+30
      %v1907 = vsel %vm1312, %v1904, -inf
      %1908 = vmax.xlane.f32.xlu0 %v1907
      %v1909 = vpop.xlane.xlu0 %1908
      %v1910 = vsel %vm1312, %v1905, -inf
      %1911 = vmax.xlane.f32.xlu0 %v1910
      %v1912 = vpop.xlane.xlu0 %1911
      %v1913 = vsel %vm1312, %v1906, -inf
      %1914 = vmax.xlane.f32.xlu0 %v1913
      %v1915 = vpop.xlane.xlu0 %1914
      %v1916 = vsub.f32 %v1904, %v1909
      %v1917 = vsub.f32 %v1905, %v1912
      %v1918 = vsub.f32 %v1906, %v1915
      %v1919 = vmul.f32 %v1916, 1.442695
      %v1920 = vpow.pop %v1919
      %v1921 = vmul.f32 %v1917, 1.442695
      %v1922 = vpow.pop %v1921
      %v1923 = vmul.f32 %v1918, 1.442695
      %v1924 = vpow.pop %v1923
      %v1925 = vsel %vm1312, %v1920, 0.0
      %1926 = vadd.xlane.f32.xlu0 %v1925
      %v1927 = vpop.xlane.xlu0 %1926
      %v1928 = vsel %vm1312, %v1922, 0.0
      %1929 = vadd.xlane.f32.xlu0 %v1928
      %v1930 = vpop.xlane.xlu0 %1929
      %v1931 = vsel %vm1312, %v1924, 0.0
      %1932 = vadd.xlane.f32.xlu0 %v1931
      %v1933 = vpop.xlane.xlu0 %1932
      %v1934 = vrcp.pop %v1927
      %v1935 = vrcp.pop %v1930
      %v1936 = vrcp.pop %v1933
      %v1937 = vmul.f32 %v1920, %v1934
      %v1938 = vmul.f32 %v1922, %v1935
      %v1939 = vmul.f32 %v1924, %v1936
      %1940 = vrot.lane.b32.xlu0 %v1176, 96
      %v1941 = vpop.permute.xlu0 %1940
      %1942 = vrot.lane.b32.xlu0 %v1180, 96
      %v1943 = vpop.permute.xlu0 %1942
      %1944 = vrot.lane.b32.xlu0 %v1186, 96
      %v1945 = vpop.permute.xlu0 %1944
      %v1950 = vsel %vm1312, %v1937, 0
      %v1953 = vsel %vm1312, %v1938, 0
      %v1956 = vsel %vm1312, %v1939, 0
      %1958 = vmatprep.subr.mxu0 0.0
      %1959 = vmatpush1.msra.mxu0 %v1941
      %1960 = vmatprep.subr.mxu0 0.0
      %1961 = vmatpush1.msra.mxu0 %v1943
      %1962 = vmatprep.subr.mxu0 0.0
      %1963 = vmatpush1.msra.mxu0 %v1945
      %1964 = vmatprep.subr.mxu0 0.0
      %1965 = vmatpush1.msra.mxu0 0.0
      %1966 = vmatprep.subr.mxu0 0.0
      %1967 = vmatpush1.msra.mxu0 0.0
      %1968 = vmatprep.subr.mxu0 0.0
      %1969 = vmatpush1.msra.mxu0 0.0
      %1970 = vmatprep.subr.mxu0 0.0
      %1971 = vmatpush1.msra.mxu0 0.0
      %1972 = vmatprep.subr.mxu0 0.0
      %1973 = vmatpush1.msra.mxu0 0.0
      %1974 = vmatprep.subr.mxu0 0.0
      %1975 = vmatpush1.msra.mxu0 0.0
      %1976 = vmatprep.subr.mxu0 0.0
      %1977 = vmatpush1.msra.mxu0 0.0
      %1978 = vmatprep.subr.mxu0 0.0
      %1979 = vmatpush1.msra.mxu0 0.0
      %1980 = vmatprep.subr.mxu0 0.0
      %1981 = vmatpush1.msra.mxu0 0.0
      %1982 = vmatprep.subr.mxu0 0.0
      %1983 = vmatpush1.msra.mxu0 0.0
      %1984 = vmatprep.subr.mxu0 0.0
      %1985 = vmatpush1.msra.mxu0 0.0
      %1986 = vmatprep.subr.mxu0 0.0
      %1987 = vmatpush1.msra.mxu0 0.0
      %1988 = vmatprep.subr.mxu0 0.0
      %1989 = vmatpush1.msra.mxu0 0.0
      %1990 = vmatprep.subr.mxu0 0.0
      %1991 = vmatpush1.msra.mxu0 0.0
      %1992 = vmatprep.subr.mxu0 0.0
      %1993 = vmatpush1.msra.mxu0 0.0
      %1994 = vmatprep.subr.mxu0 0.0
      %1995 = vmatpush1.msra.mxu0 0.0
      %1996 = vmatprep.subr.mxu0 0.0
      %1997 = vmatpush1.msra.mxu0 0.0
      %1998 = vmatprep.subr.mxu0 0.0
      %1999 = vmatpush1.msra.mxu0 0.0
      %2000 = vmatprep.subr.mxu0 0.0
      %2001 = vmatpush1.msra.mxu0 0.0
      %2002 = vmatprep.subr.mxu0 0.0
      %2003 = vmatpush1.msra.mxu0 0.0
      %2004 = vmatprep.subr.mxu0 0.0
      %2005 = vmatpush1.msra.mxu0 0.0
      %2006 = vmatprep.subr.mxu0 0.0
      %2007 = vmatpush1.msra.mxu0 0.0
      %2008 = vmatprep.subr.mxu0 0.0
      %2009 = vmatpush1.msra.mxu0 0.0
      %2010 = vmatprep.subr.mxu0 0.0
      %2011 = vmatpush1.msra.mxu0 0.0
      %2012 = vmatprep.subr.mxu0 0.0
      %2013 = vmatpush1.msra.mxu0 0.0
      %2014 = vmatprep.subr.mxu0 0.0
      %2015 = vmatpush1.msra.mxu0 0.0
      %2016 = vmatprep.subr.mxu0 0.0
      %2017 = vmatpush1.msra.mxu0 0.0
      %2018 = vmatprep.subr.mxu0 0.0
      %2019 = vmatpush1.msra.mxu0 0.0
      %2020 = vmatprep.subr.mxu0 0.0
      %2021 = vmatpush1.msra.mxu0 0.0
      %2022 = vmatprep.mubr.f32.mxu0 0.0
      %2023 = vmatmul.mubr.f32.gmra.mrb[0].mxu0 %v1950
      %v2024 = vpop.f32.mrb[0].mxu0
      %v2025 = vadd.f32 0.0, %v2024
      %v2026 = vpop.f32.mrb[0].mxu0
      %2027 = vmatprep.mubr.f32.mxu0 0.0
      %2028 = vmatmul.mubr.f32.gmra.mrb[0].mxu0 %v1953
      %v2029 = vpop.f32.mrb[0].mxu0
      %v2030 = vadd.f32 0.0, %v2029
      %v2031 = vpop.f32.mrb[0].mxu0
      %2032 = vmatprep.mubr.f32.mxu0 0.0
      %2033 = vmatmul.mubr.f32.gmra.mrb[0].mxu0 %v1956
      %v2034 = vpop.f32.mrb[0].mxu0
      %v2035 = vadd.f32 0.0, %v2034
      %v2036 = vpop.f32.mrb[0].mxu0
      %2037 = vdwg.mxu0
      %v2038 = vpack.c.bf16 %v2030, %v2025
      %v2039 = vpack.c.bf16 %v2035, %v2035
      %v2042 = vunpack.c.l.b16 %v1194
      %v2043 = vunpack.c.l.b16 %v1195
      %v2044 = vpack.c.b16 %v2043, %v2042
      %v2047 = vsel %vm1213, %v2038, 0
      %v2050 = vsel %vm1213, %v2039, 0
      %2052 = vmatprep.subr.bf16.mxu0 0
      %2053 = vmatpush1.bf16.msra.mxu0 %v2044
      %2054 = vmatprep.subr.bf16.mxu0 0
      %2055 = vmatpush1.bf16.msra.mxu0 0
      %2056 = vmatprep.subr.bf16.mxu0 0
      %2057 = vmatpush1.bf16.msra.mxu0 0
      %2058 = vmatprep.subr.bf16.mxu0 0
      %2059 = vmatpush1.bf16.msra.mxu0 0
      %2060 = vmatprep.subr.bf16.mxu0 0
      %2061 = vmatpush1.bf16.msra.mxu0 0
      %2062 = vmatprep.subr.bf16.mxu0 0
      %2063 = vmatpush1.bf16.msra.mxu0 0
      %2064 = vmatprep.subr.bf16.mxu0 0
      %2065 = vmatpush1.bf16.msra.mxu0 0
      %2066 = vmatprep.subr.bf16.mxu0 0
      %2067 = vmatpush1.bf16.msra.mxu0 0
      %2068 = vmatprep.subr.bf16.mxu0 0
      %2069 = vmatpush1.bf16.msra.mxu0 0
      %2070 = vmatprep.subr.bf16.mxu0 0
      %2071 = vmatpush1.bf16.msra.mxu0 0
      %2072 = vmatprep.subr.bf16.mxu0 0
      %2073 = vmatpush1.bf16.msra.mxu0 0
      %2074 = vmatprep.subr.bf16.mxu0 0
      %2075 = vmatpush1.bf16.msra.mxu0 0
      %2076 = vmatprep.subr.bf16.mxu0 0
      %2077 = vmatpush1.bf16.msra.mxu0 0
      %2078 = vmatprep.subr.bf16.mxu0 0
      %2079 = vmatpush1.bf16.msra.mxu0 0
      %2080 = vmatprep.subr.bf16.mxu0 0
      %2081 = vmatpush1.bf16.msra.mxu0 0
      %2082 = vmatprep.subr.bf16.mxu0 0
      %2083 = vmatpush1.bf16.msra.mxu0 0
      %2084 = vmatprep.mubr.bf16.mxu0 0
      %2085 = vmatmul.mubr.bf16.gmra.mrb[0].mxu0 %v2047
      %v2086 = vpop.f32.mrb[0].mxu0
      %v2087 = vadd.f32 0.0, %v2086
      %v2088 = vpop.f32.mrb[0].mxu0
      %v2089 = vpop.f32.mrb[0].mxu0
      %v2090 = vadd.f32 0.0, %v2089
      %v2091 = vpop.f32.mrb[0].mxu0
      %2092 = vmatprep.mubr.bf16.mxu0 0
      %2093 = vmatmul.mubr.bf16.gmra.mrb[0].mxu0 %v2050
      %v2094 = vpop.f32.mrb[0].mxu0
      %v2095 = vadd.f32 0.0, %v2094
      %v2096 = vpop.f32.mrb[0].mxu0
      %v2097 = vpop.f32.mrb[0].mxu0
      %v2098 = vpop.f32.mrb[0].mxu0
      %2099 = vdwg.mxu0
      %v2100 = vadd.f32 %v1787, %v2087
      %v2101 = vadd.f32 %v1790, %v2090
      %v2102 = vadd.f32 %v1795, %v2095
      %2103 = vrot.lane.b32.xlu0 %v1201, 80
      %v2104 = vpop.permute.xlu0 %2103
      %2105 = vrot.lane.b32.xlu0 %v1202, 80
      %v2106 = vpop.permute.xlu0 %2105
      %2107 = vrot.lane.b32.xlu0 %v1203, 80
      %v2108 = vpop.permute.xlu0 %2107
      %2109 = vrot.lane.b32.xlu0 %v1174, 16
      %v2110 = vpop.permute.xlu0 %2109
      %2111 = vrot.lane.b32.xlu0 %v1178, 16
      %v2112 = vpop.permute.xlu0 %2111
      %2113 = vrot.lane.b32.xlu0 %v1184, 16
      %v2114 = vpop.permute.xlu0 %2113
      %v2115 = vsel %vm1213, %v2104, 0
      %v2117 = vsel %vm1213, %v2106, 0
      %v2119 = vsel %vm1213, %v2108, 0
      %v2121 = vsel %vm1213, %v2110, 0
      %v2123 = vsel %vm1213, %v2112, 0
      %v2125 = vsel %vm1213, %v2114, 0
      %2127 = vmatprep.subr.mxu0 0.0
      %2128 = vmatpush1.xpose.msra.mxu0 %v2121
      %2129 = vmatprep.subr.mxu0 0.0
      %2130 = vmatpush1.xpose.msra.mxu0 %v2123
      %2131 = vmatprep.subr.mxu0 0.0
      %2132 = vmatpush1.xpose.msra.mxu0 %v2125
      %2133 = vmatprep.subr.mxu0 0.0
      %2134 = vmatpush1.xpose.msra.mxu0 0.0
      %2135 = vmatprep.subr.mxu0 0.0
      %2136 = vmatpush1.xpose.msra.mxu0 0.0
      %2137 = vmatprep.subr.mxu0 0.0
      %2138 = vmatpush1.xpose.msra.mxu0 0.0
      %2139 = vmatprep.subr.mxu0 0.0
      %2140 = vmatpush1.xpose.msra.mxu0 0.0
      %2141 = vmatprep.subr.mxu0 0.0
      %2142 = vmatpush1.xpose.msra.mxu0 0.0
      %2143 = vmatprep.subr.mxu0 0.0
      %2144 = vmatpush1.xpose.msra.mxu0 0.0
      %2145 = vmatprep.subr.mxu0 0.0
      %2146 = vmatpush1.xpose.msra.mxu0 0.0
      %2147 = vmatprep.subr.mxu0 0.0
      %2148 = vmatpush1.xpose.msra.mxu0 0.0
      %2149 = vmatprep.subr.mxu0 0.0
      %2150 = vmatpush1.xpose.msra.mxu0 0.0
      %2151 = vmatprep.subr.mxu0 0.0
      %2152 = vmatpush1.xpose.msra.mxu0 0.0
      %2153 = vmatprep.subr.mxu0 0.0
      %2154 = vmatpush1.xpose.msra.mxu0 0.0
      %2155 = vmatprep.subr.mxu0 0.0
      %2156 = vmatpush1.xpose.msra.mxu0 0.0
      %2157 = vmatprep.subr.mxu0 0.0
      %2158 = vmatpush1.xpose.msra.mxu0 0.0
      %2159 = vmatprep.subr.mxu0 0.0
      %2160 = vmatpush1.xpose.msra.mxu0 0.0
      %2161 = vmatprep.subr.mxu0 0.0
      %2162 = vmatpush1.xpose.msra.mxu0 0.0
      %2163 = vmatprep.subr.mxu0 0.0
      %2164 = vmatpush1.xpose.msra.mxu0 0.0
      %2165 = vmatprep.subr.mxu0 0.0
      %2166 = vmatpush1.xpose.msra.mxu0 0.0
      %2167 = vmatprep.subr.mxu0 0.0
      %2168 = vmatpush1.xpose.msra.mxu0 0.0
      %2169 = vmatprep.subr.mxu0 0.0
      %2170 = vmatpush1.xpose.msra.mxu0 0.0
      %2171 = vmatprep.subr.mxu0 0.0
      %2172 = vmatpush1.xpose.msra.mxu0 0.0
      %2173 = vmatprep.subr.mxu0 0.0
      %2174 = vmatpush1.xpose.msra.mxu0 0.0
      %2175 = vmatprep.subr.mxu0 0.0
      %2176 = vmatpush1.xpose.msra.mxu0 0.0
      %2177 = vmatprep.subr.mxu0 0.0
      %2178 = vmatpush1.xpose.msra.mxu0 0.0
      %2179 = vmatprep.subr.mxu0 0.0
      %2180 = vmatpush1.xpose.msra.mxu0 0.0
      %2181 = vmatprep.subr.mxu0 0.0
      %2182 = vmatpush1.xpose.msra.mxu0 0.0
      %2183 = vmatprep.subr.mxu0 0.0
      %2184 = vmatpush1.xpose.msra.mxu0 0.0
      %2185 = vmatprep.subr.mxu0 0.0
      %2186 = vmatpush1.xpose.msra.mxu0 0.0
      %2187 = vmatprep.subr.mxu0 0.0
      %2188 = vmatpush1.xpose.msra.mxu0 0.0
      %2189 = vmatprep.subr.mxu0 0.0
      %2190 = vmatpush1.xpose.msra.mxu0 0.0
      %2191 = vmatprep.mubr.f32.mxu0 0.0
      %2192 = vmatmul.mubr.f32.gmra.mrb[0].mxu0 %v2115
      %v2193 = vpop.f32.mrb[0].mxu0
      %v2194 = vadd.f32 0.0, %v2193
      %v2195 = vpop.f32.mrb[0].mxu0
      %2196 = vmatprep.mubr.f32.mxu0 0.0
      %2197 = vmatmul.mubr.f32.gmra.mrb[0].mxu0 %v2117
      %v2198 = vpop.f32.mrb[0].mxu0
      %v2199 = vadd.f32 0.0, %v2198
      %v2200 = vpop.f32.mrb[0].mxu0
      %2201 = vmatprep.mubr.f32.mxu0 0.0
      %2202 = vmatmul.mubr.f32.gmra.mrb[0].mxu0 %v2119
      %v2203 = vpop.f32.mrb[0].mxu0
      %v2204 = vadd.f32 0.0, %v2203
      %v2205 = vpop.f32.mrb[0].mxu0
      %2206 = vdwg.mxu0
      %v2207 = vsel %vm1200, %v2194, -1e+30
      %v2208 = vsel %vm1200, %v2199, -1e+30
      %v2209 = vsel %vm1200, %v2204, -1e+30
      %v2210 = vsel %vm1312, %v2207, -inf
      %2211 = vmax.xlane.f32.xlu0 %v2210
      %v2212 = vpop.xlane.xlu0 %2211
      %v2213 = vsel %vm1312, %v2208, -inf
      %2214 = vmax.xlane.f32.xlu0 %v2213
      %v2215 = vpop.xlane.xlu0 %2214
      %v2216 = vsel %vm1312, %v2209, -inf
      %2217 = vmax.xlane.f32.xlu0 %v2216
      %v2218 = vpop.xlane.xlu0 %2217
      %v2219 = vsub.f32 %v2207, %v2212
      %v2220 = vsub.f32 %v2208, %v2215
      %v2221 = vsub.f32 %v2209, %v2218
      %v2222 = vmul.f32 %v2219, 1.442695
      %v2223 = vpow.pop %v2222
      %v2224 = vmul.f32 %v2220, 1.442695
      %v2225 = vpow.pop %v2224
      %v2226 = vmul.f32 %v2221, 1.442695
      %v2227 = vpow.pop %v2226
      %v2228 = vsel %vm1312, %v2223, 0.0
      %2229 = vadd.xlane.f32.xlu0 %v2228
      %v2230 = vpop.xlane.xlu0 %2229
      %v2231 = vsel %vm1312, %v2225, 0.0
      %2232 = vadd.xlane.f32.xlu0 %v2231
      %v2233 = vpop.xlane.xlu0 %2232
      %v2234 = vsel %vm1312, %v2227, 0.0
      %2235 = vadd.xlane.f32.xlu0 %v2234
      %v2236 = vpop.xlane.xlu0 %2235
      %v2237 = vrcp.pop %v2230
      %v2238 = vrcp.pop %v2233
      %v2239 = vrcp.pop %v2236
      %v2240 = vmul.f32 %v2223, %v2237
      %v2241 = vmul.f32 %v2225, %v2238
      %v2242 = vmul.f32 %v2227, %v2239
      %2243 = vrot.lane.b32.xlu0 %v1176, 80
      %v2244 = vpop.permute.xlu0 %2243
      %2245 = vrot.lane.b32.xlu0 %v1180, 80
      %v2246 = vpop.permute.xlu0 %2245
      %2247 = vrot.lane.b32.xlu0 %v1186, 80
      %v2248 = vpop.permute.xlu0 %2247
      %v2253 = vsel %vm1312, %v2240, 0
      %v2256 = vsel %vm1312, %v2241, 0
      %v2259 = vsel %vm1312, %v2242, 0
      %2261 = vmatprep.subr.mxu0 0.0
      %2262 = vmatpush1.msra.mxu0 %v2244
      %2263 = vmatprep.subr.mxu0 0.0
      %2264 = vmatpush1.msra.mxu0 %v2246
      %2265 = vmatprep.subr.mxu0 0.0
      %2266 = vmatpush1.msra.mxu0 %v2248
      %2267 = vmatprep.subr.mxu0 0.0
      %2268 = vmatpush1.msra.mxu0 0.0
      %2269 = vmatprep.subr.mxu0 0.0
      %2270 = vmatpush1.msra.mxu0 0.0
      %2271 = vmatprep.subr.mxu0 0.0
      %2272 = vmatpush1.msra.mxu0 0.0
      %2273 = vmatprep.subr.mxu0 0.0
      %2274 = vmatpush1.msra.mxu0 0.0
      %2275 = vmatprep.subr.mxu0 0.0
      %2276 = vmatpush1.msra.mxu0 0.0
      %2277 = vmatprep.subr.mxu0 0.0
      %2278 = vmatpush1.msra.mxu0 0.0
      %2279 = vmatprep.subr.mxu0 0.0
      %2280 = vmatpush1.msra.mxu0 0.0
      %2281 = vmatprep.subr.mxu0 0.0
      %2282 = vmatpush1.msra.mxu0 0.0
      %2283 = vmatprep.subr.mxu0 0.0
      %2284 = vmatpush1.msra.mxu0 0.0
      %2285 = vmatprep.subr.mxu0 0.0
      %2286 = vmatpush1.msra.mxu0 0.0
      %2287 = vmatprep.subr.mxu0 0.0
      %2288 = vmatpush1.msra.mxu0 0.0
      %2289 = vmatprep.subr.mxu0 0.0
      %2290 = vmatpush1.msra.mxu0 0.0
      %2291 = vmatprep.subr.mxu0 0.0
      %2292 = vmatpush1.msra.mxu0 0.0
      %2293 = vmatprep.subr.mxu0 0.0
      %2294 = vmatpush1.msra.mxu0 0.0
      %2295 = vmatprep.subr.mxu0 0.0
      %2296 = vmatpush1.msra.mxu0 0.0
      %2297 = vmatprep.subr.mxu0 0.0
      %2298 = vmatpush1.msra.mxu0 0.0
      %2299 = vmatprep.subr.mxu0 0.0
      %2300 = vmatpush1.msra.mxu0 0.0
      %2301 = vmatprep.subr.mxu0 0.0
      %2302 = vmatpush1.msra.mxu0 0.0
      %2303 = vmatprep.subr.mxu0 0.0
      %2304 = vmatpush1.msra.mxu0 0.0
      %2305 = vmatprep.subr.mxu0 0.0
      %2306 = vmatpush1.msra.mxu0 0.0
      %2307 = vmatprep.subr.mxu0 0.0
      %2308 = vmatpush1.msra.mxu0 0.0
      %2309 = vmatprep.subr.mxu0 0.0
      %2310 = vmatpush1.msra.mxu0 0.0
      %2311 = vmatprep.subr.mxu0 0.0
      %2312 = vmatpush1.msra.mxu0 0.0
      %2313 = vmatprep.subr.mxu0 0.0
      %2314 = vmatpush1.msra.mxu0 0.0
      %2315 = vmatprep.subr.mxu0 0.0
      %2316 = vmatpush1.msra.mxu0 0.0
      %2317 = vmatprep.subr.mxu0 0.0
      %2318 = vmatpush1.msra.mxu0 0.0
      %2319 = vmatprep.subr.mxu0 0.0
      %2320 = vmatpush1.msra.mxu0 0.0
      %2321 = vmatprep.subr.mxu0 0.0
      %2322 = vmatpush1.msra.mxu0 0.0
      %2323 = vmatprep.subr.mxu0 0.0
      %2324 = vmatpush1.msra.mxu0 0.0
      %2325 = vmatprep.mubr.f32.mxu0 0.0
      %2326 = vmatmul.mubr.f32.gmra.mrb[0].mxu0 %v2253
      %v2327 = vpop.f32.mrb[0].mxu0
      %v2328 = vadd.f32 0.0, %v2327
      %v2329 = vpop.f32.mrb[0].mxu0
      %2330 = vmatprep.mubr.f32.mxu0 0.0
      %2331 = vmatmul.mubr.f32.gmra.mrb[0].mxu0 %v2256
      %v2332 = vpop.f32.mrb[0].mxu0
      %v2333 = vadd.f32 0.0, %v2332
      %v2334 = vpop.f32.mrb[0].mxu0
      %2335 = vmatprep.mubr.f32.mxu0 0.0
      %2336 = vmatmul.mubr.f32.gmra.mrb[0].mxu0 %v2259
      %v2337 = vpop.f32.mrb[0].mxu0
      %v2338 = vadd.f32 0.0, %v2337
      %v2339 = vpop.f32.mrb[0].mxu0
      %2340 = vdwg.mxu0
      %v2341 = vpack.c.bf16 %v2333, %v2328
      %v2342 = vpack.c.bf16 %v2338, %v2338
      %v2345 = vunpack.c.l.b16 %v1196
      %v2346 = vunpack.c.l.b16 %v1197
      %v2347 = vpack.c.b16 %v2346, %v2345
      %v2350 = vsel %vm1213, %v2341, 0
      %v2353 = vsel %vm1213, %v2342, 0
      %2355 = vmatprep.subr.bf16.mxu0 0
      %2356 = vmatpush1.bf16.msra.mxu0 %v2347
      %2357 = vmatprep.subr.bf16.mxu0 0
      %2358 = vmatpush1.bf16.msra.mxu0 0
      %2359 = vmatprep.subr.bf16.mxu0 0
      %2360 = vmatpush1.bf16.msra.mxu0 0
      %2361 = vmatprep.subr.bf16.mxu0 0
      %2362 = vmatpush1.bf16.msra.mxu0 0
      %2363 = vmatprep.subr.bf16.mxu0 0
      %2364 = vmatpush1.bf16.msra.mxu0 0
      %2365 = vmatprep.subr.bf16.mxu0 0
      %2366 = vmatpush1.bf16.msra.mxu0 0
      %2367 = vmatprep.subr.bf16.mxu0 0
      %2368 = vmatpush1.bf16.msra.mxu0 0
      %2369 = vmatprep.subr.bf16.mxu0 0
      %2370 = vmatpush1.bf16.msra.mxu0 0
      %2371 = vmatprep.subr.bf16.mxu0 0
      %2372 = vmatpush1.bf16.msra.mxu0 0
      %2373 = vmatprep.subr.bf16.mxu0 0
      %2374 = vmatpush1.bf16.msra.mxu0 0
      %2375 = vmatprep.subr.bf16.mxu0 0
      %2376 = vmatpush1.bf16.msra.mxu0 0
      %2377 = vmatprep.subr.bf16.mxu0 0
      %2378 = vmatpush1.bf16.msra.mxu0 0
      %2379 = vmatprep.subr.bf16.mxu0 0
      %2380 = vmatpush1.bf16.msra.mxu0 0
      %2381 = vmatprep.subr.bf16.mxu0 0
      %2382 = vmatpush1.bf16.msra.mxu0 0
      %2383 = vmatprep.subr.bf16.mxu0 0
      %2384 = vmatpush1.bf16.msra.mxu0 0
      %2385 = vmatprep.subr.bf16.mxu0 0
      %2386 = vmatpush1.bf16.msra.mxu0 0
      %2387 = vmatprep.mubr.bf16.mxu0 0
      %2388 = vmatmul.mubr.bf16.gmra.mrb[0].mxu0 %v2350
      %v2389 = vpop.f32.mrb[0].mxu0
      %v2390 = vadd.f32 0.0, %v2389
      %v2391 = vpop.f32.mrb[0].mxu0
      %v2392 = vpop.f32.mrb[0].mxu0
      %v2393 = vadd.f32 0.0, %v2392
      %v2394 = vpop.f32.mrb[0].mxu0
      %2395 = vmatprep.mubr.bf16.mxu0 0
      %2396 = vmatmul.mubr.bf16.gmra.mrb[0].mxu0 %v2353
      %v2397 = vpop.f32.mrb[0].mxu0
      %v2398 = vadd.f32 0.0, %v2397
      %v2399 = vpop.f32.mrb[0].mxu0
      %v2400 = vpop.f32.mrb[0].mxu0
      %v2401 = vpop.f32.mrb[0].mxu0
      %2402 = vdwg.mxu0
      %v2403 = vadd.f32 %v2100, %v2390
      %v2404 = vadd.f32 %v2101, %v2393
      %v2405 = vadd.f32 %v2102, %v2398
      %v2406 = vadd.f32 %v1007, %v2403
      %v2407 = vadd.f32 %v1008, %v2404
      %v2408 = vadd.f32 %v1009, %v2405
      %v2409 = vld [vmem:[%s820] sm:$0x1]
      %v2411 = vlaneseq
      %v2412 = vshrl.u32 %v2411, 7
      %v2413 = vsub.s32 0, %v2412
      %v2414 = vrot.slane %v2409, %v2413
      %v2416 = vadd.f32 %v2406, %v2414
      %v2417 = vadd.f32 %v2407, %v2414
      %v2418 = vadd.f32 %v2408, %v2414
      %v2419 = vld [vmem:[%s823] sm:$0x1]
      %v2420 = vld [vmem:[%s826] sm:$0x1]
      %v2421 = vsel %vm1012, %v2416, 0.0
      %2422 = vadd.xlane.f32.xlu0 %v2421
      %v2423 = vpop.xlane.xlu0 %2422
      %v2424 = vsel %vm1012, %v2417, 0.0
      %2425 = vadd.xlane.f32.xlu0 %v2424
      %v2426 = vpop.xlane.xlu0 %2425
      %v2427 = vsel %vm1012, %v2418, 0.0
      %2428 = vadd.xlane.f32.xlu0 %v2427
      %v2429 = vpop.xlane.xlu0 %2428
      %v2430 = vmul.f32 %v2423, %v1022
      %v2431 = vmul.f32 %v2426, %v1022
      %v2432 = vmul.f32 %v2429, %v1022
      %v2433 = vsub.f32 %v2416, %v2430
      %v2434 = vsub.f32 %v2417, %v2431
      %v2435 = vsub.f32 %v2418, %v2432
      %v2436 = vmul.f32 %v2433, %v2433
      %v2437 = vmul.f32 %v2434, %v2434
      %v2438 = vmul.f32 %v2435, %v2435
      %v2439 = vsel %vm1012, %v2436, 0.0
      %2440 = vadd.xlane.f32.xlu0 %v2439
      %v2441 = vpop.xlane.xlu0 %2440
      %v2442 = vsel %vm1012, %v2437, 0.0
      %2443 = vadd.xlane.f32.xlu0 %v2442
      %v2444 = vpop.xlane.xlu0 %2443
      %v2445 = vsel %vm1012, %v2438, 0.0
      %2446 = vadd.xlane.f32.xlu0 %v2445
      %v2447 = vpop.xlane.xlu0 %2446
      %v2448 = vmul.f32 %v2441, %v1022
      %v2449 = vmul.f32 %v2444, %v1022
      %v2450 = vmul.f32 %v2447, %v1022
      %v2451 = vadd.f32 %v2448, 1e-05
      %v2452 = vadd.f32 %v2449, 1e-05
      %v2453 = vadd.f32 %v2450, 1e-05
      %v2454 = vrsqrt.pop %v2451
      %v2455 = vrsqrt.pop %v2452
      %v2456 = vrsqrt.pop %v2453
      %v2457 = vmul.f32 %v2433, %v2454
      %v2458 = vmul.f32 %v2434, %v2455
      %v2459 = vmul.f32 %v2435, %v2456
      %v2461 = vlaneseq
      %v2462 = vshrl.u32 %v2461, 7
      %v2463 = vsub.s32 0, %v2462
      %v2464 = vrot.slane %v2419, %v2463
      %v2466 = vmul.f32 %v2457, %v2464
      %v2467 = vmul.f32 %v2458, %v2464
      %v2468 = vmul.f32 %v2459, %v2464
      %v2470 = vlaneseq
      %v2471 = vshrl.u32 %v2470, 7
      %v2472 = vsub.s32 0, %v2471
      %v2473 = vrot.slane %v2420, %v2472
      %v2475 = vadd.f32 %v2466, %v2473
      %v2476 = vadd.f32 %v2467, %v2473
      %v2477 = vadd.f32 %v2468, %v2473
      %v2478 = vpack.c.bf16 %v2476, %v2475
      %v2479 = vpack.c.bf16 %v2477, %v2477
      %v2480 = vld [vmem:[%s831] sm:$0xf]
      %v2481 = vld [vmem:[%s831 + $0x4] sm:$0xf]
      %v2482 = vld [vmem:[%s831 + $0x8] sm:$0xf]
      %v2483 = vld [vmem:[%s831 + $0xc] sm:$0xf]
      %v2484 = vld [vmem:[%s831 + $0x10] sm:$0xf]
      %v2485 = vld [vmem:[%s831 + $0x14] sm:$0xf]
      %v2486 = vld [vmem:[%s831 + $0x18] sm:$0xf]
      %v2487 = vld [vmem:[%s831 + $0x1c] sm:$0xf]
      %v2488 = vld [vmem:[%s834] sm:$0x1]
      %v2490 = vlaneseq
      %v2491 = vshrl.u32 %v2490, 7
      %v2492 = vsub.s32 0, %v2491
      %v2493 = vrot.slane %v2488, %v2492
      %v2503 = vunpack.c.l.b16 %v2480
      %v2504 = vunpack.c.l.b16 %v2481
      %v2505 = vunpack.c.l.b16 %v2482
      %v2506 = vunpack.c.l.b16 %v2483
      %v2507 = vunpack.c.l.b16 %v2484
      %v2508 = vunpack.c.l.b16 %v2485
      %v2509 = vunpack.c.l.b16 %v2486
      %v2510 = vunpack.c.l.b16 %v2487
      %v2511 = vpack.c.b16 %v2504, %v2503
      %v2512 = vpack.c.b16 %v2506, %v2505
      %v2513 = vpack.c.b16 %v2508, %v2507
      %v2514 = vpack.c.b16 %v2510, %v2509
      %v2520 = vsel %vm1012, %v2478, 0
      %v2523 = vsel %vm1012, %v2479, 0
      %2525 = vmatprep.subr.bf16.mxu0 0
      %2526 = vmatpush1.bf16.msra.mxu0 %v2511
      %2527 = vmatprep.subr.bf16.mxu0 0
      %2528 = vmatpush1.bf16.msra.mxu0 %v2512
      %2529 = vmatprep.subr.bf16.mxu0 0
      %2530 = vmatpush1.bf16.msra.mxu0 %v2513
      %2531 = vmatprep.subr.bf16.mxu0 0
      %2532 = vmatpush1.bf16.msra.mxu0 %v2514
      %2533 = vmatprep.subr.bf16.mxu0 0
      %2534 = vmatpush1.bf16.msra.mxu0 0
      %2535 = vmatprep.subr.bf16.mxu0 0
      %2536 = vmatpush1.bf16.msra.mxu0 0
      %2537 = vmatprep.subr.bf16.mxu0 0
      %2538 = vmatpush1.bf16.msra.mxu0 0
      %2539 = vmatprep.subr.bf16.mxu0 0
      %2540 = vmatpush1.bf16.msra.mxu0 0
      %2541 = vmatprep.subr.bf16.mxu0 0
      %2542 = vmatpush1.bf16.msra.mxu0 0
      %2543 = vmatprep.subr.bf16.mxu0 0
      %2544 = vmatpush1.bf16.msra.mxu0 0
      %2545 = vmatprep.subr.bf16.mxu0 0
      %2546 = vmatpush1.bf16.msra.mxu0 0
      %2547 = vmatprep.subr.bf16.mxu0 0
      %2548 = vmatpush1.bf16.msra.mxu0 0
      %2549 = vmatprep.subr.bf16.mxu0 0
      %2550 = vmatpush1.bf16.msra.mxu0 0
      %2551 = vmatprep.subr.bf16.mxu0 0
      %2552 = vmatpush1.bf16.msra.mxu0 0
      %2553 = vmatprep.subr.bf16.mxu0 0
      %2554 = vmatpush1.bf16.msra.mxu0 0
      %2555 = vmatprep.subr.bf16.mxu0 0
      %2556 = vmatpush1.bf16.msra.mxu0 0
      %2557 = vmatprep.mubr.bf16.mxu0 0
      %2558 = vmatmul.mubr.bf16.gmra.mrb[0].mxu0 %v2520
      %v2559 = vpop.f32.mrb[0].mxu0
      %v2560 = vadd.f32 %v2493, %v2559
      %v2561 = vpop.f32.mrb[0].mxu0
      %v2562 = vpop.f32.mrb[0].mxu0
      %v2563 = vadd.f32 %v2493, %v2562
      %v2564 = vpop.f32.mrb[0].mxu0
      %2565 = vmatprep.mubr.bf16.mxu0 0
      %2566 = vmatmul.mubr.bf16.gmra.mrb[0].mxu0 %v2523
      %v2567 = vpop.f32.mrb[0].mxu0
      %v2568 = vadd.f32 %v2493, %v2567
      %v2569 = vpop.f32.mrb[0].mxu0
      %v2570 = vpop.f32.mrb[0].mxu0
      %v2571 = vpop.f32.mrb[0].mxu0
      %2572 = vdwg.mxu0
      %v2573 = vmul.f32 %v2560, 1.702
      %v2574 = vmul.f32 %v2563, 1.702
      %v2575 = vmul.f32 %v2568, 1.702
      %v2576 = vxor.u32 %v2573, 2147483648
      %v2577 = vxor.u32 %v2574, 2147483648
      %v2578 = vxor.u32 %v2575, 2147483648
      %v2579 = vmul.f32 %v2576, 1.442695
      %v2580 = vpow.pop %v2579
      %v2581 = vmul.f32 %v2577, 1.442695
      %v2582 = vpow.pop %v2581
      %v2583 = vmul.f32 %v2578, 1.442695
      %v2584 = vpow.pop %v2583
      %v2585 = vadd.f32 %v2580, 1.0
      %v2586 = vadd.f32 %v2582, 1.0
      %v2587 = vadd.f32 %v2584, 1.0
      %v2588 = vrcp.pop %v2585
      %v2589 = vmul.f32 1.0, %v2588
      %v2590 = vrcp.pop %v2586
      %v2591 = vmul.f32 1.0, %v2590
      %v2592 = vrcp.pop %v2587
      %v2593 = vmul.f32 1.0, %v2592
      %v2594 = vmul.f32 %v2560, %v2589
      %v2595 = vmul.f32 %v2563, %v2591
      %v2596 = vmul.f32 %v2568, %v2593
      %v2597 = vpack.c.bf16 %v2595, %v2594
      %v2598 = vpack.c.bf16 %v2596, %v2596
      %v2599 = vld [vmem:[%s839] sm:$0xf]
      %v2600 = vld [vmem:[%s839 + $0x4] sm:$0xf]
      %v2601 = vld [vmem:[%s839 + $0x8] sm:$0xf]
      %v2602 = vld [vmem:[%s839 + $0xc] sm:$0xf]
      %v2603 = vld [vmem:[%s839 + $0x10] sm:$0xf]
      %v2604 = vld [vmem:[%s839 + $0x14] sm:$0xf]
      %v2605 = vld [vmem:[%s839 + $0x18] sm:$0xf]
      %v2606 = vld [vmem:[%s839 + $0x1c] sm:$0xf]
      %v2607 = vld [vmem:[%s839 + $0x20] sm:$0xf]
      %v2608 = vld [vmem:[%s839 + $0x24] sm:$0xf]
      %v2609 = vld [vmem:[%s839 + $0x28] sm:$0xf]
      %v2610 = vld [vmem:[%s839 + $0x2c] sm:$0xf]
      %v2611 = vld [vmem:[%s839 + $0x30] sm:$0xf]
      %v2612 = vld [vmem:[%s839 + $0x34] sm:$0xf]
      %v2613 = vld [vmem:[%s839 + $0x38] sm:$0xf]
      %v2614 = vld [vmem:[%s839 + $0x3c] sm:$0xf]
      %v2615 = vld [vmem:[%s842] sm:$0x1]
      %v2617 = vlaneseq
      %v2618 = vshrl.u32 %v2617, 7
      %v2619 = vsub.s32 0, %v2618
      %v2620 = vrot.slane %v2615, %v2619
      %v2638 = vunpack.c.l.b16 %v2599
      %v2639 = vunpack.c.l.b16 %v2600
      %v2640 = vunpack.c.l.b16 %v2601
      %v2641 = vunpack.c.l.b16 %v2602
      %v2642 = vunpack.c.l.b16 %v2603
      %v2643 = vunpack.c.l.b16 %v2604
      %v2644 = vunpack.c.l.b16 %v2605
      %v2645 = vunpack.c.l.b16 %v2606
      %v2646 = vunpack.c.l.b16 %v2607
      %v2647 = vunpack.c.l.b16 %v2608
      %v2648 = vunpack.c.l.b16 %v2609
      %v2649 = vunpack.c.l.b16 %v2610
      %v2650 = vunpack.c.l.b16 %v2611
      %v2651 = vunpack.c.l.b16 %v2612
      %v2652 = vunpack.c.l.b16 %v2613
      %v2653 = vunpack.c.l.b16 %v2614
      %v2654 = vpack.c.b16 %v2639, %v2638
      %v2655 = vpack.c.b16 %v2641, %v2640
      %v2656 = vpack.c.b16 %v2643, %v2642
      %v2657 = vpack.c.b16 %v2645, %v2644
      %v2658 = vpack.c.b16 %v2647, %v2646
      %v2659 = vpack.c.b16 %v2649, %v2648
      %v2660 = vpack.c.b16 %v2651, %v2650
      %v2661 = vpack.c.b16 %v2653, %v2652
      %2670 = vmatprep.subr.bf16.mxu0 0
      %2671 = vmatpush1.bf16.msra.mxu0 %v2654
      %2672 = vmatprep.subr.bf16.mxu0 0
      %2673 = vmatpush1.bf16.msra.mxu0 %v2655
      %2674 = vmatprep.subr.bf16.mxu0 0
      %2675 = vmatpush1.bf16.msra.mxu0 %v2656
      %2676 = vmatprep.subr.bf16.mxu0 0
      %2677 = vmatpush1.bf16.msra.mxu0 %v2657
      %2678 = vmatprep.subr.bf16.mxu0 0
      %2679 = vmatpush1.bf16.msra.mxu0 %v2658
      %2680 = vmatprep.subr.bf16.mxu0 0
      %2681 = vmatpush1.bf16.msra.mxu0 %v2659
      %2682 = vmatprep.subr.bf16.mxu0 0
      %2683 = vmatpush1.bf16.msra.mxu0 %v2660
      %2684 = vmatprep.subr.bf16.mxu0 0
      %2685 = vmatpush1.bf16.msra.mxu0 %v2661
      %2686 = vmatprep.subr.bf16.mxu0 0
      %2687 = vmatpush1.bf16.msra.mxu0 0
      %2688 = vmatprep.subr.bf16.mxu0 0
      %2689 = vmatpush1.bf16.msra.mxu0 0
      %2690 = vmatprep.subr.bf16.mxu0 0
      %2691 = vmatpush1.bf16.msra.mxu0 0
      %2692 = vmatprep.subr.bf16.mxu0 0
      %2693 = vmatpush1.bf16.msra.mxu0 0
      %2694 = vmatprep.subr.bf16.mxu0 0
      %2695 = vmatpush1.bf16.msra.mxu0 0
      %2696 = vmatprep.subr.bf16.mxu0 0
      %2697 = vmatpush1.bf16.msra.mxu0 0
      %2698 = vmatprep.subr.bf16.mxu0 0
      %2699 = vmatpush1.bf16.msra.mxu0 0
      %2700 = vmatprep.subr.bf16.mxu0 0
      %2701 = vmatpush1.bf16.msra.mxu0 0
      %2702 = vmatprep.mubr.bf16.mxu0 0
      %2703 = vmatmul.mubr.bf16.gmra.mrb[0].mxu0 %v2597
      %v2704 = vpop.f32.mrb[0].mxu0
      %v2705 = vadd.f32 %v2620, %v2704
      %v2706 = vpop.f32.mrb[0].mxu0
      %v2707 = vpop.f32.mrb[0].mxu0
      %v2708 = vadd.f32 %v2620, %v2707
      %v2709 = vpop.f32.mrb[0].mxu0
      %2710 = vmatprep.mubr.bf16.mxu0 0
      %2711 = vmatmul.mubr.bf16.gmra.mrb[0].mxu0 %v2598
      %v2712 = vpop.f32.mrb[0].mxu0
      %v2713 = vadd.f32 %v2620, %v2712
      %v2714 = vpop.f32.mrb[0].mxu0
      %v2715 = vpop.f32.mrb[0].mxu0
      %v2716 = vpop.f32.mrb[0].mxu0
      %2717 = vdwg.mxu0
      %v2718 = vadd.f32 %v2416, %v2705
      %v2719 = vadd.f32 %v2417, %v2708
      %v2720 = vadd.f32 %v2418, %v2713
      %2721 = vst.msk [vmem:[#allocation2] sm:$0xff] %vm1012, %v2718
      %2722 = vst.msk [vmem:[#allocation2 + $0x8] sm:$0xff] %vm1012, %v2719
      %2723 = vst.msk [vmem:[#allocation2 + $0x10] sm:$0xff] %vm1012, %v2720
      %p2724 = scmp.eq.s32.totalorder %s36, 1
      // Predicated region
      $region105: #{encoder_vit_forward.1} parent=99 // pred_check
        %p2725 = pneg %p2724
      $region106: #{encoder_vit_forward.1} parent=99 // pred_check_branch
        %2727 = sbr.rel (%p2725) target = $region108
      $region107: #{encoder_vit_forward.1} parent=99 // pred_region
        %v2728 = vld [vmem:[#allocation2] sm:$0xff]
        %v2729 = vld [vmem:[#allocation2 + $0x8] sm:$0xff]
        %v2730 = vld [vmem:[#allocation2 + $0x10] sm:$0xff]
        %v2731 = vld [vmem:[%s845] sm:$0x1]
        %v2733 = vlaneseq
        %v2734 = vshrl.u32 %v2733, 7
        %v2735 = vsub.s32 0, %v2734
        %v2736 = vrot.slane %v2731, %v2735
        %v2738 = vadd.f32 %v2728, %v2736
        %v2739 = vadd.f32 %v2729, %v2736
        %v2740 = vadd.f32 %v2730, %v2736
        %v2741 = vpack.c.bf16 %v2739, %v2738
        %v2742 = vpack.c.bf16 %v2740, %v2740
        %v2743 = vld [vmem:[%s18] sm:$0xf]
        %v2744 = vld [vmem:[%s18 + $0x4] sm:$0xf]
        %v2745 = vld [vmem:[%s18 + $0x8] sm:$0xf]
        %v2746 = vld [vmem:[%s18 + $0xc] sm:$0xf]
        %v2747 = vld [vmem:[%s18 + $0x10] sm:$0xf]
        %v2748 = vld [vmem:[%s18 + $0x14] sm:$0xf]
        %v2749 = vld [vmem:[%s18 + $0x18] sm:$0xf]
        %v2750 = vld [vmem:[%s18 + $0x1c] sm:$0xf]
        %v2751 = vld [vmem:[%s19] sm:$0x1]
        %v2753 = vlaneseq
        %v2754 = vshrl.u32 %v2753, 7
        %v2755 = vsub.s32 0, %v2754
        %v2756 = vrot.slane %v2751, %v2755
        %v2766 = vunpack.c.l.b16 %v2743
        %v2767 = vunpack.c.l.b16 %v2744
        %v2768 = vunpack.c.l.b16 %v2745
        %v2769 = vunpack.c.l.b16 %v2746
        %v2770 = vunpack.c.l.b16 %v2747
        %v2771 = vunpack.c.l.b16 %v2748
        %v2772 = vunpack.c.l.b16 %v2749
        %v2773 = vunpack.c.l.b16 %v2750
        %v2774 = vpack.c.b16 %v2767, %v2766
        %v2775 = vpack.c.b16 %v2769, %v2768
        %v2776 = vpack.c.b16 %v2771, %v2770
        %v2777 = vpack.c.b16 %v2773, %v2772
        %v2783 = vsel %vm1012, %v2741, 0
        %v2786 = vsel %vm1012, %v2742, 0
        %2788 = vmatprep.subr.bf16.mxu0 0
        %2789 = vmatpush1.bf16.msra.mxu0 %v2774
        %2790 = vmatprep.subr.bf16.mxu0 0
        %2791 = vmatpush1.bf16.msra.mxu0 %v2775
        %2792 = vmatprep.subr.bf16.mxu0 0
        %2793 = vmatpush1.bf16.msra.mxu0 %v2776
        %2794 = vmatprep.subr.bf16.mxu0 0
        %2795 = vmatpush1.bf16.msra.mxu0 %v2777
        %2796 = vmatprep.subr.bf16.mxu0 0
        %2797 = vmatpush1.bf16.msra.mxu0 0
        %2798 = vmatprep.subr.bf16.mxu0 0
        %2799 = vmatpush1.bf16.msra.mxu0 0
        %2800 = vmatprep.subr.bf16.mxu0 0
        %2801 = vmatpush1.bf16.msra.mxu0 0
        %2802 = vmatprep.subr.bf16.mxu0 0
        %2803 = vmatpush1.bf16.msra.mxu0 0
        %2804 = vmatprep.subr.bf16.mxu0 0
        %2805 = vmatpush1.bf16.msra.mxu0 0
        %2806 = vmatprep.subr.bf16.mxu0 0
        %2807 = vmatpush1.bf16.msra.mxu0 0
        %2808 = vmatprep.subr.bf16.mxu0 0
        %2809 = vmatpush1.bf16.msra.mxu0 0
        %2810 = vmatprep.subr.bf16.mxu0 0
        %2811 = vmatpush1.bf16.msra.mxu0 0
        %2812 = vmatprep.subr.bf16.mxu0 0
        %2813 = vmatpush1.bf16.msra.mxu0 0
        %2814 = vmatprep.subr.bf16.mxu0 0
        %2815 = vmatpush1.bf16.msra.mxu0 0
        %2816 = vmatprep.subr.bf16.mxu0 0
        %2817 = vmatpush1.bf16.msra.mxu0 0
        %2818 = vmatprep.subr.bf16.mxu0 0
        %2819 = vmatpush1.bf16.msra.mxu0 0
        %2820 = vmatprep.mubr.bf16.mxu0 0
        %2821 = vmatmul.mubr.bf16.gmra.mrb[0].mxu0 %v2783
        %v2822 = vpop.f32.mrb[0].mxu0
        %v2823 = vadd.f32 %v2756, %v2822
        %v2824 = vpop.f32.mrb[0].mxu0
        %v2825 = vpop.f32.mrb[0].mxu0
        %v2826 = vadd.f32 %v2756, %v2825
        %v2827 = vpop.f32.mrb[0].mxu0
        %2828 = vmatprep.mubr.bf16.mxu0 0
        %2829 = vmatmul.mubr.bf16.gmra.mrb[0].mxu0 %v2786
        %v2830 = vpop.f32.mrb[0].mxu0
        %v2831 = vadd.f32 %v2756, %v2830
        %v2832 = vpop.f32.mrb[0].mxu0
        %v2833 = vpop.f32.mrb[0].mxu0
        %v2834 = vpop.f32.mrb[0].mxu0
        %2835 = vdwg.mxu0
        %vm2836 = vcmask 261120
        %2837 = vst.msk [vmem:[%s850] sm:$0xff] %vm2836, %v2823
        %2838 = vst.msk [vmem:[%s850 + $0x8] sm:$0xff] %vm2836, %v2826
        %2839 = vst.msk [vmem:[%s850 + $0x10] sm:$0xff] %vm2836, %v2831
      $region108: #{encoder_vit_forward.1} parent=99 // pred_fallthru
        _
      %p2840 = scmp.lt.s32.totalorder %s35, 1
      %s2841 = scalar_select %p2840, %s35, 1
      %s2842 = smul.addr %s2841, 3
      %s2843 = smul.addr %s2842, 8
      %s2844 = scalar_lea.vmem %s20, %s2843
      // Predicated region
      $region109: #{encoder_vit_forward.1} parent=99 // pred_check
        %p2845 = pneg %p551
      $region110: #{encoder_vit_forward.1} parent=99 // pred_check_branch
        %2847 = sbr.rel (%p2845) target = $region112
      $region111: #{encoder_vit_forward.1} parent=99 // pred_region
        _
      $region112: #{encoder_vit_forward.1} parent=99 // pred_fallthru
        _
    $region100: #{encoder_vit_forward.1} parent=5 // pred_fallthru
      _
    %p2848 = scmp.le.s32.totalorder 2, %s26
    // Predicated region
    $region113: #{encoder_vit_forward.1} parent=5 // pred_check
      %p2849 = pneg %p2848
    $region114: #{encoder_vit_forward.1} parent=5 // pred_check_branch
      %2851 = sbr.rel (%p2849) target = $region116
    $region115: #{encoder_vit_forward.1} parent=5 // pred_region
      %s2852 = ssub.s32 %s26, 2
      // Predicated region
      $region117: #{encoder_vit_forward.1} parent=115 // pred_check
        %p2853 = pneg %p557
      $region118: #{encoder_vit_forward.1} parent=115 // pred_check_branch
        %2855 = sbr.rel (%p2853) target = $region120
      $region119: #{encoder_vit_forward.1} parent=115 // pred_region
        %p2856 = scmp.lt.s32.totalorder %s37, 1
        %s2857 = scalar_select %p2856, %s37, 1
        %s2858 = smul.addr %s2857, 3
        %s2859 = smul.addr %s2858, 8
        %s2860 = scalar_lea.vmem %s20, %s2859
      $region120: #{encoder_vit_forward.1} parent=115 // pred_fallthru
        _
    $region116: #{encoder_vit_forward.1} parent=5 // pred_fallthru
      _
  $region6: #{encoder_vit_forward.1} parent=0 // loop_footer
    %s30 = sadd.s32 1, %s26
  $region7: #{encoder_vit_forward.1} parent=0 // loop_footer_branch
    %25 = sbr.rel target = $region3
  $region8: #{encoder_vit_forward.1} parent=0 // loop_exit
    _

</llo_original>
